<compile_context>
chip_gen: v7x
topology: tpu7x:2x2x1
jax: 0.10.0
libtpu: 0.0.40
codegen_flags: <defaults>
</compile_context>

<pallas_src>
import jax
import jax.numpy as jnp
import numpy as np
from jax.experimental import pallas as pl
from jax.experimental.pallas import tpu as pltpu

INPUT_SIZE = 8
HIDDEN = 32
H2 = HIDDEN * 2
NUM_CLASSES = 8
B = 2
T = 8


def _make_kernel(T_, BP, H, I, C):
    H2_ = 2 * H
    H4_ = 4 * H
    H6_ = 6 * H
    H8_ = 8 * H
    # packed w_lstm row offsets (all multiples of 8)
    R_W1 = 0
    R_WHH1 = 2 * I
    R_W2 = R_WHH1 + H2_
    R_WHH2 = R_W2 + H4_
    R_B1 = R_WHH2 + H2_
    R_B2 = R_B1 + 8
    # packed w_head row offsets
    R_FCW = 0
    R_FCB = H2_
    R_FC2W = H2_ + 8
    R_FC2B = R_FC2W + H2_

    def kernel(x_ref, valid_ref, sel_ref, wl_ref, wh_ref, out_ref, s2_ref):
        f32 = jnp.float32
        valid = valid_ref[...]            # (T*BP, 2H): fwd mask lanes 0:H, rev H:2H
        inval = 1.0 - valid
        sel = sel_ref[...]                # (T*BP, 2H): t_last selection per dir

        def step(pre, h_cat, c_cat, v, nv):
            # pre: (BP, 8H) gate-major [i_f i_r | f_f f_r | g_f g_r | o_f o_r]
            sg = jax.nn.sigmoid(pre)              # 2 vreg EUP pushes cover i,f,o
            i_g = sg[:, 0:H2_]
            f_g = sg[:, H2_:H4_]
            o_g = sg[:, H6_:H8_]
            g_g = jnp.tanh(pre[:, H4_:H6_])       # tanh only on the g band
            c_new = f_g * c_cat + i_g * g_g
            h_new = o_g * jnp.tanh(c_new)
            out = v * h_new                       # masked output (0 on padding)
            h_cat = out + nv * h_cat              # freeze state on padded steps
            c_cat = v * c_new + nv * c_cat
            return h_cat, c_cat, out

        # ---------------- layer 1 ----------------
        # hoisted input projection, all timesteps, both directions; the rev gate
        # columns were built from time-flipped x in the wrapper, so row-block s
        # holds fwd gates of timestep s and rev gates of timestep T-1-s.
        gx1 = (jnp.dot(x_ref[...], wl_ref[R_W1:R_WHH1, :],
                       preferred_element_type=f32)
               + wl_ref[R_B1:R_B1 + 1, :])                          # (T*BP, 8H)
        whh1 = wl_ref[R_WHH1:R_W2, :]                               # (2H, 8H)

        h_cat = jnp.zeros((BP, H2_), f32)
        c_cat = jnp.zeros((BP, H2_), f32)
        for s in range(T_):                       # fully unrolled (T static)
            r = slice(s * BP, (s + 1) * BP)
            rflip = slice((T_ - 1 - s) * BP, (T_ - s) * BP)
            pre = gx1[r] + jnp.dot(h_cat, whh1, preferred_element_type=f32)
            h_cat, c_cat, out = step(pre, h_cat, c_cat, valid[r], inval[r])
            # layer-2 input scratch: row u holds [s1a[u] | s1a[T-1-u]], where
            # s1a[s] = [h1_f(s), h1_r(T-1-s)] is this step's fused output.
            s2_ref[r, 0:H2_] = out
            s2_ref[rflip, H2_:H4_] = out

        # ---------------- layer 2 ----------------
        # W2 was permuted at init so this single matmul produces gate-major
        # pre-activations with fwd gates fed by s1[s] and rev gates by s1[T-1-s].
        gx2 = (jnp.dot(s2_ref[...], wl_ref[R_W2:R_WHH2, :],
                       preferred_element_type=f32)
               + wl_ref[R_B2:R_B2 + 1, :])                          # (T*BP, 8H)
        whh2 = wl_ref[R_WHH2:R_B1, :]                               # (2H, 8H)

        h_cat = jnp.zeros((BP, H2_), f32)
        c_cat = jnp.zeros((BP, H2_), f32)
        last = jnp.zeros((BP, H2_), f32)
        for s in range(T_):
            r = slice(s * BP, (s + 1) * BP)
            pre = gx2[r] + jnp.dot(h_cat, whh2, preferred_element_type=f32)
            h_cat, c_cat, out = step(pre, h_cat, c_cat, valid[r], inval[r])
            # precomputed t_last selection: exactly one step contributes per dir
            last = last + sel[r] * out

        # ---------------- head ----------------
        h1 = jnp.maximum(
            jnp.dot(last, wh_ref[R_FCW:R_FCB, :], preferred_element_type=f32)
            + wh_ref[R_FCB:R_FCB + 1, :], 0.0)
        logits = jnp.maximum(
            jnp.dot(h1, wh_ref[R_FC2W:R_FC2B, :], preferred_element_type=f32)
            + wh_ref[R_FC2B:R_FC2B + 1, :], 0.0)
        logits = logits[:, 0:C]                   # drop zero-padded columns
        m = jnp.max(logits, axis=1, keepdims=True)
        lse = m + jnp.log(jnp.sum(jnp.exp(logits - m), axis=1, keepdims=True))
        out_ref[...] = logits - lse

    return kernel


def prepare_params(p):
    """One-time (init-time) weight fusion + gate-major permutation + packing.

    Returns (w_lstm, w_head):
      w_lstm (288, 8H): rows [0:2I]=W1, [2I:2I+2H]=Whh1, [.. +4H]=W2,
                        [.. +2H]=Whh2, b1 @ row 272, b2 @ row 280.
      w_head (144, 2H): fcw, fcb @ 64, fc2w (cols 0:C) @ 72, fc2b @ 136.
    """
    H = HIDDEN
    I = INPUT_SIZE
    C = NUM_CLASSES
    H2_, H4_, H8_ = 2 * H, 4 * H, 8 * H
    f32 = jnp.float32

    def gm(w, d):
        # place torch-gate-order (rows, 4H) columns into gate-major (rows, 8H)
        # at direction slot d (0 = fwd, 1 = rev)
        out = jnp.zeros((w.shape[0], H8_), f32)
        for g in range(4):
            out = out.at[:, g * H2_ + d * H:g * H2_ + (d + 1) * H].set(
                w[:, g * H:(g + 1) * H])
        return out

    # layer-1 input weights: rows 0:I act on x[t] (fwd), rows I:2I on x[T-1-t] (rev)
    w1 = jnp.concatenate([gm(p["wih_f1"], 0), gm(p["wih_r1"], 1)], axis=0)
    whh1 = jnp.concatenate([gm(p["whh_f1"], 0), gm(p["whh_r1"], 1)], axis=0)
    b1 = gm(p["b_f1"], 0) + gm(p["b_r1"], 1)
    # layer-2 input weights act on [s1a[s] | s1a[T-1-s]] feature layout:
    #   feat 0:H   = h1_f(s)      -> fwd gates via wih2_f rows 0:H
    #   feat H:2H  = h1_r(T-1-s)  -> rev gates via wih2_r rows H:2H
    #   feat 2H:3H = h1_f(T-1-s)  -> rev gates via wih2_r rows 0:H
    #   feat 3H:4H = h1_r(s)      -> fwd gates via wih2_f rows H:2H
    w2 = jnp.concatenate([gm(p["wih_f2"][0:H], 0),
                          gm(p["wih_r2"][H:H2_], 1),
                          gm(p["wih_r2"][0:H], 1),
                          gm(p["wih_f2"][H:H2_], 0)], axis=0)
    whh2 = jnp.concatenate([gm(p["whh_f2"], 0), gm(p["whh_r2"], 1)], axis=0)
    b2 = gm(p["b_f2"], 0) + gm(p["b_r2"], 1)

    pad7 = jnp.zeros((7, H8_), f32)
    w_lstm = jnp.concatenate([w1, whh1, w2, whh2, b1, pad7, b2, pad7], axis=0)

    fc2w_pad = jnp.zeros((H2_, H2_), f32).at[:, :C].set(p["fc2w"])
    fc2b_pad = jnp.zeros((1, H2_), f32).at[:, :C].set(p["fc2b"])
    pad7h = jnp.zeros((7, H2_), f32)
    w_head = jnp.concatenate([p["fcw"], p["fcb"], pad7h,
                              fc2w_pad, fc2b_pad, pad7h], axis=0)
    return w_lstm, w_head


def seq_classifier_varlen(x, lengths, packed):
    """x: (B, T, input_size) float32, lengths: (B,) int32, packed = prepare_params(p)."""
    w_lstm, w_head = packed
    B_, T_, I = x.shape
    H = HIDDEN
    H2_ = 2 * H
    C = NUM_CLASSES
    BP = ((B_ + 7) // 8) * 8        # pad batch to the f32 sublane tile (8)
    f32 = jnp.float32

    lengths = lengths.astype(jnp.int32)
    x_t = jnp.transpose(x.astype(f32), (1, 0, 2))                    # (T, B, I)
    x_pad = jnp.zeros((T_, BP, I), f32).at[:, :B_, :].set(x_t)
    # cols 0:I feed fwd gates (timestep t), I:2I feed rev gates (timestep T-1-t)
    x_comb = jnp.concatenate([x_pad, x_pad[::-1]], axis=-1).reshape(T_ * BP, 2 * I)

    len_pad = jnp.zeros((BP,), jnp.int32).at[:B_].set(lengths)       # pad rows invalid
    t_idx = jnp.arange(T_, dtype=jnp.int32)
    v_f = (t_idx[:, None] < len_pad[None, :]).astype(f32)            # (T, BP)
    v_r = ((T_ - 1 - t_idx)[:, None] < len_pad[None, :]).astype(f32)
    valid = jnp.concatenate(
        [jnp.broadcast_to(v_f[:, :, None], (T_, BP, H)),
         jnp.broadcast_to(v_r[:, :, None], (T_, BP, H))],
        axis=-1).reshape(T_ * BP, H2_)

    t_last = jnp.maximum(jnp.max(lengths) - 1, 0)                    # clamp >= 0
    s_f = (t_idx == t_last).astype(f32)
    s_r = ((T_ - 1 - t_idx) == t_last).astype(f32)
    sel = jnp.concatenate(
        [jnp.broadcast_to(s_f[:, None, None], (T_, BP, H)),
         jnp.broadcast_to(s_r[:, None, None], (T_, BP, H))],
        axis=-1).reshape(T_ * BP, H2_)

    vmem = lambda: pl.BlockSpec(memory_space=pltpu.MemorySpace.VMEM)
    out = pl.pallas_call(
        _make_kernel(T_, BP, H, I, C),
        out_shape=jax.ShapeDtypeStruct((BP, C), f32),
        in_specs=[vmem() for _ in range(5)],
        out_specs=vmem(),
        scratch_shapes=[pltpu.VMEM((T_ * BP, 4 * H), f32)],
    )(x_comb, valid, sel, w_lstm, w_head)
    return out[:B_]


def init_params(key):
    """Deterministic synthetic params; weights stored pre-transposed so the
    math is y = x @ W_T + b (PyTorch Linear/LSTM use x @ W.T + b); LSTM biases
    are the fused b_ih + b_hh; torch gate order i,f,g,o within each direction."""
    def u(k, shape):
        return jax.random.uniform(k, shape, jnp.float32, -0.1, 0.1)

    keys = iter(jax.random.split(key, 32))
    p = {}
    for layer, in_dim in ((1, INPUT_SIZE), (2, H2)):
        for d in ("f", "r"):
            p[f"wih_{d}{layer}"] = u(next(keys), (in_dim, 4 * HIDDEN))
            p[f"whh_{d}{layer}"] = u(next(keys), (HIDDEN, 4 * HIDDEN))
            p[f"b_{d}{layer}"] = u(next(keys), (1, 4 * HIDDEN))
    p["fcw"] = u(next(keys), (H2, H2))
    p["fcb"] = u(next(keys), (1, H2))
    p["fc2w"] = u(next(keys), (H2, NUM_CLASSES))
    p["fc2b"] = u(next(keys), (1, NUM_CLASSES))
    return p


def reference(x, lengths, p):
    """Pure-JAX reference with the same masked-LSTM (pack/pad) semantics."""
    Bx, Tx, _ = x.shape
    sig = jax.nn.sigmoid

    def run_dir(seq, w_ih, w_hh, b, reverse):
        h = jnp.zeros((Bx, HIDDEN), jnp.float32)
        c = jnp.zeros((Bx, HIDDEN), jnp.float32)
        out = [None] * Tx
        order = range(Tx - 1, -1, -1) if reverse else range(Tx)
        for t in order:
            gates = seq[:, t, :] @ w_ih + h @ w_hh + b
            i_ = sig(gates[:, :HIDDEN])
            f_ = sig(gates[:, HIDDEN:2 * HIDDEN])
            g_ = jnp.tanh(gates[:, 2 * HIDDEN:3 * HIDDEN])
            o_ = sig(gates[:, 3 * HIDDEN:])
            c_new = f_ * c + i_ * g_
            h_new = o_ * jnp.tanh(c_new)
            valid = (t < lengths)[:, None]
            h = jnp.where(valid, h_new, h)
            c = jnp.where(valid, c_new, c)
            out[t] = jnp.where(valid, h_new, 0.0)
        return jnp.stack(out, axis=1)

    l1 = jnp.concatenate(
        [run_dir(x, p["wih_f1"], p["whh_f1"], p["b_f1"], False),
         run_dir(x, p["wih_r1"], p["whh_r1"], p["b_r1"], True)], axis=-1)
    l2 = jnp.concatenate(
        [run_dir(l1, p["wih_f2"], p["whh_f2"], p["b_f2"], False),
         run_dir(l1, p["wih_r2"], p["whh_r2"], p["b_r2"], True)], axis=-1)
    t_last = int(jnp.max(lengths)) - 1
    last = l2[:, t_last, :]
    h1 = jnp.maximum(last @ p["fcw"] + p["fcb"], 0.0)
    logits = jnp.maximum(h1 @ p["fc2w"] + p["fc2b"], 0.0)
    return logits - jax.scipy.special.logsumexp(logits, axis=1, keepdims=True)


if __name__ == "__main__":
    key = jax.random.PRNGKey(0)
    kx, kp = jax.random.split(key)
    x = jax.random.normal(kx, (B, T, INPUT_SIZE), jnp.float32)
    lengths = jnp.array([T, 5], jnp.int32)      # variable lengths, max == T
    params = init_params(kp)
    packed = prepare_params(params)             # weight fusion hoisted to init time

    fwd = jax.jit(seq_classifier_varlen)
    out = fwd(x, lengths, packed)
    out = jax.block_until_ready(out)

    ref = reference(x, lengths, params)
    np.testing.assert_allclose(np.asarray(out), np.asarray(ref),
                               atol=2e-4, rtol=2e-4)
    print("KERNEL_OK")
</pallas_src>

<mosaic_0001>
module attributes {stable_mosaic.version = 11 : i64} {
  func.func @kernel(%arg0: memref<64x16xf32, #tpu.memory_space<vmem>>, %arg1: memref<64x64xf32, #tpu.memory_space<vmem>>, %arg2: memref<64x64xf32, #tpu.memory_space<vmem>>, %arg3: memref<288x256xf32, #tpu.memory_space<vmem>>, %arg4: memref<144x64xf32, #tpu.memory_space<vmem>>, %arg5: memref<8x8xf32, #tpu.memory_space<vmem>>, %arg6: memref<64x128xf32, #tpu.memory_space<vmem>>) attributes {dimension_semantics = [], scalar_prefetch = 0 : i64, scratch_operands = 1 : i64, tpu.core_type = #tpu.core_type<tc>} {
    %c0 = arith.constant 0 : index
    %c0_0 = arith.constant 0 : index
    %0 = vector.load %arg1[%c0, %c0_0] : memref<64x64xf32, #tpu.memory_space<vmem>>, vector<64x64xf32>
    %cst = arith.constant 1.000000e+00 : f32
    %1 = vector.broadcast %cst : f32 to vector<64x64xf32>
    %2 = arith.subf %1, %0 : vector<64x64xf32>
    %c0_1 = arith.constant 0 : index
    %c0_2 = arith.constant 0 : index
    %3 = vector.load %arg2[%c0_1, %c0_2] : memref<64x64xf32, #tpu.memory_space<vmem>>, vector<64x64xf32>
    %c0_3 = arith.constant 0 : index
    %c0_4 = arith.constant 0 : index
    %4 = vector.load %arg0[%c0_3, %c0_4] : memref<64x16xf32, #tpu.memory_space<vmem>>, vector<64x16xf32>
    %c0_5 = arith.constant 0 : index
    %c0_6 = arith.constant 0 : index
    %5 = vector.load %arg3[%c0_5, %c0_6] : memref<288x256xf32, #tpu.memory_space<vmem>>, vector<16x256xf32>
    %cst_7 = arith.constant dense<0.000000e+00> : vector<64x256xf32>
    %6 = tpu.matmul %4, %5, %cst_7 {dimension_numbers = #tpu.dot_dimension_numbers<[1], [0], [0], [1], [0, 0, 1, 1], [], []>} : vector<64x16xf32>, vector<16x256xf32>, vector<64x256xf32> -> vector<64x256xf32>
    %c272 = arith.constant 272 : index
    %c0_8 = arith.constant 0 : index
    %7 = vector.load %arg3[%c272, %c0_8] : memref<288x256xf32, #tpu.memory_space<vmem>>, vector<1x256xf32>
    %8 = vector.broadcast %7 : vector<1x256xf32> to vector<64x256xf32>
    %9 = arith.addf %6, %8 : vector<64x256xf32>
    %c16 = arith.constant 16 : index
    %c0_9 = arith.constant 0 : index
    %10 = vector.load %arg3[%c16, %c0_9] : memref<288x256xf32, #tpu.memory_space<vmem>>, vector<64x256xf32>
    %cst_10 = arith.constant 0.000000e+00 : f32
    %11 = vector.broadcast %cst_10 : f32 to vector<8x64xf32>
    %cst_11 = arith.constant 0.000000e+00 : f32
    %12 = vector.broadcast %cst_11 : f32 to vector<8x64xf32>
    %13 = vector.extract_strided_slice %9 {offsets = [0, 0], sizes = [8, 256], strides = [1, 1]} : vector<64x256xf32> to vector<8x256xf32>
    %cst_12 = arith.constant dense<0.000000e+00> : vector<8x256xf32>
    %14 = tpu.matmul %11, %10, %cst_12 {dimension_numbers = #tpu.dot_dimension_numbers<[1], [0], [0], [1], [0, 0, 1, 1], [], []>} : vector<8x64xf32>, vector<64x256xf32>, vector<8x256xf32> -> vector<8x256xf32>
    %15 = arith.addf %13, %14 : vector<8x256xf32>
    %16 = vector.extract_strided_slice %0 {offsets = [0, 0], sizes = [8, 64], strides = [1, 1]} : vector<64x64xf32> to vector<8x64xf32>
    %17 = vector.extract_strided_slice %2 {offsets = [0, 0], sizes = [8, 64], strides = [1, 1]} : vector<64x64xf32> to vector<8x64xf32>
    %18 = arith.negf %15 : vector<8x256xf32>
    %19 = math.exp %18 : vector<8x256xf32>
    %cst_13 = arith.constant 1.000000e+00 : f32
    %20 = vector.broadcast %cst_13 : f32 to vector<8x256xf32>
    %21 = arith.addf %20, %19 : vector<8x256xf32>
    %22 = arith.divf %20, %21 : vector<8x256xf32>
    %23 = vector.extract_strided_slice %22 {offsets = [0, 0], sizes = [8, 64], strides = [1, 1]} : vector<8x256xf32> to vector<8x64xf32>
    %24 = vector.extract_strided_slice %22 {offsets = [0, 64], sizes = [8, 64], strides = [1, 1]} : vector<8x256xf32> to vector<8x64xf32>
    %25 = vector.extract_strided_slice %22 {offsets = [0, 192], sizes = [8, 64], strides = [1, 1]} : vector<8x256xf32> to vector<8x64xf32>
    %26 = vector.extract_strided_slice %15 {offsets = [0, 128], sizes = [8, 64], strides = [1, 1]} : vector<8x256xf32> to vector<8x64xf32>
    %27 = math.tanh %26 : vector<8x64xf32>
    %28 = arith.mulf %24, %12 : vector<8x64xf32>
    %29 = arith.mulf %23, %27 : vector<8x64xf32>
    %30 = arith.addf %28, %29 : vector<8x64xf32>
    %31 = math.tanh %30 : vector<8x64xf32>
    %32 = arith.mulf %25, %31 : vector<8x64xf32>
    %33 = arith.mulf %16, %32 : vector<8x64xf32>
    %34 = arith.mulf %17, %11 : vector<8x64xf32>
    %35 = arith.addf %33, %34 : vector<8x64xf32>
    %36 = arith.mulf %16, %30 : vector<8x64xf32>
    %37 = arith.mulf %17, %12 : vector<8x64xf32>
    %38 = arith.addf %36, %37 : vector<8x64xf32>
    %c0_14 = arith.constant 0 : index
    %c0_15 = arith.constant 0 : index
    %39 = vector.load %arg6[%c0_14, %c0_15] : memref<64x128xf32, #tpu.memory_space<vmem>>, vector<8x64xf32>
    tpu.vector_store %arg6[%c0_14, %c0_15], %33 {strides = array<i32>} : memref<64x128xf32, #tpu.memory_space<vmem>>, vector<8x64xf32>,
    %c56 = arith.constant 56 : index
    %c64 = arith.constant 64 : index
    %40 = vector.load %arg6[%c56, %c64] : memref<64x128xf32, #tpu.memory_space<vmem>>, vector<8x64xf32>
    tpu.vector_store %arg6[%c56, %c64], %33 {strides = array<i32>} : memref<64x128xf32, #tpu.memory_space<vmem>>, vector<8x64xf32>,
    %41 = vector.extract_strided_slice %9 {offsets = [8, 0], sizes = [8, 256], strides = [1, 1]} : vector<64x256xf32> to vector<8x256xf32>
    %cst_16 = arith.constant dense<0.000000e+00> : vector<8x256xf32>
    %42 = tpu.matmul %35, %10, %cst_16 {dimension_numbers = #tpu.dot_dimension_numbers<[1], [0], [0], [1], [0, 0, 1, 1], [], []>} : vector<8x64xf32>, vector<64x256xf32>, vector<8x256xf32> -> vector<8x256xf32>
    %43 = arith.addf %41, %42 : vector<8x256xf32>
    %44 = vector.extract_strided_slice %0 {offsets = [8, 0], sizes = [8, 64], strides = [1, 1]} : vector<64x64xf32> to vector<8x64xf32>
    %45 = vector.extract_strided_slice %2 {offsets = [8, 0], sizes = [8, 64], strides = [1, 1]} : vector<64x64xf32> to vector<8x64xf32>
    %46 = arith.negf %43 : vector<8x256xf32>
    %47 = math.exp %46 : vector<8x256xf32>
    %cst_17 = arith.constant 1.000000e+00 : f32
    %48 = vector.broadcast %cst_17 : f32 to vector<8x256xf32>
    %49 = arith.addf %48, %47 : vector<8x256xf32>
    %50 = arith.divf %48, %49 : vector<8x256xf32>
    %51 = vector.extract_strided_slice %50 {offsets = [0, 0], sizes = [8, 64], strides = [1, 1]} : vector<8x256xf32> to vector<8x64xf32>
    %52 = vector.extract_strided_slice %50 {offsets = [0, 64], sizes = [8, 64], strides = [1, 1]} : vector<8x256xf32> to vector<8x64xf32>
    %53 = vector.extract_strided_slice %50 {offsets = [0, 192], sizes = [8, 64], strides = [1, 1]} : vector<8x256xf32> to vector<8x64xf32>
    %54 = vector.extract_strided_slice %43 {offsets = [0, 128], sizes = [8, 64], strides = [1, 1]} : vector<8x256xf32> to vector<8x64xf32>
    %55 = math.tanh %54 : vector<8x64xf32>
    %56 = arith.mulf %52, %38 : vector<8x64xf32>
    %57 = arith.mulf %51, %55 : vector<8x64xf32>
    %58 = arith.addf %56, %57 : vector<8x64xf32>
    %59 = math.tanh %58 : vector<8x64xf32>
    %60 = arith.mulf %53, %59 : vector<8x64xf32>
    %61 = arith.mulf %44, %60 : vector<8x64xf32>
    %62 = arith.mulf %45, %35 : vector<8x64xf32>
    %63 = arith.addf %61, %62 : vector<8x64xf32>
    %64 = arith.mulf %44, %58 : vector<8x64xf32>
    %65 = arith.mulf %45, %38 : vector<8x64xf32>
    %66 = arith.addf %64, %65 : vector<8x64xf32>
    %c8 = arith.constant 8 : index
    %c0_18 = arith.constant 0 : index
    %67 = vector.load %arg6[%c8, %c0_18] : memref<64x128xf32, #tpu.memory_space<vmem>>, vector<8x64xf32>
    tpu.vector_store %arg6[%c8, %c0_18], %61 {strides = array<i32>} : memref<64x128xf32, #tpu.memory_space<vmem>>, vector<8x64xf32>,
    %c48 = arith.constant 48 : index
    %c64_19 = arith.constant 64 : index
    %68 = vector.load %arg6[%c48, %c64_19] : memref<64x128xf32, #tpu.memory_space<vmem>>, vector<8x64xf32>
    tpu.vector_store %arg6[%c48, %c64_19], %61 {strides = array<i32>} : memref<64x128xf32, #tpu.memory_space<vmem>>, vector<8x64xf32>,
    %69 = vector.extract_strided_slice %9 {offsets = [16, 0], sizes = [8, 256], strides = [1, 1]} : vector<64x256xf32> to vector<8x256xf32>
    %cst_20 = arith.constant dense<0.000000e+00> : vector<8x256xf32>
    %70 = tpu.matmul %63, %10, %cst_20 {dimension_numbers = #tpu.dot_dimension_numbers<[1], [0], [0], [1], [0, 0, 1, 1], [], []>} : vector<8x64xf32>, vector<64x256xf32>, vector<8x256xf32> -> vector<8x256xf32>
    %71 = arith.addf %69, %70 : vector<8x256xf32>
    %72 = vector.extract_strided_slice %0 {offsets = [16, 0], sizes = [8, 64], strides = [1, 1]} : vector<64x64xf32> to vector<8x64xf32>
    %73 = vector.extract_strided_slice %2 {offsets = [16, 0], sizes = [8, 64], strides = [1, 1]} : vector<64x64xf32> to vector<8x64xf32>
    %74 = arith.negf %71 : vector<8x256xf32>
    %75 = math.exp %74 : vector<8x256xf32>
    %cst_21 = arith.constant 1.000000e+00 : f32
    %76 = vector.broadcast %cst_21 : f32 to vector<8x256xf32>
    %77 = arith.addf %76, %75 : vector<8x256xf32>
    %78 = arith.divf %76, %77 : vector<8x256xf32>
    %79 = vector.extract_strided_slice %78 {offsets = [0, 0], sizes = [8, 64], strides = [1, 1]} : vector<8x256xf32> to vector<8x64xf32>
    %80 = vector.extract_strided_slice %78 {offsets = [0, 64], sizes = [8, 64], strides = [1, 1]} : vector<8x256xf32> to vector<8x64xf32>
    %81 = vector.extract_strided_slice %78 {offsets = [0, 192], sizes = [8, 64], strides = [1, 1]} : vector<8x256xf32> to vector<8x64xf32>
    %82 = vector.extract_strided_slice %71 {offsets = [0, 128], sizes = [8, 64], strides = [1, 1]} : vector<8x256xf32> to vector<8x64xf32>
    %83 = math.tanh %82 : vector<8x64xf32>
    %84 = arith.mulf %80, %66 : vector<8x64xf32>
    %85 = arith.mulf %79, %83 : vector<8x64xf32>
    %86 = arith.addf %84, %85 : vector<8x64xf32>
    %87 = math.tanh %86 : vector<8x64xf32>
    %88 = arith.mulf %81, %87 : vector<8x64xf32>
    %89 = arith.mulf %72, %88 : vector<8x64xf32>
    %90 = arith.mulf %73, %63 : vector<8x64xf32>
    %91 = arith.addf %89, %90 : vector<8x64xf32>
    %92 = arith.mulf %72, %86 : vector<8x64xf32>
    %93 = arith.mulf %73, %66 : vector<8x64xf32>
    %94 = arith.addf %92, %93 : vector<8x64xf32>
    %c16_22 = arith.constant 16 : index
    %c0_23 = arith.constant 0 : index
    %95 = vector.load %arg6[%c16_22, %c0_23] : memref<64x128xf32, #tpu.memory_space<vmem>>, vector<8x64xf32>
    tpu.vector_store %arg6[%c16_22, %c0_23], %89 {strides = array<i32>} : memref<64x128xf32, #tpu.memory_space<vmem>>, vector<8x64xf32>,
    %c40 = arith.constant 40 : index
    %c64_24 = arith.constant 64 : index
    %96 = vector.load %arg6[%c40, %c64_24] : memref<64x128xf32, #tpu.memory_space<vmem>>, vector<8x64xf32>
    tpu.vector_store %arg6[%c40, %c64_24], %89 {strides = array<i32>} : memref<64x128xf32, #tpu.memory_space<vmem>>, vector<8x64xf32>,
    %97 = vector.extract_strided_slice %9 {offsets = [24, 0], sizes = [8, 256], strides = [1, 1]} : vector<64x256xf32> to vector<8x256xf32>
    %cst_25 = arith.constant dense<0.000000e+00> : vector<8x256xf32>
    %98 = tpu.matmul %91, %10, %cst_25 {dimension_numbers = #tpu.dot_dimension_numbers<[1], [0], [0], [1], [0, 0, 1, 1], [], []>} : vector<8x64xf32>, vector<64x256xf32>, vector<8x256xf32> -> vector<8x256xf32>
    %99 = arith.addf %97, %98 : vector<8x256xf32>
    %100 = vector.extract_strided_slice %0 {offsets = [24, 0], sizes = [8, 64], strides = [1, 1]} : vector<64x64xf32> to vector<8x64xf32>
    %101 = vector.extract_strided_slice %2 {offsets = [24, 0], sizes = [8, 64], strides = [1, 1]} : vector<64x64xf32> to vector<8x64xf32>
    %102 = arith.negf %99 : vector<8x256xf32>
    %103 = math.exp %102 : vector<8x256xf32>
    %cst_26 = arith.constant 1.000000e+00 : f32
    %104 = vector.broadcast %cst_26 : f32 to vector<8x256xf32>
    %105 = arith.addf %104, %103 : vector<8x256xf32>
    %106 = arith.divf %104, %105 : vector<8x256xf32>
    %107 = vector.extract_strided_slice %106 {offsets = [0, 0], sizes = [8, 64], strides = [1, 1]} : vector<8x256xf32> to vector<8x64xf32>
    %108 = vector.extract_strided_slice %106 {offsets = [0, 64], sizes = [8, 64], strides = [1, 1]} : vector<8x256xf32> to vector<8x64xf32>
    %109 = vector.extract_strided_slice %106 {offsets = [0, 192], sizes = [8, 64], strides = [1, 1]} : vector<8x256xf32> to vector<8x64xf32>
    %110 = vector.extract_strided_slice %99 {offsets = [0, 128], sizes = [8, 64], strides = [1, 1]} : vector<8x256xf32> to vector<8x64xf32>
    %111 = math.tanh %110 : vector<8x64xf32>
    %112 = arith.mulf %108, %94 : vector<8x64xf32>
    %113 = arith.mulf %107, %111 : vector<8x64xf32>
    %114 = arith.addf %112, %113 : vector<8x64xf32>
    %115 = math.tanh %114 : vector<8x64xf32>
    %116 = arith.mulf %109, %115 : vector<8x64xf32>
    %117 = arith.mulf %100, %116 : vector<8x64xf32>
    %118 = arith.mulf %101, %91 : vector<8x64xf32>
    %119 = arith.addf %117, %118 : vector<8x64xf32>
    %120 = arith.mulf %100, %114 : vector<8x64xf32>
    %121 = arith.mulf %101, %94 : vector<8x64xf32>
    %122 = arith.addf %120, %121 : vector<8x64xf32>
    %c24 = arith.constant 24 : index
    %c0_27 = arith.constant 0 : index
    %123 = vector.load %arg6[%c24, %c0_27] : memref<64x128xf32, #tpu.memory_space<vmem>>, vector<8x64xf32>
    tpu.vector_store %arg6[%c24, %c0_27], %117 {strides = array<i32>} : memref<64x128xf32, #tpu.memory_space<vmem>>, vector<8x64xf32>,
    %c32 = arith.constant 32 : index
    %c64_28 = arith.constant 64 : index
    %124 = vector.load %arg6[%c32, %c64_28] : memref<64x128xf32, #tpu.memory_space<vmem>>, vector<8x64xf32>
    tpu.vector_store %arg6[%c32, %c64_28], %117 {strides = array<i32>} : memref<64x128xf32, #tpu.memory_space<vmem>>, vector<8x64xf32>,
    %125 = vector.extract_strided_slice %9 {offsets = [32, 0], sizes = [8, 256], strides = [1, 1]} : vector<64x256xf32> to vector<8x256xf32>
    %cst_29 = arith.constant dense<0.000000e+00> : vector<8x256xf32>
    %126 = tpu.matmul %119, %10, %cst_29 {dimension_numbers = #tpu.dot_dimension_numbers<[1], [0], [0], [1], [0, 0, 1, 1], [], []>} : vector<8x64xf32>, vector<64x256xf32>, vector<8x256xf32> -> vector<8x256xf32>
    %127 = arith.addf %125, %126 : vector<8x256xf32>
    %128 = vector.extract_strided_slice %0 {offsets = [32, 0], sizes = [8, 64], strides = [1, 1]} : vector<64x64xf32> to vector<8x64xf32>
    %129 = vector.extract_strided_slice %2 {offsets = [32, 0], sizes = [8, 64], strides = [1, 1]} : vector<64x64xf32> to vector<8x64xf32>
    %130 = arith.negf %127 : vector<8x256xf32>
    %131 = math.exp %130 : vector<8x256xf32>
    %cst_30 = arith.constant 1.000000e+00 : f32
    %132 = vector.broadcast %cst_30 : f32 to vector<8x256xf32>
    %133 = arith.addf %132, %131 : vector<8x256xf32>
    %134 = arith.divf %132, %133 : vector<8x256xf32>
    %135 = vector.extract_strided_slice %134 {offsets = [0, 0], sizes = [8, 64], strides = [1, 1]} : vector<8x256xf32> to vector<8x64xf32>
    %136 = vector.extract_strided_slice %134 {offsets = [0, 64], sizes = [8, 64], strides = [1, 1]} : vector<8x256xf32> to vector<8x64xf32>
    %137 = vector.extract_strided_slice %134 {offsets = [0, 192], sizes = [8, 64], strides = [1, 1]} : vector<8x256xf32> to vector<8x64xf32>
    %138 = vector.extract_strided_slice %127 {offsets = [0, 128], sizes = [8, 64], strides = [1, 1]} : vector<8x256xf32> to vector<8x64xf32>
    %139 = math.tanh %138 : vector<8x64xf32>
    %140 = arith.mulf %136, %122 : vector<8x64xf32>
    %141 = arith.mulf %135, %139 : vector<8x64xf32>
    %142 = arith.addf %140, %141 : vector<8x64xf32>
    %143 = math.tanh %142 : vector<8x64xf32>
    %144 = arith.mulf %137, %143 : vector<8x64xf32>
    %145 = arith.mulf %128, %144 : vector<8x64xf32>
    %146 = arith.mulf %129, %119 : vector<8x64xf32>
    %147 = arith.addf %145, %146 : vector<8x64xf32>
    %148 = arith.mulf %128, %142 : vector<8x64xf32>
    %149 = arith.mulf %129, %122 : vector<8x64xf32>
    %150 = arith.addf %148, %149 : vector<8x64xf32>
    %c32_31 = arith.constant 32 : index
    %c0_32 = arith.constant 0 : index
    %151 = vector.load %arg6[%c32_31, %c0_32] : memref<64x128xf32, #tpu.memory_space<vmem>>, vector<8x64xf32>
    tpu.vector_store %arg6[%c32_31, %c0_32], %145 {strides = array<i32>} : memref<64x128xf32, #tpu.memory_space<vmem>>, vector<8x64xf32>,
    %c24_33 = arith.constant 24 : index
    %c64_34 = arith.constant 64 : index
    %152 = vector.load %arg6[%c24_33, %c64_34] : memref<64x128xf32, #tpu.memory_space<vmem>>, vector<8x64xf32>
    tpu.vector_store %arg6[%c24_33, %c64_34], %145 {strides = array<i32>} : memref<64x128xf32, #tpu.memory_space<vmem>>, vector<8x64xf32>,
    %153 = vector.extract_strided_slice %9 {offsets = [40, 0], sizes = [8, 256], strides = [1, 1]} : vector<64x256xf32> to vector<8x256xf32>
    %cst_35 = arith.constant dense<0.000000e+00> : vector<8x256xf32>
    %154 = tpu.matmul %147, %10, %cst_35 {dimension_numbers = #tpu.dot_dimension_numbers<[1], [0], [0], [1], [0, 0, 1, 1], [], []>} : vector<8x64xf32>, vector<64x256xf32>, vector<8x256xf32> -> vector<8x256xf32>
    %155 = arith.addf %153, %154 : vector<8x256xf32>
    %156 = vector.extract_strided_slice %0 {offsets = [40, 0], sizes = [8, 64], strides = [1, 1]} : vector<64x64xf32> to vector<8x64xf32>
    %157 = vector.extract_strided_slice %2 {offsets = [40, 0], sizes = [8, 64], strides = [1, 1]} : vector<64x64xf32> to vector<8x64xf32>
    %158 = arith.negf %155 : vector<8x256xf32>
    %159 = math.exp %158 : vector<8x256xf32>
    %cst_36 = arith.constant 1.000000e+00 : f32
    %160 = vector.broadcast %cst_36 : f32 to vector<8x256xf32>
    %161 = arith.addf %160, %159 : vector<8x256xf32>
    %162 = arith.divf %160, %161 : vector<8x256xf32>
    %163 = vector.extract_strided_slice %162 {offsets = [0, 0], sizes = [8, 64], strides = [1, 1]} : vector<8x256xf32> to vector<8x64xf32>
    %164 = vector.extract_strided_slice %162 {offsets = [0, 64], sizes = [8, 64], strides = [1, 1]} : vector<8x256xf32> to vector<8x64xf32>
    %165 = vector.extract_strided_slice %162 {offsets = [0, 192], sizes = [8, 64], strides = [1, 1]} : vector<8x256xf32> to vector<8x64xf32>
    %166 = vector.extract_strided_slice %155 {offsets = [0, 128], sizes = [8, 64], strides = [1, 1]} : vector<8x256xf32> to vector<8x64xf32>
    %167 = math.tanh %166 : vector<8x64xf32>
    %168 = arith.mulf %164, %150 : vector<8x64xf32>
    %169 = arith.mulf %163, %167 : vector<8x64xf32>
    %170 = arith.addf %168, %169 : vector<8x64xf32>
    %171 = math.tanh %170 : vector<8x64xf32>
    %172 = arith.mulf %165, %171 : vector<8x64xf32>
    %173 = arith.mulf %156, %172 : vector<8x64xf32>
    %174 = arith.mulf %157, %147 : vector<8x64xf32>
    %175 = arith.addf %173, %174 : vector<8x64xf32>
    %176 = arith.mulf %156, %170 : vector<8x64xf32>
    %177 = arith.mulf %157, %150 : vector<8x64xf32>
    %178 = arith.addf %176, %177 : vector<8x64xf32>
    %c40_37 = arith.constant 40 : index
    %c0_38 = arith.constant 0 : index
    %179 = vector.load %arg6[%c40_37, %c0_38] : memref<64x128xf32, #tpu.memory_space<vmem>>, vector<8x64xf32>
    tpu.vector_store %arg6[%c40_37, %c0_38], %173 {strides = array<i32>} : memref<64x128xf32, #tpu.memory_space<vmem>>, vector<8x64xf32>,
    %c16_39 = arith.constant 16 : index
    %c64_40 = arith.constant 64 : index
    %180 = vector.load %arg6[%c16_39, %c64_40] : memref<64x128xf32, #tpu.memory_space<vmem>>, vector<8x64xf32>
    tpu.vector_store %arg6[%c16_39, %c64_40], %173 {strides = array<i32>} : memref<64x128xf32, #tpu.memory_space<vmem>>, vector<8x64xf32>,
    %181 = vector.extract_strided_slice %9 {offsets = [48, 0], sizes = [8, 256], strides = [1, 1]} : vector<64x256xf32> to vector<8x256xf32>
    %cst_41 = arith.constant dense<0.000000e+00> : vector<8x256xf32>
    %182 = tpu.matmul %175, %10, %cst_41 {dimension_numbers = #tpu.dot_dimension_numbers<[1], [0], [0], [1], [0, 0, 1, 1], [], []>} : vector<8x64xf32>, vector<64x256xf32>, vector<8x256xf32> -> vector<8x256xf32>
    %183 = arith.addf %181, %182 : vector<8x256xf32>
    %184 = vector.extract_strided_slice %0 {offsets = [48, 0], sizes = [8, 64], strides = [1, 1]} : vector<64x64xf32> to vector<8x64xf32>
    %185 = vector.extract_strided_slice %2 {offsets = [48, 0], sizes = [8, 64], strides = [1, 1]} : vector<64x64xf32> to vector<8x64xf32>
    %186 = arith.negf %183 : vector<8x256xf32>
    %187 = math.exp %186 : vector<8x256xf32>
    %cst_42 = arith.constant 1.000000e+00 : f32
    %188 = vector.broadcast %cst_42 : f32 to vector<8x256xf32>
    %189 = arith.addf %188, %187 : vector<8x256xf32>
    %190 = arith.divf %188, %189 : vector<8x256xf32>
    %191 = vector.extract_strided_slice %190 {offsets = [0, 0], sizes = [8, 64], strides = [1, 1]} : vector<8x256xf32> to vector<8x64xf32>
    %192 = vector.extract_strided_slice %190 {offsets = [0, 64], sizes = [8, 64], strides = [1, 1]} : vector<8x256xf32> to vector<8x64xf32>
    %193 = vector.extract_strided_slice %190 {offsets = [0, 192], sizes = [8, 64], strides = [1, 1]} : vector<8x256xf32> to vector<8x64xf32>
    %194 = vector.extract_strided_slice %183 {offsets = [0, 128], sizes = [8, 64], strides = [1, 1]} : vector<8x256xf32> to vector<8x64xf32>
    %195 = math.tanh %194 : vector<8x64xf32>
    %196 = arith.mulf %192, %178 : vector<8x64xf32>
    %197 = arith.mulf %191, %195 : vector<8x64xf32>
    %198 = arith.addf %196, %197 : vector<8x64xf32>
    %199 = math.tanh %198 : vector<8x64xf32>
    %200 = arith.mulf %193, %199 : vector<8x64xf32>
    %201 = arith.mulf %184, %200 : vector<8x64xf32>
    %202 = arith.mulf %185, %175 : vector<8x64xf32>
    %203 = arith.addf %201, %202 : vector<8x64xf32>
    %204 = arith.mulf %184, %198 : vector<8x64xf32>
    %205 = arith.mulf %185, %178 : vector<8x64xf32>
    %206 = arith.addf %204, %205 : vector<8x64xf32>
    %c48_43 = arith.constant 48 : index
    %c0_44 = arith.constant 0 : index
    %207 = vector.load %arg6[%c48_43, %c0_44] : memref<64x128xf32, #tpu.memory_space<vmem>>, vector<8x64xf32>
    tpu.vector_store %arg6[%c48_43, %c0_44], %201 {strides = array<i32>} : memref<64x128xf32, #tpu.memory_space<vmem>>, vector<8x64xf32>,
    %c8_45 = arith.constant 8 : index
    %c64_46 = arith.constant 64 : index
    %208 = vector.load %arg6[%c8_45, %c64_46] : memref<64x128xf32, #tpu.memory_space<vmem>>, vector<8x64xf32>
    tpu.vector_store %arg6[%c8_45, %c64_46], %201 {strides = array<i32>} : memref<64x128xf32, #tpu.memory_space<vmem>>, vector<8x64xf32>,
    %209 = vector.extract_strided_slice %9 {offsets = [56, 0], sizes = [8, 256], strides = [1, 1]} : vector<64x256xf32> to vector<8x256xf32>
    %cst_47 = arith.constant dense<0.000000e+00> : vector<8x256xf32>
    %210 = tpu.matmul %203, %10, %cst_47 {dimension_numbers = #tpu.dot_dimension_numbers<[1], [0], [0], [1], [0, 0, 1, 1], [], []>} : vector<8x64xf32>, vector<64x256xf32>, vector<8x256xf32> -> vector<8x256xf32>
    %211 = arith.addf %209, %210 : vector<8x256xf32>
    %212 = vector.extract_strided_slice %0 {offsets = [56, 0], sizes = [8, 64], strides = [1, 1]} : vector<64x64xf32> to vector<8x64xf32>
    %213 = arith.negf %211 : vector<8x256xf32>
    %214 = math.exp %213 : vector<8x256xf32>
    %cst_48 = arith.constant 1.000000e+00 : f32
    %215 = vector.broadcast %cst_48 : f32 to vector<8x256xf32>
    %216 = arith.addf %215, %214 : vector<8x256xf32>
    %217 = arith.divf %215, %216 : vector<8x256xf32>
    %218 = vector.extract_strided_slice %217 {offsets = [0, 0], sizes = [8, 64], strides = [1, 1]} : vector<8x256xf32> to vector<8x64xf32>
    %219 = vector.extract_strided_slice %217 {offsets = [0, 64], sizes = [8, 64], strides = [1, 1]} : vector<8x256xf32> to vector<8x64xf32>
    %220 = vector.extract_strided_slice %217 {offsets = [0, 192], sizes = [8, 64], strides = [1, 1]} : vector<8x256xf32> to vector<8x64xf32>
    %221 = vector.extract_strided_slice %211 {offsets = [0, 128], sizes = [8, 64], strides = [1, 1]} : vector<8x256xf32> to vector<8x64xf32>
    %222 = math.tanh %221 : vector<8x64xf32>
    %223 = arith.mulf %219, %206 : vector<8x64xf32>
    %224 = arith.mulf %218, %222 : vector<8x64xf32>
    %225 = arith.addf %223, %224 : vector<8x64xf32>
    %226 = math.tanh %225 : vector<8x64xf32>
    %227 = arith.mulf %220, %226 : vector<8x64xf32>
    %228 = arith.mulf %212, %227 : vector<8x64xf32>
    %c56_49 = arith.constant 56 : index
    %c0_50 = arith.constant 0 : index
    %229 = vector.load %arg6[%c56_49, %c0_50] : memref<64x128xf32, #tpu.memory_space<vmem>>, vector<8x64xf32>
    tpu.vector_store %arg6[%c56_49, %c0_50], %228 {strides = array<i32>} : memref<64x128xf32, #tpu.memory_space<vmem>>, vector<8x64xf32>,
    %c0_51 = arith.constant 0 : index
    %c64_52 = arith.constant 64 : index
    %230 = vector.load %arg6[%c0_51, %c64_52] : memref<64x128xf32, #tpu.memory_space<vmem>>, vector<8x64xf32>
    tpu.vector_store %arg6[%c0_51, %c64_52], %228 {strides = array<i32>} : memref<64x128xf32, #tpu.memory_space<vmem>>, vector<8x64xf32>,
    %c0_53 = arith.constant 0 : index
    %c0_54 = arith.constant 0 : index
    %231 = vector.load %arg6[%c0_53, %c0_54] : memref<64x128xf32, #tpu.memory_space<vmem>>, vector<64x128xf32>
    %c80 = arith.constant 80 : index
    %c0_55 = arith.constant 0 : index
    %232 = vector.load %arg3[%c80, %c0_55] : memref<288x256xf32, #tpu.memory_space<vmem>>, vector<128x256xf32>
    %cst_56 = arith.constant dense<0.000000e+00> : vector<64x256xf32>
    %233 = tpu.matmul %231, %232, %cst_56 {dimension_numbers = #tpu.dot_dimension_numbers<[1], [0], [0], [1], [0, 0, 1, 1], [], []>} : vector<64x128xf32>, vector<128x256xf32>, vector<64x256xf32> -> vector<64x256xf32>
    %c280 = arith.constant 280 : index
    %c0_57 = arith.constant 0 : index
    %234 = vector.load %arg3[%c280, %c0_57] : memref<288x256xf32, #tpu.memory_space<vmem>>, vector<1x256xf32>
    %235 = vector.broadcast %234 : vector<1x256xf32> to vector<64x256xf32>
    %236 = arith.addf %233, %235 : vector<64x256xf32>
    %c208 = arith.constant 208 : index
    %c0_58 = arith.constant 0 : index
    %237 = vector.load %arg3[%c208, %c0_58] : memref<288x256xf32, #tpu.memory_space<vmem>>, vector<64x256xf32>
    %cst_59 = arith.constant 0.000000e+00 : f32
    %238 = vector.broadcast %cst_59 : f32 to vector<8x64xf32>
    %cst_60 = arith.constant 0.000000e+00 : f32
    %239 = vector.broadcast %cst_60 : f32 to vector<8x64xf32>
    %cst_61 = arith.constant 0.000000e+00 : f32
    %240 = vector.broadcast %cst_61 : f32 to vector<8x64xf32>
    %241 = vector.extract_strided_slice %236 {offsets = [0, 0], sizes = [8, 256], strides = [1, 1]} : vector<64x256xf32> to vector<8x256xf32>
    %cst_62 = arith.constant dense<0.000000e+00> : vector<8x256xf32>
    %242 = tpu.matmul %238, %237, %cst_62 {dimension_numbers = #tpu.dot_dimension_numbers<[1], [0], [0], [1], [0, 0, 1, 1], [], []>} : vector<8x64xf32>, vector<64x256xf32>, vector<8x256xf32> -> vector<8x256xf32>
    %243 = arith.addf %241, %242 : vector<8x256xf32>
    %244 = vector.extract_strided_slice %0 {offsets = [0, 0], sizes = [8, 64], strides = [1, 1]} : vector<64x64xf32> to vector<8x64xf32>
    %245 = vector.extract_strided_slice %2 {offsets = [0, 0], sizes = [8, 64], strides = [1, 1]} : vector<64x64xf32> to vector<8x64xf32>
    %246 = arith.negf %243 : vector<8x256xf32>
    %247 = math.exp %246 : vector<8x256xf32>
    %cst_63 = arith.constant 1.000000e+00 : f32
    %248 = vector.broadcast %cst_63 : f32 to vector<8x256xf32>
    %249 = arith.addf %248, %247 : vector<8x256xf32>
    %250 = arith.divf %248, %249 : vector<8x256xf32>
    %251 = vector.extract_strided_slice %250 {offsets = [0, 0], sizes = [8, 64], strides = [1, 1]} : vector<8x256xf32> to vector<8x64xf32>
    %252 = vector.extract_strided_slice %250 {offsets = [0, 64], sizes = [8, 64], strides = [1, 1]} : vector<8x256xf32> to vector<8x64xf32>
    %253 = vector.extract_strided_slice %250 {offsets = [0, 192], sizes = [8, 64], strides = [1, 1]} : vector<8x256xf32> to vector<8x64xf32>
    %254 = vector.extract_strided_slice %243 {offsets = [0, 128], sizes = [8, 64], strides = [1, 1]} : vector<8x256xf32> to vector<8x64xf32>
    %255 = math.tanh %254 : vector<8x64xf32>
    %256 = arith.mulf %252, %239 : vector<8x64xf32>
    %257 = arith.mulf %251, %255 : vector<8x64xf32>
    %258 = arith.addf %256, %257 : vector<8x64xf32>
    %259 = math.tanh %258 : vector<8x64xf32>
    %260 = arith.mulf %253, %259 : vector<8x64xf32>
    %261 = arith.mulf %244, %260 : vector<8x64xf32>
    %262 = arith.mulf %245, %238 : vector<8x64xf32>
    %263 = arith.addf %261, %262 : vector<8x64xf32>
    %264 = arith.mulf %244, %258 : vector<8x64xf32>
    %265 = arith.mulf %245, %239 : vector<8x64xf32>
    %266 = arith.addf %264, %265 : vector<8x64xf32>
    %267 = vector.extract_strided_slice %3 {offsets = [0, 0], sizes = [8, 64], strides = [1, 1]} : vector<64x64xf32> to vector<8x64xf32>
    %268 = arith.mulf %267, %261 : vector<8x64xf32>
    %269 = arith.addf %240, %268 : vector<8x64xf32>
    %270 = vector.extract_strided_slice %236 {offsets = [8, 0], sizes = [8, 256], strides = [1, 1]} : vector<64x256xf32> to vector<8x256xf32>
    %cst_64 = arith.constant dense<0.000000e+00> : vector<8x256xf32>
    %271 = tpu.matmul %263, %237, %cst_64 {dimension_numbers = #tpu.dot_dimension_numbers<[1], [0], [0], [1], [0, 0, 1, 1], [], []>} : vector<8x64xf32>, vector<64x256xf32>, vector<8x256xf32> -> vector<8x256xf32>
    %272 = arith.addf %270, %271 : vector<8x256xf32>
    %273 = vector.extract_strided_slice %0 {offsets = [8, 0], sizes = [8, 64], strides = [1, 1]} : vector<64x64xf32> to vector<8x64xf32>
    %274 = vector.extract_strided_slice %2 {offsets = [8, 0], sizes = [8, 64], strides = [1, 1]} : vector<64x64xf32> to vector<8x64xf32>
    %275 = arith.negf %272 : vector<8x256xf32>
    %276 = math.exp %275 : vector<8x256xf32>
    %cst_65 = arith.constant 1.000000e+00 : f32
    %277 = vector.broadcast %cst_65 : f32 to vector<8x256xf32>
    %278 = arith.addf %277, %276 : vector<8x256xf32>
    %279 = arith.divf %277, %278 : vector<8x256xf32>
    %280 = vector.extract_strided_slice %279 {offsets = [0, 0], sizes = [8, 64], strides = [1, 1]} : vector<8x256xf32> to vector<8x64xf32>
    %281 = vector.extract_strided_slice %279 {offsets = [0, 64], sizes = [8, 64], strides = [1, 1]} : vector<8x256xf32> to vector<8x64xf32>
    %282 = vector.extract_strided_slice %279 {offsets = [0, 192], sizes = [8, 64], strides = [1, 1]} : vector<8x256xf32> to vector<8x64xf32>
    %283 = vector.extract_strided_slice %272 {offsets = [0, 128], sizes = [8, 64], strides = [1, 1]} : vector<8x256xf32> to vector<8x64xf32>
    %284 = math.tanh %283 : vector<8x64xf32>
    %285 = arith.mulf %281, %266 : vector<8x64xf32>
    %286 = arith.mulf %280, %284 : vector<8x64xf32>
    %287 = arith.addf %285, %286 : vector<8x64xf32>
    %288 = math.tanh %287 : vector<8x64xf32>
    %289 = arith.mulf %282, %288 : vector<8x64xf32>
    %290 = arith.mulf %273, %289 : vector<8x64xf32>
    %291 = arith.mulf %274, %263 : vector<8x64xf32>
    %292 = arith.addf %290, %291 : vector<8x64xf32>
    %293 = arith.mulf %273, %287 : vector<8x64xf32>
    %294 = arith.mulf %274, %266 : vector<8x64xf32>
    %295 = arith.addf %293, %294 : vector<8x64xf32>
    %296 = vector.extract_strided_slice %3 {offsets = [8, 0], sizes = [8, 64], strides = [1, 1]} : vector<64x64xf32> to vector<8x64xf32>
    %297 = arith.mulf %296, %290 : vector<8x64xf32>
    %298 = arith.addf %269, %297 : vector<8x64xf32>
    %299 = vector.extract_strided_slice %236 {offsets = [16, 0], sizes = [8, 256], strides = [1, 1]} : vector<64x256xf32> to vector<8x256xf32>
    %cst_66 = arith.constant dense<0.000000e+00> : vector<8x256xf32>
    %300 = tpu.matmul %292, %237, %cst_66 {dimension_numbers = #tpu.dot_dimension_numbers<[1], [0], [0], [1], [0, 0, 1, 1], [], []>} : vector<8x64xf32>, vector<64x256xf32>, vector<8x256xf32> -> vector<8x256xf32>
    %301 = arith.addf %299, %300 : vector<8x256xf32>
    %302 = vector.extract_strided_slice %0 {offsets = [16, 0], sizes = [8, 64], strides = [1, 1]} : vector<64x64xf32> to vector<8x64xf32>
    %303 = vector.extract_strided_slice %2 {offsets = [16, 0], sizes = [8, 64], strides = [1, 1]} : vector<64x64xf32> to vector<8x64xf32>
    %304 = arith.negf %301 : vector<8x256xf32>
    %305 = math.exp %304 : vector<8x256xf32>
    %cst_67 = arith.constant 1.000000e+00 : f32
    %306 = vector.broadcast %cst_67 : f32 to vector<8x256xf32>
    %307 = arith.addf %306, %305 : vector<8x256xf32>
    %308 = arith.divf %306, %307 : vector<8x256xf32>
    %309 = vector.extract_strided_slice %308 {offsets = [0, 0], sizes = [8, 64], strides = [1, 1]} : vector<8x256xf32> to vector<8x64xf32>
    %310 = vector.extract_strided_slice %308 {offsets = [0, 64], sizes = [8, 64], strides = [1, 1]} : vector<8x256xf32> to vector<8x64xf32>
    %311 = vector.extract_strided_slice %308 {offsets = [0, 192], sizes = [8, 64], strides = [1, 1]} : vector<8x256xf32> to vector<8x64xf32>
    %312 = vector.extract_strided_slice %301 {offsets = [0, 128], sizes = [8, 64], strides = [1, 1]} : vector<8x256xf32> to vector<8x64xf32>
    %313 = math.tanh %312 : vector<8x64xf32>
    %314 = arith.mulf %310, %295 : vector<8x64xf32>
    %315 = arith.mulf %309, %313 : vector<8x64xf32>
    %316 = arith.addf %314, %315 : vector<8x64xf32>
    %317 = math.tanh %316 : vector<8x64xf32>
    %318 = arith.mulf %311, %317 : vector<8x64xf32>
    %319 = arith.mulf %302, %318 : vector<8x64xf32>
    %320 = arith.mulf %303, %292 : vector<8x64xf32>
    %321 = arith.addf %319, %320 : vector<8x64xf32>
    %322 = arith.mulf %302, %316 : vector<8x64xf32>
    %323 = arith.mulf %303, %295 : vector<8x64xf32>
    %324 = arith.addf %322, %323 : vector<8x64xf32>
    %325 = vector.extract_strided_slice %3 {offsets = [16, 0], sizes = [8, 64], strides = [1, 1]} : vector<64x64xf32> to vector<8x64xf32>
    %326 = arith.mulf %325, %319 : vector<8x64xf32>
    %327 = arith.addf %298, %326 : vector<8x64xf32>
    %328 = vector.extract_strided_slice %236 {offsets = [24, 0], sizes = [8, 256], strides = [1, 1]} : vector<64x256xf32> to vector<8x256xf32>
    %cst_68 = arith.constant dense<0.000000e+00> : vector<8x256xf32>
    %329 = tpu.matmul %321, %237, %cst_68 {dimension_numbers = #tpu.dot_dimension_numbers<[1], [0], [0], [1], [0, 0, 1, 1], [], []>} : vector<8x64xf32>, vector<64x256xf32>, vector<8x256xf32> -> vector<8x256xf32>
    %330 = arith.addf %328, %329 : vector<8x256xf32>
    %331 = vector.extract_strided_slice %0 {offsets = [24, 0], sizes = [8, 64], strides = [1, 1]} : vector<64x64xf32> to vector<8x64xf32>
    %332 = vector.extract_strided_slice %2 {offsets = [24, 0], sizes = [8, 64], strides = [1, 1]} : vector<64x64xf32> to vector<8x64xf32>
    %333 = arith.negf %330 : vector<8x256xf32>
    %334 = math.exp %333 : vector<8x256xf32>
    %cst_69 = arith.constant 1.000000e+00 : f32
    %335 = vector.broadcast %cst_69 : f32 to vector<8x256xf32>
    %336 = arith.addf %335, %334 : vector<8x256xf32>
    %337 = arith.divf %335, %336 : vector<8x256xf32>
    %338 = vector.extract_strided_slice %337 {offsets = [0, 0], sizes = [8, 64], strides = [1, 1]} : vector<8x256xf32> to vector<8x64xf32>
    %339 = vector.extract_strided_slice %337 {offsets = [0, 64], sizes = [8, 64], strides = [1, 1]} : vector<8x256xf32> to vector<8x64xf32>
    %340 = vector.extract_strided_slice %337 {offsets = [0, 192], sizes = [8, 64], strides = [1, 1]} : vector<8x256xf32> to vector<8x64xf32>
    %341 = vector.extract_strided_slice %330 {offsets = [0, 128], sizes = [8, 64], strides = [1, 1]} : vector<8x256xf32> to vector<8x64xf32>
    %342 = math.tanh %341 : vector<8x64xf32>
    %343 = arith.mulf %339, %324 : vector<8x64xf32>
    %344 = arith.mulf %338, %342 : vector<8x64xf32>
    %345 = arith.addf %343, %344 : vector<8x64xf32>
    %346 = math.tanh %345 : vector<8x64xf32>
    %347 = arith.mulf %340, %346 : vector<8x64xf32>
    %348 = arith.mulf %331, %347 : vector<8x64xf32>
    %349 = arith.mulf %332, %321 : vector<8x64xf32>
    %350 = arith.addf %348, %349 : vector<8x64xf32>
    %351 = arith.mulf %331, %345 : vector<8x64xf32>
    %352 = arith.mulf %332, %324 : vector<8x64xf32>
    %353 = arith.addf %351, %352 : vector<8x64xf32>
    %354 = vector.extract_strided_slice %3 {offsets = [24, 0], sizes = [8, 64], strides = [1, 1]} : vector<64x64xf32> to vector<8x64xf32>
    %355 = arith.mulf %354, %348 : vector<8x64xf32>
    %356 = arith.addf %327, %355 : vector<8x64xf32>
    %357 = vector.extract_strided_slice %236 {offsets = [32, 0], sizes = [8, 256], strides = [1, 1]} : vector<64x256xf32> to vector<8x256xf32>
    %cst_70 = arith.constant dense<0.000000e+00> : vector<8x256xf32>
    %358 = tpu.matmul %350, %237, %cst_70 {dimension_numbers = #tpu.dot_dimension_numbers<[1], [0], [0], [1], [0, 0, 1, 1], [], []>} : vector<8x64xf32>, vector<64x256xf32>, vector<8x256xf32> -> vector<8x256xf32>
    %359 = arith.addf %357, %358 : vector<8x256xf32>
    %360 = vector.extract_strided_slice %0 {offsets = [32, 0], sizes = [8, 64], strides = [1, 1]} : vector<64x64xf32> to vector<8x64xf32>
    %361 = vector.extract_strided_slice %2 {offsets = [32, 0], sizes = [8, 64], strides = [1, 1]} : vector<64x64xf32> to vector<8x64xf32>
    %362 = arith.negf %359 : vector<8x256xf32>
    %363 = math.exp %362 : vector<8x256xf32>
    %cst_71 = arith.constant 1.000000e+00 : f32
    %364 = vector.broadcast %cst_71 : f32 to vector<8x256xf32>
    %365 = arith.addf %364, %363 : vector<8x256xf32>
    %366 = arith.divf %364, %365 : vector<8x256xf32>
    %367 = vector.extract_strided_slice %366 {offsets = [0, 0], sizes = [8, 64], strides = [1, 1]} : vector<8x256xf32> to vector<8x64xf32>
    %368 = vector.extract_strided_slice %366 {offsets = [0, 64], sizes = [8, 64], strides = [1, 1]} : vector<8x256xf32> to vector<8x64xf32>
    %369 = vector.extract_strided_slice %366 {offsets = [0, 192], sizes = [8, 64], strides = [1, 1]} : vector<8x256xf32> to vector<8x64xf32>
    %370 = vector.extract_strided_slice %359 {offsets = [0, 128], sizes = [8, 64], strides = [1, 1]} : vector<8x256xf32> to vector<8x64xf32>
    %371 = math.tanh %370 : vector<8x64xf32>
    %372 = arith.mulf %368, %353 : vector<8x64xf32>
    %373 = arith.mulf %367, %371 : vector<8x64xf32>
    %374 = arith.addf %372, %373 : vector<8x64xf32>
    %375 = math.tanh %374 : vector<8x64xf32>
    %376 = arith.mulf %369, %375 : vector<8x64xf32>
    %377 = arith.mulf %360, %376 : vector<8x64xf32>
    %378 = arith.mulf %361, %350 : vector<8x64xf32>
    %379 = arith.addf %377, %378 : vector<8x64xf32>
    %380 = arith.mulf %360, %374 : vector<8x64xf32>
    %381 = arith.mulf %361, %353 : vector<8x64xf32>
    %382 = arith.addf %380, %381 : vector<8x64xf32>
    %383 = vector.extract_strided_slice %3 {offsets = [32, 0], sizes = [8, 64], strides = [1, 1]} : vector<64x64xf32> to vector<8x64xf32>
    %384 = arith.mulf %383, %377 : vector<8x64xf32>
    %385 = arith.addf %356, %384 : vector<8x64xf32>
    %386 = vector.extract_strided_slice %236 {offsets = [40, 0], sizes = [8, 256], strides = [1, 1]} : vector<64x256xf32> to vector<8x256xf32>
    %cst_72 = arith.constant dense<0.000000e+00> : vector<8x256xf32>
    %387 = tpu.matmul %379, %237, %cst_72 {dimension_numbers = #tpu.dot_dimension_numbers<[1], [0], [0], [1], [0, 0, 1, 1], [], []>} : vector<8x64xf32>, vector<64x256xf32>, vector<8x256xf32> -> vector<8x256xf32>
    %388 = arith.addf %386, %387 : vector<8x256xf32>
    %389 = vector.extract_strided_slice %0 {offsets = [40, 0], sizes = [8, 64], strides = [1, 1]} : vector<64x64xf32> to vector<8x64xf32>
    %390 = vector.extract_strided_slice %2 {offsets = [40, 0], sizes = [8, 64], strides = [1, 1]} : vector<64x64xf32> to vector<8x64xf32>
    %391 = arith.negf %388 : vector<8x256xf32>
    %392 = math.exp %391 : vector<8x256xf32>
    %cst_73 = arith.constant 1.000000e+00 : f32
    %393 = vector.broadcast %cst_73 : f32 to vector<8x256xf32>
    %394 = arith.addf %393, %392 : vector<8x256xf32>
    %395 = arith.divf %393, %394 : vector<8x256xf32>
    %396 = vector.extract_strided_slice %395 {offsets = [0, 0], sizes = [8, 64], strides = [1, 1]} : vector<8x256xf32> to vector<8x64xf32>
    %397 = vector.extract_strided_slice %395 {offsets = [0, 64], sizes = [8, 64], strides = [1, 1]} : vector<8x256xf32> to vector<8x64xf32>
    %398 = vector.extract_strided_slice %395 {offsets = [0, 192], sizes = [8, 64], strides = [1, 1]} : vector<8x256xf32> to vector<8x64xf32>
    %399 = vector.extract_strided_slice %388 {offsets = [0, 128], sizes = [8, 64], strides = [1, 1]} : vector<8x256xf32> to vector<8x64xf32>
    %400 = math.tanh %399 : vector<8x64xf32>
    %401 = arith.mulf %397, %382 : vector<8x64xf32>
    %402 = arith.mulf %396, %400 : vector<8x64xf32>
    %403 = arith.addf %401, %402 : vector<8x64xf32>
    %404 = math.tanh %403 : vector<8x64xf32>
    %405 = arith.mulf %398, %404 : vector<8x64xf32>
    %406 = arith.mulf %389, %405 : vector<8x64xf32>
    %407 = arith.mulf %390, %379 : vector<8x64xf32>
    %408 = arith.addf %406, %407 : vector<8x64xf32>
    %409 = arith.mulf %389, %403 : vector<8x64xf32>
    %410 = arith.mulf %390, %382 : vector<8x64xf32>
    %411 = arith.addf %409, %410 : vector<8x64xf32>
    %412 = vector.extract_strided_slice %3 {offsets = [40, 0], sizes = [8, 64], strides = [1, 1]} : vector<64x64xf32> to vector<8x64xf32>
    %413 = arith.mulf %412, %406 : vector<8x64xf32>
    %414 = arith.addf %385, %413 : vector<8x64xf32>
    %415 = vector.extract_strided_slice %236 {offsets = [48, 0], sizes = [8, 256], strides = [1, 1]} : vector<64x256xf32> to vector<8x256xf32>
    %cst_74 = arith.constant dense<0.000000e+00> : vector<8x256xf32>
    %416 = tpu.matmul %408, %237, %cst_74 {dimension_numbers = #tpu.dot_dimension_numbers<[1], [0], [0], [1], [0, 0, 1, 1], [], []>} : vector<8x64xf32>, vector<64x256xf32>, vector<8x256xf32> -> vector<8x256xf32>
    %417 = arith.addf %415, %416 : vector<8x256xf32>
    %418 = vector.extract_strided_slice %0 {offsets = [48, 0], sizes = [8, 64], strides = [1, 1]} : vector<64x64xf32> to vector<8x64xf32>
    %419 = vector.extract_strided_slice %2 {offsets = [48, 0], sizes = [8, 64], strides = [1, 1]} : vector<64x64xf32> to vector<8x64xf32>
    %420 = arith.negf %417 : vector<8x256xf32>
    %421 = math.exp %420 : vector<8x256xf32>
    %cst_75 = arith.constant 1.000000e+00 : f32
    %422 = vector.broadcast %cst_75 : f32 to vector<8x256xf32>
    %423 = arith.addf %422, %421 : vector<8x256xf32>
    %424 = arith.divf %422, %423 : vector<8x256xf32>
    %425 = vector.extract_strided_slice %424 {offsets = [0, 0], sizes = [8, 64], strides = [1, 1]} : vector<8x256xf32> to vector<8x64xf32>
    %426 = vector.extract_strided_slice %424 {offsets = [0, 64], sizes = [8, 64], strides = [1, 1]} : vector<8x256xf32> to vector<8x64xf32>
    %427 = vector.extract_strided_slice %424 {offsets = [0, 192], sizes = [8, 64], strides = [1, 1]} : vector<8x256xf32> to vector<8x64xf32>
    %428 = vector.extract_strided_slice %417 {offsets = [0, 128], sizes = [8, 64], strides = [1, 1]} : vector<8x256xf32> to vector<8x64xf32>
    %429 = math.tanh %428 : vector<8x64xf32>
    %430 = arith.mulf %426, %411 : vector<8x64xf32>
    %431 = arith.mulf %425, %429 : vector<8x64xf32>
    %432 = arith.addf %430, %431 : vector<8x64xf32>
    %433 = math.tanh %432 : vector<8x64xf32>
    %434 = arith.mulf %427, %433 : vector<8x64xf32>
    %435 = arith.mulf %418, %434 : vector<8x64xf32>
    %436 = arith.mulf %419, %408 : vector<8x64xf32>
    %437 = arith.addf %435, %436 : vector<8x64xf32>
    %438 = arith.mulf %418, %432 : vector<8x64xf32>
    %439 = arith.mulf %419, %411 : vector<8x64xf32>
    %440 = arith.addf %438, %439 : vector<8x64xf32>
    %441 = vector.extract_strided_slice %3 {offsets = [48, 0], sizes = [8, 64], strides = [1, 1]} : vector<64x64xf32> to vector<8x64xf32>
    %442 = arith.mulf %441, %435 : vector<8x64xf32>
    %443 = arith.addf %414, %442 : vector<8x64xf32>
    %444 = vector.extract_strided_slice %236 {offsets = [56, 0], sizes = [8, 256], strides = [1, 1]} : vector<64x256xf32> to vector<8x256xf32>
    %cst_76 = arith.constant dense<0.000000e+00> : vector<8x256xf32>
    %445 = tpu.matmul %437, %237, %cst_76 {dimension_numbers = #tpu.dot_dimension_numbers<[1], [0], [0], [1], [0, 0, 1, 1], [], []>} : vector<8x64xf32>, vector<64x256xf32>, vector<8x256xf32> -> vector<8x256xf32>
    %446 = arith.addf %444, %445 : vector<8x256xf32>
    %447 = vector.extract_strided_slice %0 {offsets = [56, 0], sizes = [8, 64], strides = [1, 1]} : vector<64x64xf32> to vector<8x64xf32>
    %448 = arith.negf %446 : vector<8x256xf32>
    %449 = math.exp %448 : vector<8x256xf32>
    %cst_77 = arith.constant 1.000000e+00 : f32
    %450 = vector.broadcast %cst_77 : f32 to vector<8x256xf32>
    %451 = arith.addf %450, %449 : vector<8x256xf32>
    %452 = arith.divf %450, %451 : vector<8x256xf32>
    %453 = vector.extract_strided_slice %452 {offsets = [0, 0], sizes = [8, 64], strides = [1, 1]} : vector<8x256xf32> to vector<8x64xf32>
    %454 = vector.extract_strided_slice %452 {offsets = [0, 64], sizes = [8, 64], strides = [1, 1]} : vector<8x256xf32> to vector<8x64xf32>
    %455 = vector.extract_strided_slice %452 {offsets = [0, 192], sizes = [8, 64], strides = [1, 1]} : vector<8x256xf32> to vector<8x64xf32>
    %456 = vector.extract_strided_slice %446 {offsets = [0, 128], sizes = [8, 64], strides = [1, 1]} : vector<8x256xf32> to vector<8x64xf32>
    %457 = math.tanh %456 : vector<8x64xf32>
    %458 = arith.mulf %454, %440 : vector<8x64xf32>
    %459 = arith.mulf %453, %457 : vector<8x64xf32>
    %460 = arith.addf %458, %459 : vector<8x64xf32>
    %461 = math.tanh %460 : vector<8x64xf32>
    %462 = arith.mulf %455, %461 : vector<8x64xf32>
    %463 = arith.mulf %447, %462 : vector<8x64xf32>
    %464 = vector.extract_strided_slice %3 {offsets = [56, 0], sizes = [8, 64], strides = [1, 1]} : vector<64x64xf32> to vector<8x64xf32>
    %465 = arith.mulf %464, %463 : vector<8x64xf32>
    %466 = arith.addf %443, %465 : vector<8x64xf32>
    %c0_78 = arith.constant 0 : index
    %c0_79 = arith.constant 0 : index
    %467 = vector.load %arg4[%c0_78, %c0_79] : memref<144x64xf32, #tpu.memory_space<vmem>>, vector<64x64xf32>
    %cst_80 = arith.constant dense<0.000000e+00> : vector<8x64xf32>
    %468 = tpu.matmul %466, %467, %cst_80 {dimension_numbers = #tpu.dot_dimension_numbers<[1], [0], [0], [1], [0, 0, 1, 1], [], []>} : vector<8x64xf32>, vector<64x64xf32>, vector<8x64xf32> -> vector<8x64xf32>
    %c64_81 = arith.constant 64 : index
    %c0_82 = arith.constant 0 : index
    %469 = vector.load %arg4[%c64_81, %c0_82] : memref<144x64xf32, #tpu.memory_space<vmem>>, vector<1x64xf32>
    %470 = vector.broadcast %469 : vector<1x64xf32> to vector<8x64xf32>
    %471 = arith.addf %468, %470 : vector<8x64xf32>
    %cst_83 = arith.constant 0.000000e+00 : f32
    %472 = vector.broadcast %cst_83 : f32 to vector<8x64xf32>
    %473 = arith.maximumf %471, %472 : vector<8x64xf32>
    %c72 = arith.constant 72 : index
    %c0_84 = arith.constant 0 : index
    %474 = vector.load %arg4[%c72, %c0_84] : memref<144x64xf32, #tpu.memory_space<vmem>>, vector<64x64xf32>
    %cst_85 = arith.constant dense<0.000000e+00> : vector<8x64xf32>
    %475 = tpu.matmul %473, %474, %cst_85 {dimension_numbers = #tpu.dot_dimension_numbers<[1], [0], [0], [1], [0, 0, 1, 1], [], []>} : vector<8x64xf32>, vector<64x64xf32>, vector<8x64xf32> -> vector<8x64xf32>
    %c136 = arith.constant 136 : index
    %c0_86 = arith.constant 0 : index
    %476 = vector.load %arg4[%c136, %c0_86] : memref<144x64xf32, #tpu.memory_space<vmem>>, vector<1x64xf32>
    %477 = vector.broadcast %476 : vector<1x64xf32> to vector<8x64xf32>
    %478 = arith.addf %475, %477 : vector<8x64xf32>
    %cst_87 = arith.constant 0.000000e+00 : f32
    %479 = vector.broadcast %cst_87 : f32 to vector<8x64xf32>
    %480 = arith.maximumf %478, %479 : vector<8x64xf32>
    %481 = vector.extract_strided_slice %480 {offsets = [0, 0], sizes = [8, 8], strides = [1, 1]} : vector<8x64xf32> to vector<8x8xf32>
    %cst_88 = arith.constant dense<0xFF800000> : vector<8xf32>
    %482 = vector.multi_reduction <maximumf>, %481, %cst_88 [1] : vector<8x8xf32> to vector<8xf32>
    %483 = vector.shape_cast %482 : vector<8xf32> to vector<8x1xf32>
    %484 = vector.broadcast %483 : vector<8x1xf32> to vector<8x8xf32>
    %485 = arith.subf %481, %484 : vector<8x8xf32>
    %486 = math.exp %485 : vector<8x8xf32>
    %cst_89 = arith.constant dense<0.000000e+00> : vector<8xf32>
    %487 = vector.multi_reduction <add>, %486, %cst_89 [1] : vector<8x8xf32> to vector<8xf32>
    %488 = vector.shape_cast %487 : vector<8xf32> to vector<8x1xf32>
    %489 = math.log %488 : vector<8x1xf32>
    %490 = arith.addf %483, %489 : vector<8x1xf32>
    %491 = vector.broadcast %490 : vector<8x1xf32> to vector<8x8xf32>
    %492 = arith.subf %481, %491 : vector<8x8xf32>
    %c0_90 = arith.constant 0 : index
    %c0_91 = arith.constant 0 : index
    %493 = vector.load %arg5[%c0_90, %c0_91] : memref<8x8xf32, #tpu.memory_space<vmem>>, vector<8x8xf32>
    tpu.vector_store %arg5[%c0_90, %c0_91], %492 {strides = array<i32>} : memref<8x8xf32, #tpu.memory_space<vmem>>, vector<8x8xf32>,
    return
  }
}

</mosaic_0001>

<llo_original>
// kernel: seq_classifier_varlen.1
$region0: #{seq_classifier_varlen.1}
  #allocation0 [shape = 'u32[]', space=smem, size = 0x4, offset = 0x4, fixed_abs, tag = 'smem constant byte address 0x4 - core index']
  #allocation1 [shape = 'u32[144,128]{1,0:T(1,128)}', space=vmem, size = 0x12000, scoped, tag = 'internal scratch']
  #allocation2 [shape = 'f32[64,128]{1,0:T(8,128)}', space=vmem, size = 0x8000, scoped, tag = 'scratch operand']
  %s0 = inlined_call_operand.vmem [shape: f32[64,16], index: 0, kind: input, shape index: {}]
  %s1 = inlined_call_operand.vmem [shape: f32[64,64], index: 1, kind: input, shape index: {}]
  %s2 = inlined_call_operand.vmem [shape: f32[64,64], index: 2, kind: input, shape index: {}]
  %s3 = inlined_call_operand.vmem [shape: f32[288,256], index: 3, kind: input, shape index: {}]
  %s4 = inlined_call_operand.vmem [shape: f32[144,64], index: 4, kind: input, shape index: {}]
  %s5 = inlined_call_operand.vmem [shape: f32[8,8], index: 5, kind: output, shape index: {}]
  %s6 = sld [smem:[#allocation0]]
  $region30: #{seq_classifier_varlen.1} parent=0
    _
  %s8 = ssub.s32 1, %s6
  %s9 = scalar_select 0, %s8, %s6
  // Predicated region
  $region2: #{seq_classifier_varlen.1} parent=0 // pred_check
    _
  $region3: #{seq_classifier_varlen.1} parent=0 // pred_check_branch
    %11 = sbr.rel (0) target = $region5
  $region4: #{seq_classifier_varlen.1} parent=0 // pred_region
    _
  $region5: #{seq_classifier_varlen.1} parent=0 // pred_fallthru
    _
  // Predicated region
  $region6: #{seq_classifier_varlen.1} parent=0 // pred_check
    _
  $region7: #{seq_classifier_varlen.1} parent=0 // pred_check_branch
    %13 = sbr.rel (0) target = $region9
  $region8: #{seq_classifier_varlen.1} parent=0 // pred_region
    _
  $region9: #{seq_classifier_varlen.1} parent=0 // pred_fallthru
    _
  // Predicated region
  $region10: #{seq_classifier_varlen.1} parent=0 // pred_check
    _
  $region11: #{seq_classifier_varlen.1} parent=0 // pred_check_branch
    %15 = sbr.rel (0) target = $region13
  $region12: #{seq_classifier_varlen.1} parent=0 // pred_region
    _
  $region13: #{seq_classifier_varlen.1} parent=0 // pred_fallthru
    _
  // Predicated region
  $region14: #{seq_classifier_varlen.1} parent=0 // pred_check
    _
  $region15: #{seq_classifier_varlen.1} parent=0 // pred_check_branch
    %17 = sbr.rel (0) target = $region17
  $region16: #{seq_classifier_varlen.1} parent=0 // pred_region
    _
  $region17: #{seq_classifier_varlen.1} parent=0 // pred_fallthru
    _
  // Predicated region
  $region18: #{seq_classifier_varlen.1} parent=0 // pred_check
    _
  $region19: #{seq_classifier_varlen.1} parent=0 // pred_check_branch
    %19 = sbr.rel (0) target = $region21
  $region20: #{seq_classifier_varlen.1} parent=0 // pred_region
    _
  $region21: #{seq_classifier_varlen.1} parent=0 // pred_fallthru
    _
  %v20 = vld [vmem:[%s1] sm:$0xff]
  %v21 = vld [vmem:[%s1 + $0x8] sm:$0xff]
  %v22 = vld [vmem:[%s1 + $0x10] sm:$0xff]
  %v23 = vld [vmem:[%s1 + $0x18] sm:$0xff]
  %v24 = vld [vmem:[%s1 + $0x20] sm:$0xff]
  %v25 = vld [vmem:[%s1 + $0x28] sm:$0xff]
  %v26 = vld [vmem:[%s1 + $0x30] sm:$0xff]
  %v27 = vld [vmem:[%s1 + $0x38] sm:$0xff]
  %v28 = vsub.f32 1.0, %v20
  %v29 = vsub.f32 1.0, %v21
  %v30 = vsub.f32 1.0, %v22
  %v31 = vsub.f32 1.0, %v23
  %v32 = vsub.f32 1.0, %v24
  %v33 = vsub.f32 1.0, %v25
  %v34 = vsub.f32 1.0, %v26
  %v35 = vld [vmem:[%s2] sm:$0xff]
  %v36 = vld [vmem:[%s2 + $0x8] sm:$0xff]
  %v37 = vld [vmem:[%s2 + $0x10] sm:$0xff]
  %v38 = vld [vmem:[%s2 + $0x18] sm:$0xff]
  %v39 = vld [vmem:[%s2 + $0x20] sm:$0xff]
  %v40 = vld [vmem:[%s2 + $0x28] sm:$0xff]
  %v41 = vld [vmem:[%s2 + $0x30] sm:$0xff]
  %v42 = vld [vmem:[%s2 + $0x38] sm:$0xff]
  %v43 = vld [vmem:[%s0] sm:$0xff]
  %v44 = vld [vmem:[%s0 + $0x8] sm:$0xff]
  %v45 = vld [vmem:[%s0 + $0x10] sm:$0xff]
  %v46 = vld [vmem:[%s0 + $0x18] sm:$0xff]
  %v47 = vld [vmem:[%s0 + $0x20] sm:$0xff]
  %v48 = vld [vmem:[%s0 + $0x28] sm:$0xff]
  %v49 = vld [vmem:[%s0 + $0x30] sm:$0xff]
  %v50 = vld [vmem:[%s0 + $0x38] sm:$0xff]
  %v51 = vld [vmem:[%s3] sm:$0xff]
  %v52 = vld [vmem:[%s3 + $0x8] sm:$0xff]
  %v53 = vld [vmem:[%s3 + $0x10] sm:$0xff]
  %v54 = vld [vmem:[%s3 + $0x18] sm:$0xff]
  %s55 = scalar_lea.vmem %s3, 544
  %v56 = vld [vmem:[%s55] ss:$8 sm:$0x3]
  %v58 = vlaneseq
  %v59 = vshrl.u32 %v58, 7
  %v60 = vsub.s32 0, %v59
  %v61 = vrot.slane %v56, %v60
  %v62 = vlaneseq
  %v63 = vshrl.u32 %v62, 7
  %v64 = vsub.s32 1, %v63
  %v65 = vrot.slane %v56, %v64
  %vm68 = vcmask 130048
  %v70 = vsel %vm68, %v43, 0
  %v73 = vsel %vm68, %v44, 0
  %v76 = vsel %vm68, %v45, 0
  %v79 = vsel %vm68, %v46, 0
  %v82 = vsel %vm68, %v47, 0
  %v85 = vsel %vm68, %v48, 0
  %v88 = vsel %vm68, %v49, 0
  %v91 = vsel %vm68, %v50, 0
  %93 = vmatprep.subr.mxu0 %v52
  %94 = vmatpush1.msra.mxu0 %v51
  %95 = vmatprep.subr.mxu0 %v54
  %96 = vmatpush1.msra.mxu0 %v53
  %97 = vmatprep.subr.mxu0 0.0
  %98 = vmatpush1.msra.mxu0 0.0
  %99 = vmatprep.subr.mxu0 0.0
  %100 = vmatpush1.msra.mxu0 0.0
  %101 = vmatprep.subr.mxu0 0.0
  %102 = vmatpush1.msra.mxu0 0.0
  %103 = vmatprep.subr.mxu0 0.0
  %104 = vmatpush1.msra.mxu0 0.0
  %105 = vmatprep.subr.mxu0 0.0
  %106 = vmatpush1.msra.mxu0 0.0
  %107 = vmatprep.subr.mxu0 0.0
  %108 = vmatpush1.msra.mxu0 0.0
  %109 = vmatprep.subr.mxu0 0.0
  %110 = vmatpush1.msra.mxu0 0.0
  %111 = vmatprep.subr.mxu0 0.0
  %112 = vmatpush1.msra.mxu0 0.0
  %113 = vmatprep.subr.mxu0 0.0
  %114 = vmatpush1.msra.mxu0 0.0
  %115 = vmatprep.subr.mxu0 0.0
  %116 = vmatpush1.msra.mxu0 0.0
  %117 = vmatprep.subr.mxu0 0.0
  %118 = vmatpush1.msra.mxu0 0.0
  %119 = vmatprep.subr.mxu0 0.0
  %120 = vmatpush1.msra.mxu0 0.0
  %121 = vmatprep.subr.mxu0 0.0
  %122 = vmatpush1.msra.mxu0 0.0
  %123 = vmatprep.subr.mxu0 0.0
  %124 = vmatpush1.msra.mxu0 0.0
  %125 = vmatprep.subr.mxu0 0.0
  %126 = vmatpush1.msra.mxu0 0.0
  %127 = vmatprep.subr.mxu0 0.0
  %128 = vmatpush1.msra.mxu0 0.0
  %129 = vmatprep.subr.mxu0 0.0
  %130 = vmatpush1.msra.mxu0 0.0
  %131 = vmatprep.subr.mxu0 0.0
  %132 = vmatpush1.msra.mxu0 0.0
  %133 = vmatprep.subr.mxu0 0.0
  %134 = vmatpush1.msra.mxu0 0.0
  %135 = vmatprep.subr.mxu0 0.0
  %136 = vmatpush1.msra.mxu0 0.0
  %137 = vmatprep.subr.mxu0 0.0
  %138 = vmatpush1.msra.mxu0 0.0
  %139 = vmatprep.subr.mxu0 0.0
  %140 = vmatpush1.msra.mxu0 0.0
  %141 = vmatprep.subr.mxu0 0.0
  %142 = vmatpush1.msra.mxu0 0.0
  %143 = vmatprep.subr.mxu0 0.0
  %144 = vmatpush1.msra.mxu0 0.0
  %145 = vmatprep.subr.mxu0 0.0
  %146 = vmatpush1.msra.mxu0 0.0
  %147 = vmatprep.subr.mxu0 0.0
  %148 = vmatpush1.msra.mxu0 0.0
  %149 = vmatprep.subr.mxu0 0.0
  %150 = vmatpush1.msra.mxu0 0.0
  %151 = vmatprep.subr.mxu0 0.0
  %152 = vmatpush1.msra.mxu0 0.0
  %153 = vmatprep.subr.mxu0 0.0
  %154 = vmatpush1.msra.mxu0 0.0
  %155 = vmatprep.subr.mxu0 0.0
  %156 = vmatpush1.msra.mxu0 0.0
  %157 = vmatprep.mubr.f32.mxu0 0.0
  %158 = vmatmul.mubr.f32.gmra.mrb[0].mxu0 %v70
  %v159 = vpop.f32.mrb[0].mxu0
  %v160 = vadd.f32 %v61, %v159
  %v161 = vpop.f32.mrb[0].mxu0
  %v162 = vadd.f32 %v65, %v161
  %163 = vmatprep.mubr.f32.mxu0 0.0
  %164 = vmatmul.mubr.f32.gmra.mrb[0].mxu0 %v73
  %v165 = vpop.f32.mrb[0].mxu0
  %v166 = vadd.f32 %v61, %v165
  %v167 = vpop.f32.mrb[0].mxu0
  %v168 = vadd.f32 %v65, %v167
  %169 = vmatprep.mubr.f32.mxu0 0.0
  %170 = vmatmul.mubr.f32.gmra.mrb[0].mxu0 %v76
  %v171 = vpop.f32.mrb[0].mxu0
  %v172 = vadd.f32 %v61, %v171
  %v173 = vpop.f32.mrb[0].mxu0
  %v174 = vadd.f32 %v65, %v173
  %175 = vmatprep.mubr.f32.mxu0 0.0
  %176 = vmatmul.mubr.f32.gmra.mrb[0].mxu0 %v79
  %v177 = vpop.f32.mrb[0].mxu0
  %v178 = vadd.f32 %v61, %v177
  %v179 = vpop.f32.mrb[0].mxu0
  %v180 = vadd.f32 %v65, %v179
  %181 = vmatprep.mubr.f32.mxu0 0.0
  %182 = vmatmul.mubr.f32.gmra.mrb[0].mxu0 %v82
  %v183 = vpop.f32.mrb[0].mxu0
  %v184 = vadd.f32 %v61, %v183
  %v185 = vpop.f32.mrb[0].mxu0
  %v186 = vadd.f32 %v65, %v185
  %187 = vmatprep.mubr.f32.mxu0 0.0
  %188 = vmatmul.mubr.f32.gmra.mrb[0].mxu0 %v85
  %v189 = vpop.f32.mrb[0].mxu0
  %v190 = vadd.f32 %v61, %v189
  %v191 = vpop.f32.mrb[0].mxu0
  %v192 = vadd.f32 %v65, %v191
  %193 = vmatprep.mubr.f32.mxu0 0.0
  %194 = vmatmul.mubr.f32.gmra.mrb[0].mxu0 %v88
  %v195 = vpop.f32.mrb[0].mxu0
  %v196 = vadd.f32 %v61, %v195
  %v197 = vpop.f32.mrb[0].mxu0
  %v198 = vadd.f32 %v65, %v197
  %199 = vmatprep.mubr.f32.mxu0 0.0
  %200 = vmatmul.mubr.f32.gmra.mrb[0].mxu0 %v91
  %v201 = vpop.f32.mrb[0].mxu0
  %v202 = vadd.f32 %v61, %v201
  %v203 = vpop.f32.mrb[0].mxu0
  %v204 = vadd.f32 %v65, %v203
  %205 = vdwg.mxu0
  %v206 = vld [vmem:[%s3 + $0x20] sm:$0xff]
  %v207 = vld [vmem:[%s3 + $0x28] sm:$0xff]
  %v208 = vld [vmem:[%s3 + $0x30] sm:$0xff]
  %v209 = vld [vmem:[%s3 + $0x38] sm:$0xff]
  %v210 = vld [vmem:[%s3 + $0x40] sm:$0xff]
  %v211 = vld [vmem:[%s3 + $0x48] sm:$0xff]
  %v212 = vld [vmem:[%s3 + $0x50] sm:$0xff]
  %v213 = vld [vmem:[%s3 + $0x58] sm:$0xff]
  %v214 = vld [vmem:[%s3 + $0x60] sm:$0xff]
  %v215 = vld [vmem:[%s3 + $0x68] sm:$0xff]
  %v216 = vld [vmem:[%s3 + $0x70] sm:$0xff]
  %v217 = vld [vmem:[%s3 + $0x78] sm:$0xff]
  %v218 = vld [vmem:[%s3 + $0x80] sm:$0xff]
  %v219 = vld [vmem:[%s3 + $0x88] sm:$0xff]
  %v220 = vld [vmem:[%s3 + $0x90] sm:$0xff]
  %v221 = vld [vmem:[%s3 + $0x98] sm:$0xff]
  %vm222 = vcmask 523264
  %v224 = vsel %vm222, 0.0, 0
  %226 = vmatprep.subr.mxu0 %v207
  %227 = vmatpush1.msra.mxu0 %v206
  %228 = vmatprep.subr.mxu0 %v209
  %229 = vmatpush1.msra.mxu0 %v208
  %230 = vmatprep.subr.mxu0 %v211
  %231 = vmatpush1.msra.mxu0 %v210
  %232 = vmatprep.subr.mxu0 %v213
  %233 = vmatpush1.msra.mxu0 %v212
  %234 = vmatprep.subr.mxu0 %v215
  %235 = vmatpush1.msra.mxu0 %v214
  %236 = vmatprep.subr.mxu0 %v217
  %237 = vmatpush1.msra.mxu0 %v216
  %238 = vmatprep.subr.mxu0 %v219
  %239 = vmatpush1.msra.mxu0 %v218
  %240 = vmatprep.subr.mxu0 %v221
  %241 = vmatpush1.msra.mxu0 %v220
  %242 = vmatprep.subr.mxu0 0.0
  %243 = vmatpush1.msra.mxu0 0.0
  %244 = vmatprep.subr.mxu0 0.0
  %245 = vmatpush1.msra.mxu0 0.0
  %246 = vmatprep.subr.mxu0 0.0
  %247 = vmatpush1.msra.mxu0 0.0
  %248 = vmatprep.subr.mxu0 0.0
  %249 = vmatpush1.msra.mxu0 0.0
  %250 = vmatprep.subr.mxu0 0.0
  %251 = vmatpush1.msra.mxu0 0.0
  %252 = vmatprep.subr.mxu0 0.0
  %253 = vmatpush1.msra.mxu0 0.0
  %254 = vmatprep.subr.mxu0 0.0
  %255 = vmatpush1.msra.mxu0 0.0
  %256 = vmatprep.subr.mxu0 0.0
  %257 = vmatpush1.msra.mxu0 0.0
  %258 = vmatprep.subr.mxu0 0.0
  %259 = vmatpush1.msra.mxu0 0.0
  %260 = vmatprep.subr.mxu0 0.0
  %261 = vmatpush1.msra.mxu0 0.0
  %262 = vmatprep.subr.mxu0 0.0
  %263 = vmatpush1.msra.mxu0 0.0
  %264 = vmatprep.subr.mxu0 0.0
  %265 = vmatpush1.msra.mxu0 0.0
  %266 = vmatprep.subr.mxu0 0.0
  %267 = vmatpush1.msra.mxu0 0.0
  %268 = vmatprep.subr.mxu0 0.0
  %269 = vmatpush1.msra.mxu0 0.0
  %270 = vmatprep.subr.mxu0 0.0
  %271 = vmatpush1.msra.mxu0 0.0
  %272 = vmatprep.subr.mxu0 0.0
  %273 = vmatpush1.msra.mxu0 0.0
  %274 = vmatprep.subr.mxu0 0.0
  %275 = vmatpush1.msra.mxu0 0.0
  %276 = vmatprep.subr.mxu0 0.0
  %277 = vmatpush1.msra.mxu0 0.0
  %278 = vmatprep.subr.mxu0 0.0
  %279 = vmatpush1.msra.mxu0 0.0
  %280 = vmatprep.subr.mxu0 0.0
  %281 = vmatpush1.msra.mxu0 0.0
  %282 = vmatprep.subr.mxu0 0.0
  %283 = vmatpush1.msra.mxu0 0.0
  %284 = vmatprep.subr.mxu0 0.0
  %285 = vmatpush1.msra.mxu0 0.0
  %286 = vmatprep.subr.mxu0 0.0
  %287 = vmatpush1.msra.mxu0 0.0
  %288 = vmatprep.subr.mxu0 0.0
  %289 = vmatpush1.msra.mxu0 0.0
  %290 = vmatprep.mubr.f32.mxu0 0.0
  %291 = vmatmul.mubr.f32.gmra.mrb[0].mxu0 %v224
  %v292 = vpop.f32.mrb[0].mxu0
  %v293 = vadd.f32 0.0, %v292
  %v294 = vpop.f32.mrb[0].mxu0
  %v295 = vadd.f32 0.0, %v294
  %296 = vdwg.mxu0
  %v297 = vadd.f32 %v160, %v293
  %v298 = vadd.f32 %v162, %v295
  %v299 = vxor.u32 %v297, 2147483648
  %v300 = vxor.u32 %v298, 2147483648
  %v301 = vmul.f32 %v299, 1.442695
  %v302 = vpow.pop %v301
  %v303 = vmul.f32 %v300, 1.442695
  %v304 = vpow.pop %v303
  %v305 = vadd.f32 %v302, 1.0
  %v306 = vadd.f32 %v304, 1.0
  %v307 = vrcp.pop %v305
  %v308 = vmul.f32 1.0, %v307
  %v309 = vrcp.pop %v306
  %v310 = vmul.f32 1.0, %v309
  %v311 = vtanh.pop %v298
  %v312 = vmul.f32 %v308, 0.0
  %v313 = vmul.f32 %v308, %v311
  %315 = vrot.lane.b32.xlu0 %v313, 64
  %v316 = vpop.permute.xlu0 %315
  %v318 = vadd.f32 %v312, %v316
  %v319 = vtanh.pop %v318
  %v320 = vmul.f32 %v310, %v319
  %322 = vrot.lane.b32.xlu0 %v320, 64
  %v323 = vpop.permute.xlu0 %322
  %v325 = vmul.f32 %v20, %v323
  %v326 = vmul.f32 %v28, 0.0
  %v327 = vadd.f32 %v325, %v326
  %329 = vrot.lane.b32.xlu0 %v318, 64
  %v330 = vpop.permute.xlu0 %329
  %v332 = vmul.f32 %v20, %v330
  %v333 = vadd.f32 %v332, %v326
  %334 = vst.msk [vmem:[#allocation2] sm:$0xff] %vm222, %v325
  %336 = vrot.lane.b32.xlu0 %v325, 64
  %v337 = vpop.permute.xlu0 %336
  %vm339 = vcmask 1048064
  %340 = vst.msk [vmem:[#allocation2 + $0x38] sm:$0xff] %vm339, %v337
  %v342 = vsel %vm222, %v327, 0
  %344 = vmatprep.subr.mxu0 %v207
  %345 = vmatpush1.msra.mxu0 %v206
  %346 = vmatprep.subr.mxu0 %v209
  %347 = vmatpush1.msra.mxu0 %v208
  %348 = vmatprep.subr.mxu0 %v211
  %349 = vmatpush1.msra.mxu0 %v210
  %350 = vmatprep.subr.mxu0 %v213
  %351 = vmatpush1.msra.mxu0 %v212
  %352 = vmatprep.subr.mxu0 %v215
  %353 = vmatpush1.msra.mxu0 %v214
  %354 = vmatprep.subr.mxu0 %v217
  %355 = vmatpush1.msra.mxu0 %v216
  %356 = vmatprep.subr.mxu0 %v219
  %357 = vmatpush1.msra.mxu0 %v218
  %358 = vmatprep.subr.mxu0 %v221
  %359 = vmatpush1.msra.mxu0 %v220
  %360 = vmatprep.subr.mxu0 0.0
  %361 = vmatpush1.msra.mxu0 0.0
  %362 = vmatprep.subr.mxu0 0.0
  %363 = vmatpush1.msra.mxu0 0.0
  %364 = vmatprep.subr.mxu0 0.0
  %365 = vmatpush1.msra.mxu0 0.0
  %366 = vmatprep.subr.mxu0 0.0
  %367 = vmatpush1.msra.mxu0 0.0
  %368 = vmatprep.subr.mxu0 0.0
  %369 = vmatpush1.msra.mxu0 0.0
  %370 = vmatprep.subr.mxu0 0.0
  %371 = vmatpush1.msra.mxu0 0.0
  %372 = vmatprep.subr.mxu0 0.0
  %373 = vmatpush1.msra.mxu0 0.0
  %374 = vmatprep.subr.mxu0 0.0
  %375 = vmatpush1.msra.mxu0 0.0
  %376 = vmatprep.subr.mxu0 0.0
  %377 = vmatpush1.msra.mxu0 0.0
  %378 = vmatprep.subr.mxu0 0.0
  %379 = vmatpush1.msra.mxu0 0.0
  %380 = vmatprep.subr.mxu0 0.0
  %381 = vmatpush1.msra.mxu0 0.0
  %382 = vmatprep.subr.mxu0 0.0
  %383 = vmatpush1.msra.mxu0 0.0
  %384 = vmatprep.subr.mxu0 0.0
  %385 = vmatpush1.msra.mxu0 0.0
  %386 = vmatprep.subr.mxu0 0.0
  %387 = vmatpush1.msra.mxu0 0.0
  %388 = vmatprep.subr.mxu0 0.0
  %389 = vmatpush1.msra.mxu0 0.0
  %390 = vmatprep.subr.mxu0 0.0
  %391 = vmatpush1.msra.mxu0 0.0
  %392 = vmatprep.subr.mxu0 0.0
  %393 = vmatpush1.msra.mxu0 0.0
  %394 = vmatprep.subr.mxu0 0.0
  %395 = vmatpush1.msra.mxu0 0.0
  %396 = vmatprep.subr.mxu0 0.0
  %397 = vmatpush1.msra.mxu0 0.0
  %398 = vmatprep.subr.mxu0 0.0
  %399 = vmatpush1.msra.mxu0 0.0
  %400 = vmatprep.subr.mxu0 0.0
  %401 = vmatpush1.msra.mxu0 0.0
  %402 = vmatprep.subr.mxu0 0.0
  %403 = vmatpush1.msra.mxu0 0.0
  %404 = vmatprep.subr.mxu0 0.0
  %405 = vmatpush1.msra.mxu0 0.0
  %406 = vmatprep.subr.mxu0 0.0
  %407 = vmatpush1.msra.mxu0 0.0
  %408 = vmatprep.mubr.f32.mxu0 0.0
  %409 = vmatmul.mubr.f32.gmra.mrb[0].mxu0 %v342
  %v410 = vpop.f32.mrb[0].mxu0
  %v411 = vadd.f32 0.0, %v410
  %v412 = vpop.f32.mrb[0].mxu0
  %v413 = vadd.f32 0.0, %v412
  %414 = vdwg.mxu0
  %v415 = vadd.f32 %v166, %v411
  %v416 = vadd.f32 %v168, %v413
  %v417 = vxor.u32 %v415, 2147483648
  %v418 = vxor.u32 %v416, 2147483648
  %v419 = vmul.f32 %v417, 1.442695
  %v420 = vpow.pop %v419
  %v421 = vmul.f32 %v418, 1.442695
  %v422 = vpow.pop %v421
  %v423 = vadd.f32 %v420, 1.0
  %v424 = vadd.f32 %v422, 1.0
  %v425 = vrcp.pop %v423
  %v426 = vmul.f32 1.0, %v425
  %v427 = vrcp.pop %v424
  %v428 = vmul.f32 1.0, %v427
  %v429 = vtanh.pop %v416
  %431 = vrot.lane.b32.xlu0 %v333, 64
  %v432 = vpop.permute.xlu0 %431
  %v434 = vmul.f32 %v426, %v432
  %v435 = vmul.f32 %v426, %v429
  %437 = vrot.lane.b32.xlu0 %v435, 64
  %v438 = vpop.permute.xlu0 %437
  %v440 = vadd.f32 %v434, %v438
  %v441 = vtanh.pop %v440
  %v442 = vmul.f32 %v428, %v441
  %444 = vrot.lane.b32.xlu0 %v442, 64
  %v445 = vpop.permute.xlu0 %444
  %v447 = vmul.f32 %v21, %v445
  %v448 = vmul.f32 %v29, %v327
  %v449 = vadd.f32 %v447, %v448
  %451 = vrot.lane.b32.xlu0 %v440, 64
  %v452 = vpop.permute.xlu0 %451
  %v454 = vmul.f32 %v21, %v452
  %v455 = vmul.f32 %v29, %v333
  %v456 = vadd.f32 %v454, %v455
  %457 = vst.msk [vmem:[#allocation2 + $0x8] sm:$0xff] %vm222, %v447
  %459 = vrot.lane.b32.xlu0 %v447, 64
  %v460 = vpop.permute.xlu0 %459
  %462 = vst.msk [vmem:[#allocation2 + $0x30] sm:$0xff] %vm339, %v460
  %v464 = vsel %vm222, %v449, 0
  %466 = vmatprep.subr.mxu0 %v207
  %467 = vmatpush1.msra.mxu0 %v206
  %468 = vmatprep.subr.mxu0 %v209
  %469 = vmatpush1.msra.mxu0 %v208
  %470 = vmatprep.subr.mxu0 %v211
  %471 = vmatpush1.msra.mxu0 %v210
  %472 = vmatprep.subr.mxu0 %v213
  %473 = vmatpush1.msra.mxu0 %v212
  %474 = vmatprep.subr.mxu0 %v215
  %475 = vmatpush1.msra.mxu0 %v214
  %476 = vmatprep.subr.mxu0 %v217
  %477 = vmatpush1.msra.mxu0 %v216
  %478 = vmatprep.subr.mxu0 %v219
  %479 = vmatpush1.msra.mxu0 %v218
  %480 = vmatprep.subr.mxu0 %v221
  %481 = vmatpush1.msra.mxu0 %v220
  %482 = vmatprep.subr.mxu0 0.0
  %483 = vmatpush1.msra.mxu0 0.0
  %484 = vmatprep.subr.mxu0 0.0
  %485 = vmatpush1.msra.mxu0 0.0
  %486 = vmatprep.subr.mxu0 0.0
  %487 = vmatpush1.msra.mxu0 0.0
  %488 = vmatprep.subr.mxu0 0.0
  %489 = vmatpush1.msra.mxu0 0.0
  %490 = vmatprep.subr.mxu0 0.0
  %491 = vmatpush1.msra.mxu0 0.0
  %492 = vmatprep.subr.mxu0 0.0
  %493 = vmatpush1.msra.mxu0 0.0
  %494 = vmatprep.subr.mxu0 0.0
  %495 = vmatpush1.msra.mxu0 0.0
  %496 = vmatprep.subr.mxu0 0.0
  %497 = vmatpush1.msra.mxu0 0.0
  %498 = vmatprep.subr.mxu0 0.0
  %499 = vmatpush1.msra.mxu0 0.0
  %500 = vmatprep.subr.mxu0 0.0
  %501 = vmatpush1.msra.mxu0 0.0
  %502 = vmatprep.subr.mxu0 0.0
  %503 = vmatpush1.msra.mxu0 0.0
  %504 = vmatprep.subr.mxu0 0.0
  %505 = vmatpush1.msra.mxu0 0.0
  %506 = vmatprep.subr.mxu0 0.0
  %507 = vmatpush1.msra.mxu0 0.0
  %508 = vmatprep.subr.mxu0 0.0
  %509 = vmatpush1.msra.mxu0 0.0
  %510 = vmatprep.subr.mxu0 0.0
  %511 = vmatpush1.msra.mxu0 0.0
  %512 = vmatprep.subr.mxu0 0.0
  %513 = vmatpush1.msra.mxu0 0.0
  %514 = vmatprep.subr.mxu0 0.0
  %515 = vmatpush1.msra.mxu0 0.0
  %516 = vmatprep.subr.mxu0 0.0
  %517 = vmatpush1.msra.mxu0 0.0
  %518 = vmatprep.subr.mxu0 0.0
  %519 = vmatpush1.msra.mxu0 0.0
  %520 = vmatprep.subr.mxu0 0.0
  %521 = vmatpush1.msra.mxu0 0.0
  %522 = vmatprep.subr.mxu0 0.0
  %523 = vmatpush1.msra.mxu0 0.0
  %524 = vmatprep.subr.mxu0 0.0
  %525 = vmatpush1.msra.mxu0 0.0
  %526 = vmatprep.subr.mxu0 0.0
  %527 = vmatpush1.msra.mxu0 0.0
  %528 = vmatprep.subr.mxu0 0.0
  %529 = vmatpush1.msra.mxu0 0.0
  %530 = vmatprep.mubr.f32.mxu0 0.0
  %531 = vmatmul.mubr.f32.gmra.mrb[0].mxu0 %v464
  %v532 = vpop.f32.mrb[0].mxu0
  %v533 = vadd.f32 0.0, %v532
  %v534 = vpop.f32.mrb[0].mxu0
  %v535 = vadd.f32 0.0, %v534
  %536 = vdwg.mxu0
  %v537 = vadd.f32 %v172, %v533
  %v538 = vadd.f32 %v174, %v535
  %v539 = vxor.u32 %v537, 2147483648
  %v540 = vxor.u32 %v538, 2147483648
  %v541 = vmul.f32 %v539, 1.442695
  %v542 = vpow.pop %v541
  %v543 = vmul.f32 %v540, 1.442695
  %v544 = vpow.pop %v543
  %v545 = vadd.f32 %v542, 1.0
  %v546 = vadd.f32 %v544, 1.0
  %v547 = vrcp.pop %v545
  %v548 = vmul.f32 1.0, %v547
  %v549 = vrcp.pop %v546
  %v550 = vmul.f32 1.0, %v549
  %v551 = vtanh.pop %v538
  %553 = vrot.lane.b32.xlu0 %v456, 64
  %v554 = vpop.permute.xlu0 %553
  %v556 = vmul.f32 %v548, %v554
  %v557 = vmul.f32 %v548, %v551
  %559 = vrot.lane.b32.xlu0 %v557, 64
  %v560 = vpop.permute.xlu0 %559
  %v562 = vadd.f32 %v556, %v560
  %v563 = vtanh.pop %v562
  %v564 = vmul.f32 %v550, %v563
  %566 = vrot.lane.b32.xlu0 %v564, 64
  %v567 = vpop.permute.xlu0 %566
  %v569 = vmul.f32 %v22, %v567
  %v570 = vmul.f32 %v30, %v449
  %v571 = vadd.f32 %v569, %v570
  %573 = vrot.lane.b32.xlu0 %v562, 64
  %v574 = vpop.permute.xlu0 %573
  %v576 = vmul.f32 %v22, %v574
  %v577 = vmul.f32 %v30, %v456
  %v578 = vadd.f32 %v576, %v577
  %579 = vst.msk [vmem:[#allocation2 + $0x10] sm:$0xff] %vm222, %v569
  %581 = vrot.lane.b32.xlu0 %v569, 64
  %v582 = vpop.permute.xlu0 %581
  %584 = vst.msk [vmem:[#allocation2 + $0x28] sm:$0xff] %vm339, %v582
  %v586 = vsel %vm222, %v571, 0
  %588 = vmatprep.subr.mxu0 %v207
  %589 = vmatpush1.msra.mxu0 %v206
  %590 = vmatprep.subr.mxu0 %v209
  %591 = vmatpush1.msra.mxu0 %v208
  %592 = vmatprep.subr.mxu0 %v211
  %593 = vmatpush1.msra.mxu0 %v210
  %594 = vmatprep.subr.mxu0 %v213
  %595 = vmatpush1.msra.mxu0 %v212
  %596 = vmatprep.subr.mxu0 %v215
  %597 = vmatpush1.msra.mxu0 %v214
  %598 = vmatprep.subr.mxu0 %v217
  %599 = vmatpush1.msra.mxu0 %v216
  %600 = vmatprep.subr.mxu0 %v219
  %601 = vmatpush1.msra.mxu0 %v218
  %602 = vmatprep.subr.mxu0 %v221
  %603 = vmatpush1.msra.mxu0 %v220
  %604 = vmatprep.subr.mxu0 0.0
  %605 = vmatpush1.msra.mxu0 0.0
  %606 = vmatprep.subr.mxu0 0.0
  %607 = vmatpush1.msra.mxu0 0.0
  %608 = vmatprep.subr.mxu0 0.0
  %609 = vmatpush1.msra.mxu0 0.0
  %610 = vmatprep.subr.mxu0 0.0
  %611 = vmatpush1.msra.mxu0 0.0
  %612 = vmatprep.subr.mxu0 0.0
  %613 = vmatpush1.msra.mxu0 0.0
  %614 = vmatprep.subr.mxu0 0.0
  %615 = vmatpush1.msra.mxu0 0.0
  %616 = vmatprep.subr.mxu0 0.0
  %617 = vmatpush1.msra.mxu0 0.0
  %618 = vmatprep.subr.mxu0 0.0
  %619 = vmatpush1.msra.mxu0 0.0
  %620 = vmatprep.subr.mxu0 0.0
  %621 = vmatpush1.msra.mxu0 0.0
  %622 = vmatprep.subr.mxu0 0.0
  %623 = vmatpush1.msra.mxu0 0.0
  %624 = vmatprep.subr.mxu0 0.0
  %625 = vmatpush1.msra.mxu0 0.0
  %626 = vmatprep.subr.mxu0 0.0
  %627 = vmatpush1.msra.mxu0 0.0
  %628 = vmatprep.subr.mxu0 0.0
  %629 = vmatpush1.msra.mxu0 0.0
  %630 = vmatprep.subr.mxu0 0.0
  %631 = vmatpush1.msra.mxu0 0.0
  %632 = vmatprep.subr.mxu0 0.0
  %633 = vmatpush1.msra.mxu0 0.0
  %634 = vmatprep.subr.mxu0 0.0
  %635 = vmatpush1.msra.mxu0 0.0
  %636 = vmatprep.subr.mxu0 0.0
  %637 = vmatpush1.msra.mxu0 0.0
  %638 = vmatprep.subr.mxu0 0.0
  %639 = vmatpush1.msra.mxu0 0.0
  %640 = vmatprep.subr.mxu0 0.0
  %641 = vmatpush1.msra.mxu0 0.0
  %642 = vmatprep.subr.mxu0 0.0
  %643 = vmatpush1.msra.mxu0 0.0
  %644 = vmatprep.subr.mxu0 0.0
  %645 = vmatpush1.msra.mxu0 0.0
  %646 = vmatprep.subr.mxu0 0.0
  %647 = vmatpush1.msra.mxu0 0.0
  %648 = vmatprep.subr.mxu0 0.0
  %649 = vmatpush1.msra.mxu0 0.0
  %650 = vmatprep.subr.mxu0 0.0
  %651 = vmatpush1.msra.mxu0 0.0
  %652 = vmatprep.mubr.f32.mxu0 0.0
  %653 = vmatmul.mubr.f32.gmra.mrb[0].mxu0 %v586
  %v654 = vpop.f32.mrb[0].mxu0
  %v655 = vadd.f32 0.0, %v654
  %v656 = vpop.f32.mrb[0].mxu0
  %v657 = vadd.f32 0.0, %v656
  %658 = vdwg.mxu0
  %v659 = vadd.f32 %v178, %v655
  %v660 = vadd.f32 %v180, %v657
  %v661 = vxor.u32 %v659, 2147483648
  %v662 = vxor.u32 %v660, 2147483648
  %v663 = vmul.f32 %v661, 1.442695
  %v664 = vpow.pop %v663
  %v665 = vmul.f32 %v662, 1.442695
  %v666 = vpow.pop %v665
  %v667 = vadd.f32 %v664, 1.0
  %v668 = vadd.f32 %v666, 1.0
  %v669 = vrcp.pop %v667
  %v670 = vmul.f32 1.0, %v669
  %v671 = vrcp.pop %v668
  %v672 = vmul.f32 1.0, %v671
  %v673 = vtanh.pop %v660
  %675 = vrot.lane.b32.xlu0 %v578, 64
  %v676 = vpop.permute.xlu0 %675
  %v678 = vmul.f32 %v670, %v676
  %v679 = vmul.f32 %v670, %v673
  %681 = vrot.lane.b32.xlu0 %v679, 64
  %v682 = vpop.permute.xlu0 %681
  %v684 = vadd.f32 %v678, %v682
  %v685 = vtanh.pop %v684
  %v686 = vmul.f32 %v672, %v685
  %688 = vrot.lane.b32.xlu0 %v686, 64
  %v689 = vpop.permute.xlu0 %688
  %v691 = vmul.f32 %v23, %v689
  %v692 = vmul.f32 %v31, %v571
  %v693 = vadd.f32 %v691, %v692
  %695 = vrot.lane.b32.xlu0 %v684, 64
  %v696 = vpop.permute.xlu0 %695
  %v698 = vmul.f32 %v23, %v696
  %v699 = vmul.f32 %v31, %v578
  %v700 = vadd.f32 %v698, %v699
  %701 = vst.msk [vmem:[#allocation2 + $0x18] sm:$0xff] %vm222, %v691
  %703 = vrot.lane.b32.xlu0 %v691, 64
  %v704 = vpop.permute.xlu0 %703
  %706 = vst.msk [vmem:[#allocation2 + $0x20] sm:$0xff] %vm339, %v704
  %v708 = vsel %vm222, %v693, 0
  %710 = vmatprep.subr.mxu0 %v207
  %711 = vmatpush1.msra.mxu0 %v206
  %712 = vmatprep.subr.mxu0 %v209
  %713 = vmatpush1.msra.mxu0 %v208
  %714 = vmatprep.subr.mxu0 %v211
  %715 = vmatpush1.msra.mxu0 %v210
  %716 = vmatprep.subr.mxu0 %v213
  %717 = vmatpush1.msra.mxu0 %v212
  %718 = vmatprep.subr.mxu0 %v215
  %719 = vmatpush1.msra.mxu0 %v214
  %720 = vmatprep.subr.mxu0 %v217
  %721 = vmatpush1.msra.mxu0 %v216
  %722 = vmatprep.subr.mxu0 %v219
  %723 = vmatpush1.msra.mxu0 %v218
  %724 = vmatprep.subr.mxu0 %v221
  %725 = vmatpush1.msra.mxu0 %v220
  %726 = vmatprep.subr.mxu0 0.0
  %727 = vmatpush1.msra.mxu0 0.0
  %728 = vmatprep.subr.mxu0 0.0
  %729 = vmatpush1.msra.mxu0 0.0
  %730 = vmatprep.subr.mxu0 0.0
  %731 = vmatpush1.msra.mxu0 0.0
  %732 = vmatprep.subr.mxu0 0.0
  %733 = vmatpush1.msra.mxu0 0.0
  %734 = vmatprep.subr.mxu0 0.0
  %735 = vmatpush1.msra.mxu0 0.0
  %736 = vmatprep.subr.mxu0 0.0
  %737 = vmatpush1.msra.mxu0 0.0
  %738 = vmatprep.subr.mxu0 0.0
  %739 = vmatpush1.msra.mxu0 0.0
  %740 = vmatprep.subr.mxu0 0.0
  %741 = vmatpush1.msra.mxu0 0.0
  %742 = vmatprep.subr.mxu0 0.0
  %743 = vmatpush1.msra.mxu0 0.0
  %744 = vmatprep.subr.mxu0 0.0
  %745 = vmatpush1.msra.mxu0 0.0
  %746 = vmatprep.subr.mxu0 0.0
  %747 = vmatpush1.msra.mxu0 0.0
  %748 = vmatprep.subr.mxu0 0.0
  %749 = vmatpush1.msra.mxu0 0.0
  %750 = vmatprep.subr.mxu0 0.0
  %751 = vmatpush1.msra.mxu0 0.0
  %752 = vmatprep.subr.mxu0 0.0
  %753 = vmatpush1.msra.mxu0 0.0
  %754 = vmatprep.subr.mxu0 0.0
  %755 = vmatpush1.msra.mxu0 0.0
  %756 = vmatprep.subr.mxu0 0.0
  %757 = vmatpush1.msra.mxu0 0.0
  %758 = vmatprep.subr.mxu0 0.0
  %759 = vmatpush1.msra.mxu0 0.0
  %760 = vmatprep.subr.mxu0 0.0
  %761 = vmatpush1.msra.mxu0 0.0
  %762 = vmatprep.subr.mxu0 0.0
  %763 = vmatpush1.msra.mxu0 0.0
  %764 = vmatprep.subr.mxu0 0.0
  %765 = vmatpush1.msra.mxu0 0.0
  %766 = vmatprep.subr.mxu0 0.0
  %767 = vmatpush1.msra.mxu0 0.0
  %768 = vmatprep.subr.mxu0 0.0
  %769 = vmatpush1.msra.mxu0 0.0
  %770 = vmatprep.subr.mxu0 0.0
  %771 = vmatpush1.msra.mxu0 0.0
  %772 = vmatprep.subr.mxu0 0.0
  %773 = vmatpush1.msra.mxu0 0.0
  %774 = vmatprep.mubr.f32.mxu0 0.0
  %775 = vmatmul.mubr.f32.gmra.mrb[0].mxu0 %v708
  %v776 = vpop.f32.mrb[0].mxu0
  %v777 = vadd.f32 0.0, %v776
  %v778 = vpop.f32.mrb[0].mxu0
  %v779 = vadd.f32 0.0, %v778
  %780 = vdwg.mxu0
  %v781 = vadd.f32 %v184, %v777
  %v782 = vadd.f32 %v186, %v779
  %v783 = vxor.u32 %v781, 2147483648
  %v784 = vxor.u32 %v782, 2147483648
  %v785 = vmul.f32 %v783, 1.442695
  %v786 = vpow.pop %v785
  %v787 = vmul.f32 %v784, 1.442695
  %v788 = vpow.pop %v787
  %v789 = vadd.f32 %v786, 1.0
  %v790 = vadd.f32 %v788, 1.0
  %v791 = vrcp.pop %v789
  %v792 = vmul.f32 1.0, %v791
  %v793 = vrcp.pop %v790
  %v794 = vmul.f32 1.0, %v793
  %v795 = vtanh.pop %v782
  %797 = vrot.lane.b32.xlu0 %v700, 64
  %v798 = vpop.permute.xlu0 %797
  %v800 = vmul.f32 %v792, %v798
  %v801 = vmul.f32 %v792, %v795
  %803 = vrot.lane.b32.xlu0 %v801, 64
  %v804 = vpop.permute.xlu0 %803
  %v806 = vadd.f32 %v800, %v804
  %v807 = vtanh.pop %v806
  %v808 = vmul.f32 %v794, %v807
  %810 = vrot.lane.b32.xlu0 %v808, 64
  %v811 = vpop.permute.xlu0 %810
  %v813 = vmul.f32 %v24, %v811
  %v814 = vmul.f32 %v32, %v693
  %v815 = vadd.f32 %v813, %v814
  %817 = vrot.lane.b32.xlu0 %v806, 64
  %v818 = vpop.permute.xlu0 %817
  %v820 = vmul.f32 %v24, %v818
  %v821 = vmul.f32 %v32, %v700
  %v822 = vadd.f32 %v820, %v821
  %823 = vst.msk [vmem:[#allocation2 + $0x20] sm:$0xff] %vm222, %v813
  %825 = vrot.lane.b32.xlu0 %v813, 64
  %v826 = vpop.permute.xlu0 %825
  %828 = vst.msk [vmem:[#allocation2 + $0x18] sm:$0xff] %vm339, %v826
  %v830 = vsel %vm222, %v815, 0
  %832 = vmatprep.subr.mxu0 %v207
  %833 = vmatpush1.msra.mxu0 %v206
  %834 = vmatprep.subr.mxu0 %v209
  %835 = vmatpush1.msra.mxu0 %v208
  %836 = vmatprep.subr.mxu0 %v211
  %837 = vmatpush1.msra.mxu0 %v210
  %838 = vmatprep.subr.mxu0 %v213
  %839 = vmatpush1.msra.mxu0 %v212
  %840 = vmatprep.subr.mxu0 %v215
  %841 = vmatpush1.msra.mxu0 %v214
  %842 = vmatprep.subr.mxu0 %v217
  %843 = vmatpush1.msra.mxu0 %v216
  %844 = vmatprep.subr.mxu0 %v219
  %845 = vmatpush1.msra.mxu0 %v218
  %846 = vmatprep.subr.mxu0 %v221
  %847 = vmatpush1.msra.mxu0 %v220
  %848 = vmatprep.subr.mxu0 0.0
  %849 = vmatpush1.msra.mxu0 0.0
  %850 = vmatprep.subr.mxu0 0.0
  %851 = vmatpush1.msra.mxu0 0.0
  %852 = vmatprep.subr.mxu0 0.0
  %853 = vmatpush1.msra.mxu0 0.0
  %854 = vmatprep.subr.mxu0 0.0
  %855 = vmatpush1.msra.mxu0 0.0
  %856 = vmatprep.subr.mxu0 0.0
  %857 = vmatpush1.msra.mxu0 0.0
  %858 = vmatprep.subr.mxu0 0.0
  %859 = vmatpush1.msra.mxu0 0.0
  %860 = vmatprep.subr.mxu0 0.0
  %861 = vmatpush1.msra.mxu0 0.0
  %862 = vmatprep.subr.mxu0 0.0
  %863 = vmatpush1.msra.mxu0 0.0
  %864 = vmatprep.subr.mxu0 0.0
  %865 = vmatpush1.msra.mxu0 0.0
  %866 = vmatprep.subr.mxu0 0.0
  %867 = vmatpush1.msra.mxu0 0.0
  %868 = vmatprep.subr.mxu0 0.0
  %869 = vmatpush1.msra.mxu0 0.0
  %870 = vmatprep.subr.mxu0 0.0
  %871 = vmatpush1.msra.mxu0 0.0
  %872 = vmatprep.subr.mxu0 0.0
  %873 = vmatpush1.msra.mxu0 0.0
  %874 = vmatprep.subr.mxu0 0.0
  %875 = vmatpush1.msra.mxu0 0.0
  %876 = vmatprep.subr.mxu0 0.0
  %877 = vmatpush1.msra.mxu0 0.0
  %878 = vmatprep.subr.mxu0 0.0
  %879 = vmatpush1.msra.mxu0 0.0
  %880 = vmatprep.subr.mxu0 0.0
  %881 = vmatpush1.msra.mxu0 0.0
  %882 = vmatprep.subr.mxu0 0.0
  %883 = vmatpush1.msra.mxu0 0.0
  %884 = vmatprep.subr.mxu0 0.0
  %885 = vmatpush1.msra.mxu0 0.0
  %886 = vmatprep.subr.mxu0 0.0
  %887 = vmatpush1.msra.mxu0 0.0
  %888 = vmatprep.subr.mxu0 0.0
  %889 = vmatpush1.msra.mxu0 0.0
  %890 = vmatprep.subr.mxu0 0.0
  %891 = vmatpush1.msra.mxu0 0.0
  %892 = vmatprep.subr.mxu0 0.0
  %893 = vmatpush1.msra.mxu0 0.0
  %894 = vmatprep.subr.mxu0 0.0
  %895 = vmatpush1.msra.mxu0 0.0
  %896 = vmatprep.mubr.f32.mxu0 0.0
  %897 = vmatmul.mubr.f32.gmra.mrb[0].mxu0 %v830
  %v898 = vpop.f32.mrb[0].mxu0
  %v899 = vadd.f32 0.0, %v898
  %v900 = vpop.f32.mrb[0].mxu0
  %v901 = vadd.f32 0.0, %v900
  %902 = vdwg.mxu0
  %v903 = vadd.f32 %v190, %v899
  %v904 = vadd.f32 %v192, %v901
  %v905 = vxor.u32 %v903, 2147483648
  %v906 = vxor.u32 %v904, 2147483648
  %v907 = vmul.f32 %v905, 1.442695
  %v908 = vpow.pop %v907
  %v909 = vmul.f32 %v906, 1.442695
  %v910 = vpow.pop %v909
  %v911 = vadd.f32 %v908, 1.0
  %v912 = vadd.f32 %v910, 1.0
  %v913 = vrcp.pop %v911
  %v914 = vmul.f32 1.0, %v913
  %v915 = vrcp.pop %v912
  %v916 = vmul.f32 1.0, %v915
  %v917 = vtanh.pop %v904
  %919 = vrot.lane.b32.xlu0 %v822, 64
  %v920 = vpop.permute.xlu0 %919
  %v922 = vmul.f32 %v914, %v920
  %v923 = vmul.f32 %v914, %v917
  %925 = vrot.lane.b32.xlu0 %v923, 64
  %v926 = vpop.permute.xlu0 %925
  %v928 = vadd.f32 %v922, %v926
  %v929 = vtanh.pop %v928
  %v930 = vmul.f32 %v916, %v929
  %932 = vrot.lane.b32.xlu0 %v930, 64
  %v933 = vpop.permute.xlu0 %932
  %v935 = vmul.f32 %v25, %v933
  %v936 = vmul.f32 %v33, %v815
  %v937 = vadd.f32 %v935, %v936
  %939 = vrot.lane.b32.xlu0 %v928, 64
  %v940 = vpop.permute.xlu0 %939
  %v942 = vmul.f32 %v25, %v940
  %v943 = vmul.f32 %v33, %v822
  %v944 = vadd.f32 %v942, %v943
  %945 = vst.msk [vmem:[#allocation2 + $0x28] sm:$0xff] %vm222, %v935
  %947 = vrot.lane.b32.xlu0 %v935, 64
  %v948 = vpop.permute.xlu0 %947
  %950 = vst.msk [vmem:[#allocation2 + $0x10] sm:$0xff] %vm339, %v948
  %v952 = vsel %vm222, %v937, 0
  %954 = vmatprep.subr.mxu0 %v207
  %955 = vmatpush1.msra.mxu0 %v206
  %956 = vmatprep.subr.mxu0 %v209
  %957 = vmatpush1.msra.mxu0 %v208
  %958 = vmatprep.subr.mxu0 %v211
  %959 = vmatpush1.msra.mxu0 %v210
  %960 = vmatprep.subr.mxu0 %v213
  %961 = vmatpush1.msra.mxu0 %v212
  %962 = vmatprep.subr.mxu0 %v215
  %963 = vmatpush1.msra.mxu0 %v214
  %964 = vmatprep.subr.mxu0 %v217
  %965 = vmatpush1.msra.mxu0 %v216
  %966 = vmatprep.subr.mxu0 %v219
  %967 = vmatpush1.msra.mxu0 %v218
  %968 = vmatprep.subr.mxu0 %v221
  %969 = vmatpush1.msra.mxu0 %v220
  %970 = vmatprep.subr.mxu0 0.0
  %971 = vmatpush1.msra.mxu0 0.0
  %972 = vmatprep.subr.mxu0 0.0
  %973 = vmatpush1.msra.mxu0 0.0
  %974 = vmatprep.subr.mxu0 0.0
  %975 = vmatpush1.msra.mxu0 0.0
  %976 = vmatprep.subr.mxu0 0.0
  %977 = vmatpush1.msra.mxu0 0.0
  %978 = vmatprep.subr.mxu0 0.0
  %979 = vmatpush1.msra.mxu0 0.0
  %980 = vmatprep.subr.mxu0 0.0
  %981 = vmatpush1.msra.mxu0 0.0
  %982 = vmatprep.subr.mxu0 0.0
  %983 = vmatpush1.msra.mxu0 0.0
  %984 = vmatprep.subr.mxu0 0.0
  %985 = vmatpush1.msra.mxu0 0.0
  %986 = vmatprep.subr.mxu0 0.0
  %987 = vmatpush1.msra.mxu0 0.0
  %988 = vmatprep.subr.mxu0 0.0
  %989 = vmatpush1.msra.mxu0 0.0
  %990 = vmatprep.subr.mxu0 0.0
  %991 = vmatpush1.msra.mxu0 0.0
  %992 = vmatprep.subr.mxu0 0.0
  %993 = vmatpush1.msra.mxu0 0.0
  %994 = vmatprep.subr.mxu0 0.0
  %995 = vmatpush1.msra.mxu0 0.0
  %996 = vmatprep.subr.mxu0 0.0
  %997 = vmatpush1.msra.mxu0 0.0
  %998 = vmatprep.subr.mxu0 0.0
  %999 = vmatpush1.msra.mxu0 0.0
  %1000 = vmatprep.subr.mxu0 0.0
  %1001 = vmatpush1.msra.mxu0 0.0
  %1002 = vmatprep.subr.mxu0 0.0
  %1003 = vmatpush1.msra.mxu0 0.0
  %1004 = vmatprep.subr.mxu0 0.0
  %1005 = vmatpush1.msra.mxu0 0.0
  %1006 = vmatprep.subr.mxu0 0.0
  %1007 = vmatpush1.msra.mxu0 0.0
  %1008 = vmatprep.subr.mxu0 0.0
  %1009 = vmatpush1.msra.mxu0 0.0
  %1010 = vmatprep.subr.mxu0 0.0
  %1011 = vmatpush1.msra.mxu0 0.0
  %1012 = vmatprep.subr.mxu0 0.0
  %1013 = vmatpush1.msra.mxu0 0.0
  %1014 = vmatprep.subr.mxu0 0.0
  %1015 = vmatpush1.msra.mxu0 0.0
  %1016 = vmatprep.subr.mxu0 0.0
  %1017 = vmatpush1.msra.mxu0 0.0
  %1018 = vmatprep.mubr.f32.mxu0 0.0
  %1019 = vmatmul.mubr.f32.gmra.mrb[0].mxu0 %v952
  %v1020 = vpop.f32.mrb[0].mxu0
  %v1021 = vadd.f32 0.0, %v1020
  %v1022 = vpop.f32.mrb[0].mxu0
  %v1023 = vadd.f32 0.0, %v1022
  %1024 = vdwg.mxu0
  %v1025 = vadd.f32 %v196, %v1021
  %v1026 = vadd.f32 %v198, %v1023
  %v1027 = vxor.u32 %v1025, 2147483648
  %v1028 = vxor.u32 %v1026, 2147483648
  %v1029 = vmul.f32 %v1027, 1.442695
  %v1030 = vpow.pop %v1029
  %v1031 = vmul.f32 %v1028, 1.442695
  %v1032 = vpow.pop %v1031
  %v1033 = vadd.f32 %v1030, 1.0
  %v1034 = vadd.f32 %v1032, 1.0
  %v1035 = vrcp.pop %v1033
  %v1036 = vmul.f32 1.0, %v1035
  %v1037 = vrcp.pop %v1034
  %v1038 = vmul.f32 1.0, %v1037
  %v1039 = vtanh.pop %v1026
  %1041 = vrot.lane.b32.xlu0 %v944, 64
  %v1042 = vpop.permute.xlu0 %1041
  %v1044 = vmul.f32 %v1036, %v1042
  %v1045 = vmul.f32 %v1036, %v1039
  %1047 = vrot.lane.b32.xlu0 %v1045, 64
  %v1048 = vpop.permute.xlu0 %1047
  %v1050 = vadd.f32 %v1044, %v1048
  %v1051 = vtanh.pop %v1050
  %v1052 = vmul.f32 %v1038, %v1051
  %1054 = vrot.lane.b32.xlu0 %v1052, 64
  %v1055 = vpop.permute.xlu0 %1054
  %v1057 = vmul.f32 %v26, %v1055
  %v1058 = vmul.f32 %v34, %v937
  %v1059 = vadd.f32 %v1057, %v1058
  %1061 = vrot.lane.b32.xlu0 %v1050, 64
  %v1062 = vpop.permute.xlu0 %1061
  %v1064 = vmul.f32 %v26, %v1062
  %v1065 = vmul.f32 %v34, %v944
  %v1066 = vadd.f32 %v1064, %v1065
  %1067 = vst.msk [vmem:[#allocation2 + $0x30] sm:$0xff] %vm222, %v1057
  %1069 = vrot.lane.b32.xlu0 %v1057, 64
  %v1070 = vpop.permute.xlu0 %1069
  %1072 = vst.msk [vmem:[#allocation2 + $0x8] sm:$0xff] %vm339, %v1070
  %v1074 = vsel %vm222, %v1059, 0
  %1076 = vmatprep.subr.mxu0 %v207
  %1077 = vmatpush1.msra.mxu0 %v206
  %1078 = vmatprep.subr.mxu0 %v209
  %1079 = vmatpush1.msra.mxu0 %v208
  %1080 = vmatprep.subr.mxu0 %v211
  %1081 = vmatpush1.msra.mxu0 %v210
  %1082 = vmatprep.subr.mxu0 %v213
  %1083 = vmatpush1.msra.mxu0 %v212
  %1084 = vmatprep.subr.mxu0 %v215
  %1085 = vmatpush1.msra.mxu0 %v214
  %1086 = vmatprep.subr.mxu0 %v217
  %1087 = vmatpush1.msra.mxu0 %v216
  %1088 = vmatprep.subr.mxu0 %v219
  %1089 = vmatpush1.msra.mxu0 %v218
  %1090 = vmatprep.subr.mxu0 %v221
  %1091 = vmatpush1.msra.mxu0 %v220
  %1092 = vmatprep.subr.mxu0 0.0
  %1093 = vmatpush1.msra.mxu0 0.0
  %1094 = vmatprep.subr.mxu0 0.0
  %1095 = vmatpush1.msra.mxu0 0.0
  %1096 = vmatprep.subr.mxu0 0.0
  %1097 = vmatpush1.msra.mxu0 0.0
  %1098 = vmatprep.subr.mxu0 0.0
  %1099 = vmatpush1.msra.mxu0 0.0
  %1100 = vmatprep.subr.mxu0 0.0
  %1101 = vmatpush1.msra.mxu0 0.0
  %1102 = vmatprep.subr.mxu0 0.0
  %1103 = vmatpush1.msra.mxu0 0.0
  %1104 = vmatprep.subr.mxu0 0.0
  %1105 = vmatpush1.msra.mxu0 0.0
  %1106 = vmatprep.subr.mxu0 0.0
  %1107 = vmatpush1.msra.mxu0 0.0
  %1108 = vmatprep.subr.mxu0 0.0
  %1109 = vmatpush1.msra.mxu0 0.0
  %1110 = vmatprep.subr.mxu0 0.0
  %1111 = vmatpush1.msra.mxu0 0.0
  %1112 = vmatprep.subr.mxu0 0.0
  %1113 = vmatpush1.msra.mxu0 0.0
  %1114 = vmatprep.subr.mxu0 0.0
  %1115 = vmatpush1.msra.mxu0 0.0
  %1116 = vmatprep.subr.mxu0 0.0
  %1117 = vmatpush1.msra.mxu0 0.0
  %1118 = vmatprep.subr.mxu0 0.0
  %1119 = vmatpush1.msra.mxu0 0.0
  %1120 = vmatprep.subr.mxu0 0.0
  %1121 = vmatpush1.msra.mxu0 0.0
  %1122 = vmatprep.subr.mxu0 0.0
  %1123 = vmatpush1.msra.mxu0 0.0
  %1124 = vmatprep.subr.mxu0 0.0
  %1125 = vmatpush1.msra.mxu0 0.0
  %1126 = vmatprep.subr.mxu0 0.0
  %1127 = vmatpush1.msra.mxu0 0.0
  %1128 = vmatprep.subr.mxu0 0.0
  %1129 = vmatpush1.msra.mxu0 0.0
  %1130 = vmatprep.subr.mxu0 0.0
  %1131 = vmatpush1.msra.mxu0 0.0
  %1132 = vmatprep.subr.mxu0 0.0
  %1133 = vmatpush1.msra.mxu0 0.0
  %1134 = vmatprep.subr.mxu0 0.0
  %1135 = vmatpush1.msra.mxu0 0.0
  %1136 = vmatprep.subr.mxu0 0.0
  %1137 = vmatpush1.msra.mxu0 0.0
  %1138 = vmatprep.subr.mxu0 0.0
  %1139 = vmatpush1.msra.mxu0 0.0
  %1140 = vmatprep.mubr.f32.mxu0 0.0
  %1141 = vmatmul.mubr.f32.gmra.mrb[0].mxu0 %v1074
  %v1142 = vpop.f32.mrb[0].mxu0
  %v1143 = vadd.f32 0.0, %v1142
  %v1144 = vpop.f32.mrb[0].mxu0
  %v1145 = vadd.f32 0.0, %v1144
  %1146 = vdwg.mxu0
  %v1147 = vadd.f32 %v202, %v1143
  %v1148 = vadd.f32 %v204, %v1145
  %v1149 = vxor.u32 %v1147, 2147483648
  %v1150 = vxor.u32 %v1148, 2147483648
  %v1151 = vmul.f32 %v1149, 1.442695
  %v1152 = vpow.pop %v1151
  %v1153 = vmul.f32 %v1150, 1.442695
  %v1154 = vpow.pop %v1153
  %v1155 = vadd.f32 %v1152, 1.0
  %v1156 = vadd.f32 %v1154, 1.0
  %v1157 = vrcp.pop %v1155
  %v1158 = vmul.f32 1.0, %v1157
  %v1159 = vrcp.pop %v1156
  %v1160 = vmul.f32 1.0, %v1159
  %v1161 = vtanh.pop %v1148
  %1163 = vrot.lane.b32.xlu0 %v1066, 64
  %v1164 = vpop.permute.xlu0 %1163
  %v1166 = vmul.f32 %v1158, %v1164
  %v1167 = vmul.f32 %v1158, %v1161
  %1169 = vrot.lane.b32.xlu0 %v1167, 64
  %v1170 = vpop.permute.xlu0 %1169
  %v1172 = vadd.f32 %v1166, %v1170
  %v1173 = vtanh.pop %v1172
  %v1174 = vmul.f32 %v1160, %v1173
  %1176 = vrot.lane.b32.xlu0 %v1174, 64
  %v1177 = vpop.permute.xlu0 %1176
  %v1179 = vmul.f32 %v27, %v1177
  %1180 = vst.msk [vmem:[#allocation2 + $0x38] sm:$0xff] %vm222, %v1179
  %1182 = vrot.lane.b32.xlu0 %v1179, 64
  %v1183 = vpop.permute.xlu0 %1182
  %1185 = vst.msk [vmem:[#allocation2] sm:$0xff] %vm339, %v1183
  %v1186 = vld [vmem:[#allocation2] sm:$0xff]
  %v1187 = vld [vmem:[#allocation2 + $0x8] sm:$0xff]
  %v1188 = vld [vmem:[#allocation2 + $0x10] sm:$0xff]
  %v1189 = vld [vmem:[#allocation2 + $0x18] sm:$0xff]
  %v1190 = vld [vmem:[#allocation2 + $0x20] sm:$0xff]
  %v1191 = vld [vmem:[#allocation2 + $0x28] sm:$0xff]
  %v1192 = vld [vmem:[#allocation2 + $0x30] sm:$0xff]
  %v1193 = vld [vmem:[#allocation2 + $0x38] sm:$0xff]
  %v1194 = vld [vmem:[%s3 + $0xa0] sm:$0xff]
  %v1195 = vld [vmem:[%s3 + $0xa8] sm:$0xff]
  %v1196 = vld [vmem:[%s3 + $0xb0] sm:$0xff]
  %v1197 = vld [vmem:[%s3 + $0xb8] sm:$0xff]
  %v1198 = vld [vmem:[%s3 + $0xc0] sm:$0xff]
  %v1199 = vld [vmem:[%s3 + $0xc8] sm:$0xff]
  %v1200 = vld [vmem:[%s3 + $0xd0] sm:$0xff]
  %v1201 = vld [vmem:[%s3 + $0xd8] sm:$0xff]
  %v1202 = vld [vmem:[%s3 + $0xe0] sm:$0xff]
  %v1203 = vld [vmem:[%s3 + $0xe8] sm:$0xff]
  %v1204 = vld [vmem:[%s3 + $0xf0] sm:$0xff]
  %v1205 = vld [vmem:[%s3 + $0xf8] sm:$0xff]
  %v1206 = vld [vmem:[%s3 + $0x100] sm:$0xff]
  %v1207 = vld [vmem:[%s3 + $0x108] sm:$0xff]
  %v1208 = vld [vmem:[%s3 + $0x110] sm:$0xff]
  %v1209 = vld [vmem:[%s3 + $0x118] sm:$0xff]
  %v1210 = vld [vmem:[%s3 + $0x120] sm:$0xff]
  %v1211 = vld [vmem:[%s3 + $0x128] sm:$0xff]
  %v1212 = vld [vmem:[%s3 + $0x130] sm:$0xff]
  %v1213 = vld [vmem:[%s3 + $0x138] sm:$0xff]
  %v1214 = vld [vmem:[%s3 + $0x140] sm:$0xff]
  %v1215 = vld [vmem:[%s3 + $0x148] sm:$0xff]
  %v1216 = vld [vmem:[%s3 + $0x150] sm:$0xff]
  %v1217 = vld [vmem:[%s3 + $0x158] sm:$0xff]
  %v1218 = vld [vmem:[%s3 + $0x160] sm:$0xff]
  %v1219 = vld [vmem:[%s3 + $0x168] sm:$0xff]
  %v1220 = vld [vmem:[%s3 + $0x170] sm:$0xff]
  %v1221 = vld [vmem:[%s3 + $0x178] sm:$0xff]
  %v1222 = vld [vmem:[%s3 + $0x180] sm:$0xff]
  %v1223 = vld [vmem:[%s3 + $0x188] sm:$0xff]
  %v1224 = vld [vmem:[%s3 + $0x190] sm:$0xff]
  %v1225 = vld [vmem:[%s3 + $0x198] sm:$0xff]
  %s1226 = scalar_lea.vmem %s3, 560
  %v1227 = vld [vmem:[%s1226] ss:$8 sm:$0x3]
  %v1229 = vlaneseq
  %v1230 = vshrl.u32 %v1229, 7
  %v1231 = vsub.s32 0, %v1230
  %v1232 = vrot.slane %v1227, %v1231
  %v1233 = vlaneseq
  %v1234 = vshrl.u32 %v1233, 7
  %v1235 = vsub.s32 1, %v1234
  %v1236 = vrot.slane %v1227, %v1235
  %1239 = vmatprep.subr.mxu0 %v1195
  %1240 = vmatpush1.msra.mxu0 %v1194
  %1241 = vmatprep.subr.mxu0 %v1197
  %1242 = vmatpush1.msra.mxu0 %v1196
  %1243 = vmatprep.subr.mxu0 %v1199
  %1244 = vmatpush1.msra.mxu0 %v1198
  %1245 = vmatprep.subr.mxu0 %v1201
  %1246 = vmatpush1.msra.mxu0 %v1200
  %1247 = vmatprep.subr.mxu0 %v1203
  %1248 = vmatpush1.msra.mxu0 %v1202
  %1249 = vmatprep.subr.mxu0 %v1205
  %1250 = vmatpush1.msra.mxu0 %v1204
  %1251 = vmatprep.subr.mxu0 %v1207
  %1252 = vmatpush1.msra.mxu0 %v1206
  %1253 = vmatprep.subr.mxu0 %v1209
  %1254 = vmatpush1.msra.mxu0 %v1208
  %1255 = vmatprep.subr.mxu0 %v1211
  %1256 = vmatpush1.msra.mxu0 %v1210
  %1257 = vmatprep.subr.mxu0 %v1213
  %1258 = vmatpush1.msra.mxu0 %v1212
  %1259 = vmatprep.subr.mxu0 %v1215
  %1260 = vmatpush1.msra.mxu0 %v1214
  %1261 = vmatprep.subr.mxu0 %v1217
  %1262 = vmatpush1.msra.mxu0 %v1216
  %1263 = vmatprep.subr.mxu0 %v1219
  %1264 = vmatpush1.msra.mxu0 %v1218
  %1265 = vmatprep.subr.mxu0 %v1221
  %1266 = vmatpush1.msra.mxu0 %v1220
  %1267 = vmatprep.subr.mxu0 %v1223
  %1268 = vmatpush1.msra.mxu0 %v1222
  %1269 = vmatprep.subr.mxu0 %v1225
  %1270 = vmatpush1.msra.mxu0 %v1224
  %1271 = vmatprep.subr.mxu0 0.0
  %1272 = vmatpush1.msra.mxu0 0.0
  %1273 = vmatprep.subr.mxu0 0.0
  %1274 = vmatpush1.msra.mxu0 0.0
  %1275 = vmatprep.subr.mxu0 0.0
  %1276 = vmatpush1.msra.mxu0 0.0
  %1277 = vmatprep.subr.mxu0 0.0
  %1278 = vmatpush1.msra.mxu0 0.0
  %1279 = vmatprep.subr.mxu0 0.0
  %1280 = vmatpush1.msra.mxu0 0.0
  %1281 = vmatprep.subr.mxu0 0.0
  %1282 = vmatpush1.msra.mxu0 0.0
  %1283 = vmatprep.subr.mxu0 0.0
  %1284 = vmatpush1.msra.mxu0 0.0
  %1285 = vmatprep.subr.mxu0 0.0
  %1286 = vmatpush1.msra.mxu0 0.0
  %1287 = vmatprep.subr.mxu0 0.0
  %1288 = vmatpush1.msra.mxu0 0.0
  %1289 = vmatprep.subr.mxu0 0.0
  %1290 = vmatpush1.msra.mxu0 0.0
  %1291 = vmatprep.subr.mxu0 0.0
  %1292 = vmatpush1.msra.mxu0 0.0
  %1293 = vmatprep.subr.mxu0 0.0
  %1294 = vmatpush1.msra.mxu0 0.0
  %1295 = vmatprep.subr.mxu0 0.0
  %1296 = vmatpush1.msra.mxu0 0.0
  %1297 = vmatprep.subr.mxu0 0.0
  %1298 = vmatpush1.msra.mxu0 0.0
  %1299 = vmatprep.subr.mxu0 0.0
  %1300 = vmatpush1.msra.mxu0 0.0
  %1301 = vmatprep.subr.mxu0 0.0
  %1302 = vmatpush1.msra.mxu0 0.0
  %1303 = vmatprep.mubr.f32.mxu0 0.0
  %1304 = vmatmul.mubr.f32.gmra.mrb[0].mxu0 %v1186
  %v1305 = vpop.f32.mrb[0].mxu0
  %v1306 = vadd.f32 %v1232, %v1305
  %v1307 = vpop.f32.mrb[0].mxu0
  %v1308 = vadd.f32 %v1236, %v1307
  %1309 = vmatprep.mubr.f32.mxu0 0.0
  %1310 = vmatmul.mubr.f32.gmra.mrb[0].mxu0 %v1187
  %v1311 = vpop.f32.mrb[0].mxu0
  %v1312 = vadd.f32 %v1232, %v1311
  %v1313 = vpop.f32.mrb[0].mxu0
  %v1314 = vadd.f32 %v1236, %v1313
  %1315 = vmatprep.mubr.f32.mxu0 0.0
  %1316 = vmatmul.mubr.f32.gmra.mrb[0].mxu0 %v1188
  %v1317 = vpop.f32.mrb[0].mxu0
  %v1318 = vadd.f32 %v1232, %v1317
  %v1319 = vpop.f32.mrb[0].mxu0
  %v1320 = vadd.f32 %v1236, %v1319
  %1321 = vmatprep.mubr.f32.mxu0 0.0
  %1322 = vmatmul.mubr.f32.gmra.mrb[0].mxu0 %v1189
  %v1323 = vpop.f32.mrb[0].mxu0
  %v1324 = vadd.f32 %v1232, %v1323
  %v1325 = vpop.f32.mrb[0].mxu0
  %v1326 = vadd.f32 %v1236, %v1325
  %1327 = vmatprep.mubr.f32.mxu0 0.0
  %1328 = vmatmul.mubr.f32.gmra.mrb[0].mxu0 %v1190
  %v1329 = vpop.f32.mrb[0].mxu0
  %v1330 = vadd.f32 %v1232, %v1329
  %v1331 = vpop.f32.mrb[0].mxu0
  %v1332 = vadd.f32 %v1236, %v1331
  %1333 = vmatprep.mubr.f32.mxu0 0.0
  %1334 = vmatmul.mubr.f32.gmra.mrb[0].mxu0 %v1191
  %v1335 = vpop.f32.mrb[0].mxu0
  %v1336 = vadd.f32 %v1232, %v1335
  %v1337 = vpop.f32.mrb[0].mxu0
  %v1338 = vadd.f32 %v1236, %v1337
  %1339 = vmatprep.mubr.f32.mxu0 0.0
  %1340 = vmatmul.mubr.f32.gmra.mrb[0].mxu0 %v1192
  %v1341 = vpop.f32.mrb[0].mxu0
  %v1342 = vadd.f32 %v1232, %v1341
  %v1343 = vpop.f32.mrb[0].mxu0
  %v1344 = vadd.f32 %v1236, %v1343
  %1345 = vmatprep.mubr.f32.mxu0 0.0
  %1346 = vmatmul.mubr.f32.gmra.mrb[0].mxu0 %v1193
  %v1347 = vpop.f32.mrb[0].mxu0
  %v1348 = vadd.f32 %v1232, %v1347
  %v1349 = vpop.f32.mrb[0].mxu0
  %v1350 = vadd.f32 %v1236, %v1349
  %1351 = vdwg.mxu0
  %v1352 = vld [vmem:[%s3 + $0x1a0] sm:$0xff]
  %v1353 = vld [vmem:[%s3 + $0x1a8] sm:$0xff]
  %v1354 = vld [vmem:[%s3 + $0x1b0] sm:$0xff]
  %v1355 = vld [vmem:[%s3 + $0x1b8] sm:$0xff]
  %v1356 = vld [vmem:[%s3 + $0x1c0] sm:$0xff]
  %v1357 = vld [vmem:[%s3 + $0x1c8] sm:$0xff]
  %v1358 = vld [vmem:[%s3 + $0x1d0] sm:$0xff]
  %v1359 = vld [vmem:[%s3 + $0x1d8] sm:$0xff]
  %v1360 = vld [vmem:[%s3 + $0x1e0] sm:$0xff]
  %v1361 = vld [vmem:[%s3 + $0x1e8] sm:$0xff]
  %v1362 = vld [vmem:[%s3 + $0x1f0] sm:$0xff]
  %v1363 = vld [vmem:[%s3 + $0x1f8] sm:$0xff]
  %v1364 = vld [vmem:[%s3 + $0x200] sm:$0xff]
  %v1365 = vld [vmem:[%s3 + $0x208] sm:$0xff]
  %v1366 = vld [vmem:[%s3 + $0x210] sm:$0xff]
  %v1367 = vld [vmem:[%s3 + $0x218] sm:$0xff]
  %1368 = vmatprep.subr.mxu0 %v1353
  %1369 = vmatpush1.msra.mxu0 %v1352
  %1370 = vmatprep.subr.mxu0 %v1355
  %1371 = vmatpush1.msra.mxu0 %v1354
  %1372 = vmatprep.subr.mxu0 %v1357
  %1373 = vmatpush1.msra.mxu0 %v1356
  %1374 = vmatprep.subr.mxu0 %v1359
  %1375 = vmatpush1.msra.mxu0 %v1358
  %1376 = vmatprep.subr.mxu0 %v1361
  %1377 = vmatpush1.msra.mxu0 %v1360
  %1378 = vmatprep.subr.mxu0 %v1363
  %1379 = vmatpush1.msra.mxu0 %v1362
  %1380 = vmatprep.subr.mxu0 %v1365
  %1381 = vmatpush1.msra.mxu0 %v1364
  %1382 = vmatprep.subr.mxu0 %v1367
  %1383 = vmatpush1.msra.mxu0 %v1366
  %1384 = vmatprep.subr.mxu0 0.0
  %1385 = vmatpush1.msra.mxu0 0.0
  %1386 = vmatprep.subr.mxu0 0.0
  %1387 = vmatpush1.msra.mxu0 0.0
  %1388 = vmatprep.subr.mxu0 0.0
  %1389 = vmatpush1.msra.mxu0 0.0
  %1390 = vmatprep.subr.mxu0 0.0
  %1391 = vmatpush1.msra.mxu0 0.0
  %1392 = vmatprep.subr.mxu0 0.0
  %1393 = vmatpush1.msra.mxu0 0.0
  %1394 = vmatprep.subr.mxu0 0.0
  %1395 = vmatpush1.msra.mxu0 0.0
  %1396 = vmatprep.subr.mxu0 0.0
  %1397 = vmatpush1.msra.mxu0 0.0
  %1398 = vmatprep.subr.mxu0 0.0
  %1399 = vmatpush1.msra.mxu0 0.0
  %1400 = vmatprep.subr.mxu0 0.0
  %1401 = vmatpush1.msra.mxu0 0.0
  %1402 = vmatprep.subr.mxu0 0.0
  %1403 = vmatpush1.msra.mxu0 0.0
  %1404 = vmatprep.subr.mxu0 0.0
  %1405 = vmatpush1.msra.mxu0 0.0
  %1406 = vmatprep.subr.mxu0 0.0
  %1407 = vmatpush1.msra.mxu0 0.0
  %1408 = vmatprep.subr.mxu0 0.0
  %1409 = vmatpush1.msra.mxu0 0.0
  %1410 = vmatprep.subr.mxu0 0.0
  %1411 = vmatpush1.msra.mxu0 0.0
  %1412 = vmatprep.subr.mxu0 0.0
  %1413 = vmatpush1.msra.mxu0 0.0
  %1414 = vmatprep.subr.mxu0 0.0
  %1415 = vmatpush1.msra.mxu0 0.0
  %1416 = vmatprep.subr.mxu0 0.0
  %1417 = vmatpush1.msra.mxu0 0.0
  %1418 = vmatprep.subr.mxu0 0.0
  %1419 = vmatpush1.msra.mxu0 0.0
  %1420 = vmatprep.subr.mxu0 0.0
  %1421 = vmatpush1.msra.mxu0 0.0
  %1422 = vmatprep.subr.mxu0 0.0
  %1423 = vmatpush1.msra.mxu0 0.0
  %1424 = vmatprep.subr.mxu0 0.0
  %1425 = vmatpush1.msra.mxu0 0.0
  %1426 = vmatprep.subr.mxu0 0.0
  %1427 = vmatpush1.msra.mxu0 0.0
  %1428 = vmatprep.subr.mxu0 0.0
  %1429 = vmatpush1.msra.mxu0 0.0
  %1430 = vmatprep.subr.mxu0 0.0
  %1431 = vmatpush1.msra.mxu0 0.0
  %1432 = vmatprep.mubr.f32.mxu0 0.0
  %1433 = vmatmul.mubr.f32.gmra.mrb[0].mxu0 %v224
  %v1434 = vpop.f32.mrb[0].mxu0
  %v1435 = vadd.f32 0.0, %v1434
  %v1436 = vpop.f32.mrb[0].mxu0
  %v1437 = vadd.f32 0.0, %v1436
  %1438 = vdwg.mxu0
  %v1439 = vadd.f32 %v1306, %v1435
  %v1440 = vadd.f32 %v1308, %v1437
  %v1441 = vxor.u32 %v1439, 2147483648
  %v1442 = vxor.u32 %v1440, 2147483648
  %v1443 = vmul.f32 %v1441, 1.442695
  %v1444 = vpow.pop %v1443
  %v1445 = vmul.f32 %v1442, 1.442695
  %v1446 = vpow.pop %v1445
  %v1447 = vadd.f32 %v1444, 1.0
  %v1448 = vadd.f32 %v1446, 1.0
  %v1449 = vrcp.pop %v1447
  %v1450 = vmul.f32 1.0, %v1449
  %v1451 = vrcp.pop %v1448
  %v1452 = vmul.f32 1.0, %v1451
  %v1453 = vtanh.pop %v1440
  %v1454 = vmul.f32 %v1450, 0.0
  %v1455 = vmul.f32 %v1450, %v1453
  %1457 = vrot.lane.b32.xlu0 %v1455, 64
  %v1458 = vpop.permute.xlu0 %1457
  %v1460 = vadd.f32 %v1454, %v1458
  %v1461 = vtanh.pop %v1460
  %v1462 = vmul.f32 %v1452, %v1461
  %1464 = vrot.lane.b32.xlu0 %v1462, 64
  %v1465 = vpop.permute.xlu0 %1464
  %v1467 = vmul.f32 %v20, %v1465
  %v1468 = vadd.f32 %v1467, %v326
  %1470 = vrot.lane.b32.xlu0 %v1460, 64
  %v1471 = vpop.permute.xlu0 %1470
  %v1473 = vmul.f32 %v20, %v1471
  %v1474 = vadd.f32 %v1473, %v326
  %v1475 = vmul.f32 %v35, %v1467
  %v1476 = vadd.f32 %v1475, 0.0
  %v1478 = vsel %vm222, %v1468, 0
  %1480 = vmatprep.subr.mxu0 %v1353
  %1481 = vmatpush1.msra.mxu0 %v1352
  %1482 = vmatprep.subr.mxu0 %v1355
  %1483 = vmatpush1.msra.mxu0 %v1354
  %1484 = vmatprep.subr.mxu0 %v1357
  %1485 = vmatpush1.msra.mxu0 %v1356
  %1486 = vmatprep.subr.mxu0 %v1359
  %1487 = vmatpush1.msra.mxu0 %v1358
  %1488 = vmatprep.subr.mxu0 %v1361
  %1489 = vmatpush1.msra.mxu0 %v1360
  %1490 = vmatprep.subr.mxu0 %v1363
  %1491 = vmatpush1.msra.mxu0 %v1362
  %1492 = vmatprep.subr.mxu0 %v1365
  %1493 = vmatpush1.msra.mxu0 %v1364
  %1494 = vmatprep.subr.mxu0 %v1367
  %1495 = vmatpush1.msra.mxu0 %v1366
  %1496 = vmatprep.subr.mxu0 0.0
  %1497 = vmatpush1.msra.mxu0 0.0
  %1498 = vmatprep.subr.mxu0 0.0
  %1499 = vmatpush1.msra.mxu0 0.0
  %1500 = vmatprep.subr.mxu0 0.0
  %1501 = vmatpush1.msra.mxu0 0.0
  %1502 = vmatprep.subr.mxu0 0.0
  %1503 = vmatpush1.msra.mxu0 0.0
  %1504 = vmatprep.subr.mxu0 0.0
  %1505 = vmatpush1.msra.mxu0 0.0
  %1506 = vmatprep.subr.mxu0 0.0
  %1507 = vmatpush1.msra.mxu0 0.0
  %1508 = vmatprep.subr.mxu0 0.0
  %1509 = vmatpush1.msra.mxu0 0.0
  %1510 = vmatprep.subr.mxu0 0.0
  %1511 = vmatpush1.msra.mxu0 0.0
  %1512 = vmatprep.subr.mxu0 0.0
  %1513 = vmatpush1.msra.mxu0 0.0
  %1514 = vmatprep.subr.mxu0 0.0
  %1515 = vmatpush1.msra.mxu0 0.0
  %1516 = vmatprep.subr.mxu0 0.0
  %1517 = vmatpush1.msra.mxu0 0.0
  %1518 = vmatprep.subr.mxu0 0.0
  %1519 = vmatpush1.msra.mxu0 0.0
  %1520 = vmatprep.subr.mxu0 0.0
  %1521 = vmatpush1.msra.mxu0 0.0
  %1522 = vmatprep.subr.mxu0 0.0
  %1523 = vmatpush1.msra.mxu0 0.0
  %1524 = vmatprep.subr.mxu0 0.0
  %1525 = vmatpush1.msra.mxu0 0.0
  %1526 = vmatprep.subr.mxu0 0.0
  %1527 = vmatpush1.msra.mxu0 0.0
  %1528 = vmatprep.subr.mxu0 0.0
  %1529 = vmatpush1.msra.mxu0 0.0
  %1530 = vmatprep.subr.mxu0 0.0
  %1531 = vmatpush1.msra.mxu0 0.0
  %1532 = vmatprep.subr.mxu0 0.0
  %1533 = vmatpush1.msra.mxu0 0.0
  %1534 = vmatprep.subr.mxu0 0.0
  %1535 = vmatpush1.msra.mxu0 0.0
  %1536 = vmatprep.subr.mxu0 0.0
  %1537 = vmatpush1.msra.mxu0 0.0
  %1538 = vmatprep.subr.mxu0 0.0
  %1539 = vmatpush1.msra.mxu0 0.0
  %1540 = vmatprep.subr.mxu0 0.0
  %1541 = vmatpush1.msra.mxu0 0.0
  %1542 = vmatprep.subr.mxu0 0.0
  %1543 = vmatpush1.msra.mxu0 0.0
  %1544 = vmatprep.mubr.f32.mxu0 0.0
  %1545 = vmatmul.mubr.f32.gmra.mrb[0].mxu0 %v1478
  %v1546 = vpop.f32.mrb[0].mxu0
  %v1547 = vadd.f32 0.0, %v1546
  %v1548 = vpop.f32.mrb[0].mxu0
  %v1549 = vadd.f32 0.0, %v1548
  %1550 = vdwg.mxu0
  %v1551 = vadd.f32 %v1312, %v1547
  %v1552 = vadd.f32 %v1314, %v1549
  %v1553 = vxor.u32 %v1551, 2147483648
  %v1554 = vxor.u32 %v1552, 2147483648
  %v1555 = vmul.f32 %v1553, 1.442695
  %v1556 = vpow.pop %v1555
  %v1557 = vmul.f32 %v1554, 1.442695
  %v1558 = vpow.pop %v1557
  %v1559 = vadd.f32 %v1556, 1.0
  %v1560 = vadd.f32 %v1558, 1.0
  %v1561 = vrcp.pop %v1559
  %v1562 = vmul.f32 1.0, %v1561
  %v1563 = vrcp.pop %v1560
  %v1564 = vmul.f32 1.0, %v1563
  %v1565 = vtanh.pop %v1552
  %1567 = vrot.lane.b32.xlu0 %v1474, 64
  %v1568 = vpop.permute.xlu0 %1567
  %v1570 = vmul.f32 %v1562, %v1568
  %v1571 = vmul.f32 %v1562, %v1565
  %1573 = vrot.lane.b32.xlu0 %v1571, 64
  %v1574 = vpop.permute.xlu0 %1573
  %v1576 = vadd.f32 %v1570, %v1574
  %v1577 = vtanh.pop %v1576
  %v1578 = vmul.f32 %v1564, %v1577
  %1580 = vrot.lane.b32.xlu0 %v1578, 64
  %v1581 = vpop.permute.xlu0 %1580
  %v1583 = vmul.f32 %v21, %v1581
  %v1584 = vmul.f32 %v29, %v1468
  %v1585 = vadd.f32 %v1583, %v1584
  %1587 = vrot.lane.b32.xlu0 %v1576, 64
  %v1588 = vpop.permute.xlu0 %1587
  %v1590 = vmul.f32 %v21, %v1588
  %v1591 = vmul.f32 %v29, %v1474
  %v1592 = vadd.f32 %v1590, %v1591
  %v1593 = vmul.f32 %v36, %v1583
  %v1594 = vadd.f32 %v1476, %v1593
  %v1596 = vsel %vm222, %v1585, 0
  %1598 = vmatprep.subr.mxu0 %v1353
  %1599 = vmatpush1.msra.mxu0 %v1352
  %1600 = vmatprep.subr.mxu0 %v1355
  %1601 = vmatpush1.msra.mxu0 %v1354
  %1602 = vmatprep.subr.mxu0 %v1357
  %1603 = vmatpush1.msra.mxu0 %v1356
  %1604 = vmatprep.subr.mxu0 %v1359
  %1605 = vmatpush1.msra.mxu0 %v1358
  %1606 = vmatprep.subr.mxu0 %v1361
  %1607 = vmatpush1.msra.mxu0 %v1360
  %1608 = vmatprep.subr.mxu0 %v1363
  %1609 = vmatpush1.msra.mxu0 %v1362
  %1610 = vmatprep.subr.mxu0 %v1365
  %1611 = vmatpush1.msra.mxu0 %v1364
  %1612 = vmatprep.subr.mxu0 %v1367
  %1613 = vmatpush1.msra.mxu0 %v1366
  %1614 = vmatprep.subr.mxu0 0.0
  %1615 = vmatpush1.msra.mxu0 0.0
  %1616 = vmatprep.subr.mxu0 0.0
  %1617 = vmatpush1.msra.mxu0 0.0
  %1618 = vmatprep.subr.mxu0 0.0
  %1619 = vmatpush1.msra.mxu0 0.0
  %1620 = vmatprep.subr.mxu0 0.0
  %1621 = vmatpush1.msra.mxu0 0.0
  %1622 = vmatprep.subr.mxu0 0.0
  %1623 = vmatpush1.msra.mxu0 0.0
  %1624 = vmatprep.subr.mxu0 0.0
  %1625 = vmatpush1.msra.mxu0 0.0
  %1626 = vmatprep.subr.mxu0 0.0
  %1627 = vmatpush1.msra.mxu0 0.0
  %1628 = vmatprep.subr.mxu0 0.0
  %1629 = vmatpush1.msra.mxu0 0.0
  %1630 = vmatprep.subr.mxu0 0.0
  %1631 = vmatpush1.msra.mxu0 0.0
  %1632 = vmatprep.subr.mxu0 0.0
  %1633 = vmatpush1.msra.mxu0 0.0
  %1634 = vmatprep.subr.mxu0 0.0
  %1635 = vmatpush1.msra.mxu0 0.0
  %1636 = vmatprep.subr.mxu0 0.0
  %1637 = vmatpush1.msra.mxu0 0.0
  %1638 = vmatprep.subr.mxu0 0.0
  %1639 = vmatpush1.msra.mxu0 0.0
  %1640 = vmatprep.subr.mxu0 0.0
  %1641 = vmatpush1.msra.mxu0 0.0
  %1642 = vmatprep.subr.mxu0 0.0
  %1643 = vmatpush1.msra.mxu0 0.0
  %1644 = vmatprep.subr.mxu0 0.0
  %1645 = vmatpush1.msra.mxu0 0.0
  %1646 = vmatprep.subr.mxu0 0.0
  %1647 = vmatpush1.msra.mxu0 0.0
  %1648 = vmatprep.subr.mxu0 0.0
  %1649 = vmatpush1.msra.mxu0 0.0
  %1650 = vmatprep.subr.mxu0 0.0
  %1651 = vmatpush1.msra.mxu0 0.0
  %1652 = vmatprep.subr.mxu0 0.0
  %1653 = vmatpush1.msra.mxu0 0.0
  %1654 = vmatprep.subr.mxu0 0.0
  %1655 = vmatpush1.msra.mxu0 0.0
  %1656 = vmatprep.subr.mxu0 0.0
  %1657 = vmatpush1.msra.mxu0 0.0
  %1658 = vmatprep.subr.mxu0 0.0
  %1659 = vmatpush1.msra.mxu0 0.0
  %1660 = vmatprep.subr.mxu0 0.0
  %1661 = vmatpush1.msra.mxu0 0.0
  %1662 = vmatprep.mubr.f32.mxu0 0.0
  %1663 = vmatmul.mubr.f32.gmra.mrb[0].mxu0 %v1596
  %v1664 = vpop.f32.mrb[0].mxu0
  %v1665 = vadd.f32 0.0, %v1664
  %v1666 = vpop.f32.mrb[0].mxu0
  %v1667 = vadd.f32 0.0, %v1666
  %1668 = vdwg.mxu0
  %v1669 = vadd.f32 %v1318, %v1665
  %v1670 = vadd.f32 %v1320, %v1667
  %v1671 = vxor.u32 %v1669, 2147483648
  %v1672 = vxor.u32 %v1670, 2147483648
  %v1673 = vmul.f32 %v1671, 1.442695
  %v1674 = vpow.pop %v1673
  %v1675 = vmul.f32 %v1672, 1.442695
  %v1676 = vpow.pop %v1675
  %v1677 = vadd.f32 %v1674, 1.0
  %v1678 = vadd.f32 %v1676, 1.0
  %v1679 = vrcp.pop %v1677
  %v1680 = vmul.f32 1.0, %v1679
  %v1681 = vrcp.pop %v1678
  %v1682 = vmul.f32 1.0, %v1681
  %v1683 = vtanh.pop %v1670
  %1685 = vrot.lane.b32.xlu0 %v1592, 64
  %v1686 = vpop.permute.xlu0 %1685
  %v1688 = vmul.f32 %v1680, %v1686
  %v1689 = vmul.f32 %v1680, %v1683
  %1691 = vrot.lane.b32.xlu0 %v1689, 64
  %v1692 = vpop.permute.xlu0 %1691
  %v1694 = vadd.f32 %v1688, %v1692
  %v1695 = vtanh.pop %v1694
  %v1696 = vmul.f32 %v1682, %v1695
  %1698 = vrot.lane.b32.xlu0 %v1696, 64
  %v1699 = vpop.permute.xlu0 %1698
  %v1701 = vmul.f32 %v22, %v1699
  %v1702 = vmul.f32 %v30, %v1585
  %v1703 = vadd.f32 %v1701, %v1702
  %1705 = vrot.lane.b32.xlu0 %v1694, 64
  %v1706 = vpop.permute.xlu0 %1705
  %v1708 = vmul.f32 %v22, %v1706
  %v1709 = vmul.f32 %v30, %v1592
  %v1710 = vadd.f32 %v1708, %v1709
  %v1711 = vmul.f32 %v37, %v1701
  %v1712 = vadd.f32 %v1594, %v1711
  %v1714 = vsel %vm222, %v1703, 0
  %1716 = vmatprep.subr.mxu0 %v1353
  %1717 = vmatpush1.msra.mxu0 %v1352
  %1718 = vmatprep.subr.mxu0 %v1355
  %1719 = vmatpush1.msra.mxu0 %v1354
  %1720 = vmatprep.subr.mxu0 %v1357
  %1721 = vmatpush1.msra.mxu0 %v1356
  %1722 = vmatprep.subr.mxu0 %v1359
  %1723 = vmatpush1.msra.mxu0 %v1358
  %1724 = vmatprep.subr.mxu0 %v1361
  %1725 = vmatpush1.msra.mxu0 %v1360
  %1726 = vmatprep.subr.mxu0 %v1363
  %1727 = vmatpush1.msra.mxu0 %v1362
  %1728 = vmatprep.subr.mxu0 %v1365
  %1729 = vmatpush1.msra.mxu0 %v1364
  %1730 = vmatprep.subr.mxu0 %v1367
  %1731 = vmatpush1.msra.mxu0 %v1366
  %1732 = vmatprep.subr.mxu0 0.0
  %1733 = vmatpush1.msra.mxu0 0.0
  %1734 = vmatprep.subr.mxu0 0.0
  %1735 = vmatpush1.msra.mxu0 0.0
  %1736 = vmatprep.subr.mxu0 0.0
  %1737 = vmatpush1.msra.mxu0 0.0
  %1738 = vmatprep.subr.mxu0 0.0
  %1739 = vmatpush1.msra.mxu0 0.0
  %1740 = vmatprep.subr.mxu0 0.0
  %1741 = vmatpush1.msra.mxu0 0.0
  %1742 = vmatprep.subr.mxu0 0.0
  %1743 = vmatpush1.msra.mxu0 0.0
  %1744 = vmatprep.subr.mxu0 0.0
  %1745 = vmatpush1.msra.mxu0 0.0
  %1746 = vmatprep.subr.mxu0 0.0
  %1747 = vmatpush1.msra.mxu0 0.0
  %1748 = vmatprep.subr.mxu0 0.0
  %1749 = vmatpush1.msra.mxu0 0.0
  %1750 = vmatprep.subr.mxu0 0.0
  %1751 = vmatpush1.msra.mxu0 0.0
  %1752 = vmatprep.subr.mxu0 0.0
  %1753 = vmatpush1.msra.mxu0 0.0
  %1754 = vmatprep.subr.mxu0 0.0
  %1755 = vmatpush1.msra.mxu0 0.0
  %1756 = vmatprep.subr.mxu0 0.0
  %1757 = vmatpush1.msra.mxu0 0.0
  %1758 = vmatprep.subr.mxu0 0.0
  %1759 = vmatpush1.msra.mxu0 0.0
  %1760 = vmatprep.subr.mxu0 0.0
  %1761 = vmatpush1.msra.mxu0 0.0
  %1762 = vmatprep.subr.mxu0 0.0
  %1763 = vmatpush1.msra.mxu0 0.0
  %1764 = vmatprep.subr.mxu0 0.0
  %1765 = vmatpush1.msra.mxu0 0.0
  %1766 = vmatprep.subr.mxu0 0.0
  %1767 = vmatpush1.msra.mxu0 0.0
  %1768 = vmatprep.subr.mxu0 0.0
  %1769 = vmatpush1.msra.mxu0 0.0
  %1770 = vmatprep.subr.mxu0 0.0
  %1771 = vmatpush1.msra.mxu0 0.0
  %1772 = vmatprep.subr.mxu0 0.0
  %1773 = vmatpush1.msra.mxu0 0.0
  %1774 = vmatprep.subr.mxu0 0.0
  %1775 = vmatpush1.msra.mxu0 0.0
  %1776 = vmatprep.subr.mxu0 0.0
  %1777 = vmatpush1.msra.mxu0 0.0
  %1778 = vmatprep.subr.mxu0 0.0
  %1779 = vmatpush1.msra.mxu0 0.0
  %1780 = vmatprep.mubr.f32.mxu0 0.0
  %1781 = vmatmul.mubr.f32.gmra.mrb[0].mxu0 %v1714
  %v1782 = vpop.f32.mrb[0].mxu0
  %v1783 = vadd.f32 0.0, %v1782
  %v1784 = vpop.f32.mrb[0].mxu0
  %v1785 = vadd.f32 0.0, %v1784
  %1786 = vdwg.mxu0
  %v1787 = vadd.f32 %v1324, %v1783
  %v1788 = vadd.f32 %v1326, %v1785
  %v1789 = vxor.u32 %v1787, 2147483648
  %v1790 = vxor.u32 %v1788, 2147483648
  %v1791 = vmul.f32 %v1789, 1.442695
  %v1792 = vpow.pop %v1791
  %v1793 = vmul.f32 %v1790, 1.442695
  %v1794 = vpow.pop %v1793
  %v1795 = vadd.f32 %v1792, 1.0
  %v1796 = vadd.f32 %v1794, 1.0
  %v1797 = vrcp.pop %v1795
  %v1798 = vmul.f32 1.0, %v1797
  %v1799 = vrcp.pop %v1796
  %v1800 = vmul.f32 1.0, %v1799
  %v1801 = vtanh.pop %v1788
  %1803 = vrot.lane.b32.xlu0 %v1710, 64
  %v1804 = vpop.permute.xlu0 %1803
  %v1806 = vmul.f32 %v1798, %v1804
  %v1807 = vmul.f32 %v1798, %v1801
  %1809 = vrot.lane.b32.xlu0 %v1807, 64
  %v1810 = vpop.permute.xlu0 %1809
  %v1812 = vadd.f32 %v1806, %v1810
  %v1813 = vtanh.pop %v1812
  %v1814 = vmul.f32 %v1800, %v1813
  %1816 = vrot.lane.b32.xlu0 %v1814, 64
  %v1817 = vpop.permute.xlu0 %1816
  %v1819 = vmul.f32 %v23, %v1817
  %v1820 = vmul.f32 %v31, %v1703
  %v1821 = vadd.f32 %v1819, %v1820
  %1823 = vrot.lane.b32.xlu0 %v1812, 64
  %v1824 = vpop.permute.xlu0 %1823
  %v1826 = vmul.f32 %v23, %v1824
  %v1827 = vmul.f32 %v31, %v1710
  %v1828 = vadd.f32 %v1826, %v1827
  %v1829 = vmul.f32 %v38, %v1819
  %v1830 = vadd.f32 %v1712, %v1829
  %v1832 = vsel %vm222, %v1821, 0
  %1834 = vmatprep.subr.mxu0 %v1353
  %1835 = vmatpush1.msra.mxu0 %v1352
  %1836 = vmatprep.subr.mxu0 %v1355
  %1837 = vmatpush1.msra.mxu0 %v1354
  %1838 = vmatprep.subr.mxu0 %v1357
  %1839 = vmatpush1.msra.mxu0 %v1356
  %1840 = vmatprep.subr.mxu0 %v1359
  %1841 = vmatpush1.msra.mxu0 %v1358
  %1842 = vmatprep.subr.mxu0 %v1361
  %1843 = vmatpush1.msra.mxu0 %v1360
  %1844 = vmatprep.subr.mxu0 %v1363
  %1845 = vmatpush1.msra.mxu0 %v1362
  %1846 = vmatprep.subr.mxu0 %v1365
  %1847 = vmatpush1.msra.mxu0 %v1364
  %1848 = vmatprep.subr.mxu0 %v1367
  %1849 = vmatpush1.msra.mxu0 %v1366
  %1850 = vmatprep.subr.mxu0 0.0
  %1851 = vmatpush1.msra.mxu0 0.0
  %1852 = vmatprep.subr.mxu0 0.0
  %1853 = vmatpush1.msra.mxu0 0.0
  %1854 = vmatprep.subr.mxu0 0.0
  %1855 = vmatpush1.msra.mxu0 0.0
  %1856 = vmatprep.subr.mxu0 0.0
  %1857 = vmatpush1.msra.mxu0 0.0
  %1858 = vmatprep.subr.mxu0 0.0
  %1859 = vmatpush1.msra.mxu0 0.0
  %1860 = vmatprep.subr.mxu0 0.0
  %1861 = vmatpush1.msra.mxu0 0.0
  %1862 = vmatprep.subr.mxu0 0.0
  %1863 = vmatpush1.msra.mxu0 0.0
  %1864 = vmatprep.subr.mxu0 0.0
  %1865 = vmatpush1.msra.mxu0 0.0
  %1866 = vmatprep.subr.mxu0 0.0
  %1867 = vmatpush1.msra.mxu0 0.0
  %1868 = vmatprep.subr.mxu0 0.0
  %1869 = vmatpush1.msra.mxu0 0.0
  %1870 = vmatprep.subr.mxu0 0.0
  %1871 = vmatpush1.msra.mxu0 0.0
  %1872 = vmatprep.subr.mxu0 0.0
  %1873 = vmatpush1.msra.mxu0 0.0
  %1874 = vmatprep.subr.mxu0 0.0
  %1875 = vmatpush1.msra.mxu0 0.0
  %1876 = vmatprep.subr.mxu0 0.0
  %1877 = vmatpush1.msra.mxu0 0.0
  %1878 = vmatprep.subr.mxu0 0.0
  %1879 = vmatpush1.msra.mxu0 0.0
  %1880 = vmatprep.subr.mxu0 0.0
  %1881 = vmatpush1.msra.mxu0 0.0
  %1882 = vmatprep.subr.mxu0 0.0
  %1883 = vmatpush1.msra.mxu0 0.0
  %1884 = vmatprep.subr.mxu0 0.0
  %1885 = vmatpush1.msra.mxu0 0.0
  %1886 = vmatprep.subr.mxu0 0.0
  %1887 = vmatpush1.msra.mxu0 0.0
  %1888 = vmatprep.subr.mxu0 0.0
  %1889 = vmatpush1.msra.mxu0 0.0
  %1890 = vmatprep.subr.mxu0 0.0
  %1891 = vmatpush1.msra.mxu0 0.0
  %1892 = vmatprep.subr.mxu0 0.0
  %1893 = vmatpush1.msra.mxu0 0.0
  %1894 = vmatprep.subr.mxu0 0.0
  %1895 = vmatpush1.msra.mxu0 0.0
  %1896 = vmatprep.subr.mxu0 0.0
  %1897 = vmatpush1.msra.mxu0 0.0
  %1898 = vmatprep.mubr.f32.mxu0 0.0
  %1899 = vmatmul.mubr.f32.gmra.mrb[0].mxu0 %v1832
  %v1900 = vpop.f32.mrb[0].mxu0
  %v1901 = vadd.f32 0.0, %v1900
  %v1902 = vpop.f32.mrb[0].mxu0
  %v1903 = vadd.f32 0.0, %v1902
  %1904 = vdwg.mxu0
  %v1905 = vadd.f32 %v1330, %v1901
  %v1906 = vadd.f32 %v1332, %v1903
  %v1907 = vxor.u32 %v1905, 2147483648
  %v1908 = vxor.u32 %v1906, 2147483648
  %v1909 = vmul.f32 %v1907, 1.442695
  %v1910 = vpow.pop %v1909
  %v1911 = vmul.f32 %v1908, 1.442695
  %v1912 = vpow.pop %v1911
  %v1913 = vadd.f32 %v1910, 1.0
  %v1914 = vadd.f32 %v1912, 1.0
  %v1915 = vrcp.pop %v1913
  %v1916 = vmul.f32 1.0, %v1915
  %v1917 = vrcp.pop %v1914
  %v1918 = vmul.f32 1.0, %v1917
  %v1919 = vtanh.pop %v1906
  %1921 = vrot.lane.b32.xlu0 %v1828, 64
  %v1922 = vpop.permute.xlu0 %1921
  %v1924 = vmul.f32 %v1916, %v1922
  %v1925 = vmul.f32 %v1916, %v1919
  %1927 = vrot.lane.b32.xlu0 %v1925, 64
  %v1928 = vpop.permute.xlu0 %1927
  %v1930 = vadd.f32 %v1924, %v1928
  %v1931 = vtanh.pop %v1930
  %v1932 = vmul.f32 %v1918, %v1931
  %1934 = vrot.lane.b32.xlu0 %v1932, 64
  %v1935 = vpop.permute.xlu0 %1934
  %v1937 = vmul.f32 %v24, %v1935
  %v1938 = vmul.f32 %v32, %v1821
  %v1939 = vadd.f32 %v1937, %v1938
  %1941 = vrot.lane.b32.xlu0 %v1930, 64
  %v1942 = vpop.permute.xlu0 %1941
  %v1944 = vmul.f32 %v24, %v1942
  %v1945 = vmul.f32 %v32, %v1828
  %v1946 = vadd.f32 %v1944, %v1945
  %v1947 = vmul.f32 %v39, %v1937
  %v1948 = vadd.f32 %v1830, %v1947
  %v1950 = vsel %vm222, %v1939, 0
  %1952 = vmatprep.subr.mxu0 %v1353
  %1953 = vmatpush1.msra.mxu0 %v1352
  %1954 = vmatprep.subr.mxu0 %v1355
  %1955 = vmatpush1.msra.mxu0 %v1354
  %1956 = vmatprep.subr.mxu0 %v1357
  %1957 = vmatpush1.msra.mxu0 %v1356
  %1958 = vmatprep.subr.mxu0 %v1359
  %1959 = vmatpush1.msra.mxu0 %v1358
  %1960 = vmatprep.subr.mxu0 %v1361
  %1961 = vmatpush1.msra.mxu0 %v1360
  %1962 = vmatprep.subr.mxu0 %v1363
  %1963 = vmatpush1.msra.mxu0 %v1362
  %1964 = vmatprep.subr.mxu0 %v1365
  %1965 = vmatpush1.msra.mxu0 %v1364
  %1966 = vmatprep.subr.mxu0 %v1367
  %1967 = vmatpush1.msra.mxu0 %v1366
  %1968 = vmatprep.subr.mxu0 0.0
  %1969 = vmatpush1.msra.mxu0 0.0
  %1970 = vmatprep.subr.mxu0 0.0
  %1971 = vmatpush1.msra.mxu0 0.0
  %1972 = vmatprep.subr.mxu0 0.0
  %1973 = vmatpush1.msra.mxu0 0.0
  %1974 = vmatprep.subr.mxu0 0.0
  %1975 = vmatpush1.msra.mxu0 0.0
  %1976 = vmatprep.subr.mxu0 0.0
  %1977 = vmatpush1.msra.mxu0 0.0
  %1978 = vmatprep.subr.mxu0 0.0
  %1979 = vmatpush1.msra.mxu0 0.0
  %1980 = vmatprep.subr.mxu0 0.0
  %1981 = vmatpush1.msra.mxu0 0.0
  %1982 = vmatprep.subr.mxu0 0.0
  %1983 = vmatpush1.msra.mxu0 0.0
  %1984 = vmatprep.subr.mxu0 0.0
  %1985 = vmatpush1.msra.mxu0 0.0
  %1986 = vmatprep.subr.mxu0 0.0
  %1987 = vmatpush1.msra.mxu0 0.0
  %1988 = vmatprep.subr.mxu0 0.0
  %1989 = vmatpush1.msra.mxu0 0.0
  %1990 = vmatprep.subr.mxu0 0.0
  %1991 = vmatpush1.msra.mxu0 0.0
  %1992 = vmatprep.subr.mxu0 0.0
  %1993 = vmatpush1.msra.mxu0 0.0
  %1994 = vmatprep.subr.mxu0 0.0
  %1995 = vmatpush1.msra.mxu0 0.0
  %1996 = vmatprep.subr.mxu0 0.0
  %1997 = vmatpush1.msra.mxu0 0.0
  %1998 = vmatprep.subr.mxu0 0.0
  %1999 = vmatpush1.msra.mxu0 0.0
  %2000 = vmatprep.subr.mxu0 0.0
  %2001 = vmatpush1.msra.mxu0 0.0
  %2002 = vmatprep.subr.mxu0 0.0
  %2003 = vmatpush1.msra.mxu0 0.0
  %2004 = vmatprep.subr.mxu0 0.0
  %2005 = vmatpush1.msra.mxu0 0.0
  %2006 = vmatprep.subr.mxu0 0.0
  %2007 = vmatpush1.msra.mxu0 0.0
  %2008 = vmatprep.subr.mxu0 0.0
  %2009 = vmatpush1.msra.mxu0 0.0
  %2010 = vmatprep.subr.mxu0 0.0
  %2011 = vmatpush1.msra.mxu0 0.0
  %2012 = vmatprep.subr.mxu0 0.0
  %2013 = vmatpush1.msra.mxu0 0.0
  %2014 = vmatprep.subr.mxu0 0.0
  %2015 = vmatpush1.msra.mxu0 0.0
  %2016 = vmatprep.mubr.f32.mxu0 0.0
  %2017 = vmatmul.mubr.f32.gmra.mrb[0].mxu0 %v1950
  %v2018 = vpop.f32.mrb[0].mxu0
  %v2019 = vadd.f32 0.0, %v2018
  %v2020 = vpop.f32.mrb[0].mxu0
  %v2021 = vadd.f32 0.0, %v2020
  %2022 = vdwg.mxu0
  %v2023 = vadd.f32 %v1336, %v2019
  %v2024 = vadd.f32 %v1338, %v2021
  %v2025 = vxor.u32 %v2023, 2147483648
  %v2026 = vxor.u32 %v2024, 2147483648
  %v2027 = vmul.f32 %v2025, 1.442695
  %v2028 = vpow.pop %v2027
  %v2029 = vmul.f32 %v2026, 1.442695
  %v2030 = vpow.pop %v2029
  %v2031 = vadd.f32 %v2028, 1.0
  %v2032 = vadd.f32 %v2030, 1.0
  %v2033 = vrcp.pop %v2031
  %v2034 = vmul.f32 1.0, %v2033
  %v2035 = vrcp.pop %v2032
  %v2036 = vmul.f32 1.0, %v2035
  %v2037 = vtanh.pop %v2024
  %2039 = vrot.lane.b32.xlu0 %v1946, 64
  %v2040 = vpop.permute.xlu0 %2039
  %v2042 = vmul.f32 %v2034, %v2040
  %v2043 = vmul.f32 %v2034, %v2037
  %2045 = vrot.lane.b32.xlu0 %v2043, 64
  %v2046 = vpop.permute.xlu0 %2045
  %v2048 = vadd.f32 %v2042, %v2046
  %v2049 = vtanh.pop %v2048
  %v2050 = vmul.f32 %v2036, %v2049
  %2052 = vrot.lane.b32.xlu0 %v2050, 64
  %v2053 = vpop.permute.xlu0 %2052
  %v2055 = vmul.f32 %v25, %v2053
  %v2056 = vmul.f32 %v33, %v1939
  %v2057 = vadd.f32 %v2055, %v2056
  %2059 = vrot.lane.b32.xlu0 %v2048, 64
  %v2060 = vpop.permute.xlu0 %2059
  %v2062 = vmul.f32 %v25, %v2060
  %v2063 = vmul.f32 %v33, %v1946
  %v2064 = vadd.f32 %v2062, %v2063
  %v2065 = vmul.f32 %v40, %v2055
  %v2066 = vadd.f32 %v1948, %v2065
  %v2068 = vsel %vm222, %v2057, 0
  %2070 = vmatprep.subr.mxu0 %v1353
  %2071 = vmatpush1.msra.mxu0 %v1352
  %2072 = vmatprep.subr.mxu0 %v1355
  %2073 = vmatpush1.msra.mxu0 %v1354
  %2074 = vmatprep.subr.mxu0 %v1357
  %2075 = vmatpush1.msra.mxu0 %v1356
  %2076 = vmatprep.subr.mxu0 %v1359
  %2077 = vmatpush1.msra.mxu0 %v1358
  %2078 = vmatprep.subr.mxu0 %v1361
  %2079 = vmatpush1.msra.mxu0 %v1360
  %2080 = vmatprep.subr.mxu0 %v1363
  %2081 = vmatpush1.msra.mxu0 %v1362
  %2082 = vmatprep.subr.mxu0 %v1365
  %2083 = vmatpush1.msra.mxu0 %v1364
  %2084 = vmatprep.subr.mxu0 %v1367
  %2085 = vmatpush1.msra.mxu0 %v1366
  %2086 = vmatprep.subr.mxu0 0.0
  %2087 = vmatpush1.msra.mxu0 0.0
  %2088 = vmatprep.subr.mxu0 0.0
  %2089 = vmatpush1.msra.mxu0 0.0
  %2090 = vmatprep.subr.mxu0 0.0
  %2091 = vmatpush1.msra.mxu0 0.0
  %2092 = vmatprep.subr.mxu0 0.0
  %2093 = vmatpush1.msra.mxu0 0.0
  %2094 = vmatprep.subr.mxu0 0.0
  %2095 = vmatpush1.msra.mxu0 0.0
  %2096 = vmatprep.subr.mxu0 0.0
  %2097 = vmatpush1.msra.mxu0 0.0
  %2098 = vmatprep.subr.mxu0 0.0
  %2099 = vmatpush1.msra.mxu0 0.0
  %2100 = vmatprep.subr.mxu0 0.0
  %2101 = vmatpush1.msra.mxu0 0.0
  %2102 = vmatprep.subr.mxu0 0.0
  %2103 = vmatpush1.msra.mxu0 0.0
  %2104 = vmatprep.subr.mxu0 0.0
  %2105 = vmatpush1.msra.mxu0 0.0
  %2106 = vmatprep.subr.mxu0 0.0
  %2107 = vmatpush1.msra.mxu0 0.0
  %2108 = vmatprep.subr.mxu0 0.0
  %2109 = vmatpush1.msra.mxu0 0.0
  %2110 = vmatprep.subr.mxu0 0.0
  %2111 = vmatpush1.msra.mxu0 0.0
  %2112 = vmatprep.subr.mxu0 0.0
  %2113 = vmatpush1.msra.mxu0 0.0
  %2114 = vmatprep.subr.mxu0 0.0
  %2115 = vmatpush1.msra.mxu0 0.0
  %2116 = vmatprep.subr.mxu0 0.0
  %2117 = vmatpush1.msra.mxu0 0.0
  %2118 = vmatprep.subr.mxu0 0.0
  %2119 = vmatpush1.msra.mxu0 0.0
  %2120 = vmatprep.subr.mxu0 0.0
  %2121 = vmatpush1.msra.mxu0 0.0
  %2122 = vmatprep.subr.mxu0 0.0
  %2123 = vmatpush1.msra.mxu0 0.0
  %2124 = vmatprep.subr.mxu0 0.0
  %2125 = vmatpush1.msra.mxu0 0.0
  %2126 = vmatprep.subr.mxu0 0.0
  %2127 = vmatpush1.msra.mxu0 0.0
  %2128 = vmatprep.subr.mxu0 0.0
  %2129 = vmatpush1.msra.mxu0 0.0
  %2130 = vmatprep.subr.mxu0 0.0
  %2131 = vmatpush1.msra.mxu0 0.0
  %2132 = vmatprep.subr.mxu0 0.0
  %2133 = vmatpush1.msra.mxu0 0.0
  %2134 = vmatprep.mubr.f32.mxu0 0.0
  %2135 = vmatmul.mubr.f32.gmra.mrb[0].mxu0 %v2068
  %v2136 = vpop.f32.mrb[0].mxu0
  %v2137 = vadd.f32 0.0, %v2136
  %v2138 = vpop.f32.mrb[0].mxu0
  %v2139 = vadd.f32 0.0, %v2138
  %2140 = vdwg.mxu0
  %v2141 = vadd.f32 %v1342, %v2137
  %v2142 = vadd.f32 %v1344, %v2139
  %v2143 = vxor.u32 %v2141, 2147483648
  %v2144 = vxor.u32 %v2142, 2147483648
  %v2145 = vmul.f32 %v2143, 1.442695
  %v2146 = vpow.pop %v2145
  %v2147 = vmul.f32 %v2144, 1.442695
  %v2148 = vpow.pop %v2147
  %v2149 = vadd.f32 %v2146, 1.0
  %v2150 = vadd.f32 %v2148, 1.0
  %v2151 = vrcp.pop %v2149
  %v2152 = vmul.f32 1.0, %v2151
  %v2153 = vrcp.pop %v2150
  %v2154 = vmul.f32 1.0, %v2153
  %v2155 = vtanh.pop %v2142
  %2157 = vrot.lane.b32.xlu0 %v2064, 64
  %v2158 = vpop.permute.xlu0 %2157
  %v2160 = vmul.f32 %v2152, %v2158
  %v2161 = vmul.f32 %v2152, %v2155
  %2163 = vrot.lane.b32.xlu0 %v2161, 64
  %v2164 = vpop.permute.xlu0 %2163
  %v2166 = vadd.f32 %v2160, %v2164
  %v2167 = vtanh.pop %v2166
  %v2168 = vmul.f32 %v2154, %v2167
  %2170 = vrot.lane.b32.xlu0 %v2168, 64
  %v2171 = vpop.permute.xlu0 %2170
  %v2173 = vmul.f32 %v26, %v2171
  %v2174 = vmul.f32 %v34, %v2057
  %v2175 = vadd.f32 %v2173, %v2174
  %2177 = vrot.lane.b32.xlu0 %v2166, 64
  %v2178 = vpop.permute.xlu0 %2177
  %v2180 = vmul.f32 %v26, %v2178
  %v2181 = vmul.f32 %v34, %v2064
  %v2182 = vadd.f32 %v2180, %v2181
  %v2183 = vmul.f32 %v41, %v2173
  %v2184 = vadd.f32 %v2066, %v2183
  %v2186 = vsel %vm222, %v2175, 0
  %2188 = vmatprep.subr.mxu0 %v1353
  %2189 = vmatpush1.msra.mxu0 %v1352
  %2190 = vmatprep.subr.mxu0 %v1355
  %2191 = vmatpush1.msra.mxu0 %v1354
  %2192 = vmatprep.subr.mxu0 %v1357
  %2193 = vmatpush1.msra.mxu0 %v1356
  %2194 = vmatprep.subr.mxu0 %v1359
  %2195 = vmatpush1.msra.mxu0 %v1358
  %2196 = vmatprep.subr.mxu0 %v1361
  %2197 = vmatpush1.msra.mxu0 %v1360
  %2198 = vmatprep.subr.mxu0 %v1363
  %2199 = vmatpush1.msra.mxu0 %v1362
  %2200 = vmatprep.subr.mxu0 %v1365
  %2201 = vmatpush1.msra.mxu0 %v1364
  %2202 = vmatprep.subr.mxu0 %v1367
  %2203 = vmatpush1.msra.mxu0 %v1366
  %2204 = vmatprep.subr.mxu0 0.0
  %2205 = vmatpush1.msra.mxu0 0.0
  %2206 = vmatprep.subr.mxu0 0.0
  %2207 = vmatpush1.msra.mxu0 0.0
  %2208 = vmatprep.subr.mxu0 0.0
  %2209 = vmatpush1.msra.mxu0 0.0
  %2210 = vmatprep.subr.mxu0 0.0
  %2211 = vmatpush1.msra.mxu0 0.0
  %2212 = vmatprep.subr.mxu0 0.0
  %2213 = vmatpush1.msra.mxu0 0.0
  %2214 = vmatprep.subr.mxu0 0.0
  %2215 = vmatpush1.msra.mxu0 0.0
  %2216 = vmatprep.subr.mxu0 0.0
  %2217 = vmatpush1.msra.mxu0 0.0
  %2218 = vmatprep.subr.mxu0 0.0
  %2219 = vmatpush1.msra.mxu0 0.0
  %2220 = vmatprep.subr.mxu0 0.0
  %2221 = vmatpush1.msra.mxu0 0.0
  %2222 = vmatprep.subr.mxu0 0.0
  %2223 = vmatpush1.msra.mxu0 0.0
  %2224 = vmatprep.subr.mxu0 0.0
  %2225 = vmatpush1.msra.mxu0 0.0
  %2226 = vmatprep.subr.mxu0 0.0
  %2227 = vmatpush1.msra.mxu0 0.0
  %2228 = vmatprep.subr.mxu0 0.0
  %2229 = vmatpush1.msra.mxu0 0.0
  %2230 = vmatprep.subr.mxu0 0.0
  %2231 = vmatpush1.msra.mxu0 0.0
  %2232 = vmatprep.subr.mxu0 0.0
  %2233 = vmatpush1.msra.mxu0 0.0
  %2234 = vmatprep.subr.mxu0 0.0
  %2235 = vmatpush1.msra.mxu0 0.0
  %2236 = vmatprep.subr.mxu0 0.0
  %2237 = vmatpush1.msra.mxu0 0.0
  %2238 = vmatprep.subr.mxu0 0.0
  %2239 = vmatpush1.msra.mxu0 0.0
  %2240 = vmatprep.subr.mxu0 0.0
  %2241 = vmatpush1.msra.mxu0 0.0
  %2242 = vmatprep.subr.mxu0 0.0
  %2243 = vmatpush1.msra.mxu0 0.0
  %2244 = vmatprep.subr.mxu0 0.0
  %2245 = vmatpush1.msra.mxu0 0.0
  %2246 = vmatprep.subr.mxu0 0.0
  %2247 = vmatpush1.msra.mxu0 0.0
  %2248 = vmatprep.subr.mxu0 0.0
  %2249 = vmatpush1.msra.mxu0 0.0
  %2250 = vmatprep.subr.mxu0 0.0
  %2251 = vmatpush1.msra.mxu0 0.0
  %2252 = vmatprep.mubr.f32.mxu0 0.0
  %2253 = vmatmul.mubr.f32.gmra.mrb[0].mxu0 %v2186
  %v2254 = vpop.f32.mrb[0].mxu0
  %v2255 = vadd.f32 0.0, %v2254
  %v2256 = vpop.f32.mrb[0].mxu0
  %v2257 = vadd.f32 0.0, %v2256
  %2258 = vdwg.mxu0
  %v2259 = vadd.f32 %v1348, %v2255
  %v2260 = vadd.f32 %v1350, %v2257
  %v2261 = vxor.u32 %v2259, 2147483648
  %v2262 = vxor.u32 %v2260, 2147483648
  %v2263 = vmul.f32 %v2261, 1.442695
  %v2264 = vpow.pop %v2263
  %v2265 = vmul.f32 %v2262, 1.442695
  %v2266 = vpow.pop %v2265
  %v2267 = vadd.f32 %v2264, 1.0
  %v2268 = vadd.f32 %v2266, 1.0
  %v2269 = vrcp.pop %v2267
  %v2270 = vmul.f32 1.0, %v2269
  %v2271 = vrcp.pop %v2268
  %v2272 = vmul.f32 1.0, %v2271
  %v2273 = vtanh.pop %v2260
  %2275 = vrot.lane.b32.xlu0 %v2182, 64
  %v2276 = vpop.permute.xlu0 %2275
  %v2278 = vmul.f32 %v2270, %v2276
  %v2279 = vmul.f32 %v2270, %v2273
  %2281 = vrot.lane.b32.xlu0 %v2279, 64
  %v2282 = vpop.permute.xlu0 %2281
  %v2284 = vadd.f32 %v2278, %v2282
  %v2285 = vtanh.pop %v2284
  %v2286 = vmul.f32 %v2272, %v2285
  %2288 = vrot.lane.b32.xlu0 %v2286, 64
  %v2289 = vpop.permute.xlu0 %2288
  %v2291 = vmul.f32 %v27, %v2289
  %v2292 = vmul.f32 %v42, %v2291
  %v2293 = vadd.f32 %v2184, %v2292
  %v2294 = vld [vmem:[%s4] sm:$0xff]
  %v2295 = vld [vmem:[%s4 + $0x8] sm:$0xff]
  %v2296 = vld [vmem:[%s4 + $0x10] sm:$0xff]
  %v2297 = vld [vmem:[%s4 + $0x18] sm:$0xff]
  %v2298 = vld [vmem:[%s4 + $0x20] sm:$0xff]
  %v2299 = vld [vmem:[%s4 + $0x28] sm:$0xff]
  %v2300 = vld [vmem:[%s4 + $0x30] sm:$0xff]
  %v2301 = vld [vmem:[%s4 + $0x38] sm:$0xff]
  %v2302 = vld [vmem:[%s4 + $0x40] sm:$0x1]
  %v2303 = vlaneseq
  %v2304 = vshrl.u32 %v2303, 7
  %v2305 = vsub.s32 0, %v2304
  %v2306 = vrot.slane %v2302, %v2305
  %v2308 = vsel %vm222, %v2293, 0
  %2310 = vmatprep.subr.mxu0 0.0
  %2311 = vmatpush1.msra.mxu0 %v2294
  %2312 = vmatprep.subr.mxu0 0.0
  %2313 = vmatpush1.msra.mxu0 %v2295
  %2314 = vmatprep.subr.mxu0 0.0
  %2315 = vmatpush1.msra.mxu0 %v2296
  %2316 = vmatprep.subr.mxu0 0.0
  %2317 = vmatpush1.msra.mxu0 %v2297
  %2318 = vmatprep.subr.mxu0 0.0
  %2319 = vmatpush1.msra.mxu0 %v2298
  %2320 = vmatprep.subr.mxu0 0.0
  %2321 = vmatpush1.msra.mxu0 %v2299
  %2322 = vmatprep.subr.mxu0 0.0
  %2323 = vmatpush1.msra.mxu0 %v2300
  %2324 = vmatprep.subr.mxu0 0.0
  %2325 = vmatpush1.msra.mxu0 %v2301
  %2326 = vmatprep.subr.mxu0 0.0
  %2327 = vmatpush1.msra.mxu0 0.0
  %2328 = vmatprep.subr.mxu0 0.0
  %2329 = vmatpush1.msra.mxu0 0.0
  %2330 = vmatprep.subr.mxu0 0.0
  %2331 = vmatpush1.msra.mxu0 0.0
  %2332 = vmatprep.subr.mxu0 0.0
  %2333 = vmatpush1.msra.mxu0 0.0
  %2334 = vmatprep.subr.mxu0 0.0
  %2335 = vmatpush1.msra.mxu0 0.0
  %2336 = vmatprep.subr.mxu0 0.0
  %2337 = vmatpush1.msra.mxu0 0.0
  %2338 = vmatprep.subr.mxu0 0.0
  %2339 = vmatpush1.msra.mxu0 0.0
  %2340 = vmatprep.subr.mxu0 0.0
  %2341 = vmatpush1.msra.mxu0 0.0
  %2342 = vmatprep.subr.mxu0 0.0
  %2343 = vmatpush1.msra.mxu0 0.0
  %2344 = vmatprep.subr.mxu0 0.0
  %2345 = vmatpush1.msra.mxu0 0.0
  %2346 = vmatprep.subr.mxu0 0.0
  %2347 = vmatpush1.msra.mxu0 0.0
  %2348 = vmatprep.subr.mxu0 0.0
  %2349 = vmatpush1.msra.mxu0 0.0
  %2350 = vmatprep.subr.mxu0 0.0
  %2351 = vmatpush1.msra.mxu0 0.0
  %2352 = vmatprep.subr.mxu0 0.0
  %2353 = vmatpush1.msra.mxu0 0.0
  %2354 = vmatprep.subr.mxu0 0.0
  %2355 = vmatpush1.msra.mxu0 0.0
  %2356 = vmatprep.subr.mxu0 0.0
  %2357 = vmatpush1.msra.mxu0 0.0
  %2358 = vmatprep.subr.mxu0 0.0
  %2359 = vmatpush1.msra.mxu0 0.0
  %2360 = vmatprep.subr.mxu0 0.0
  %2361 = vmatpush1.msra.mxu0 0.0
  %2362 = vmatprep.subr.mxu0 0.0
  %2363 = vmatpush1.msra.mxu0 0.0
  %2364 = vmatprep.subr.mxu0 0.0
  %2365 = vmatpush1.msra.mxu0 0.0
  %2366 = vmatprep.subr.mxu0 0.0
  %2367 = vmatpush1.msra.mxu0 0.0
  %2368 = vmatprep.subr.mxu0 0.0
  %2369 = vmatpush1.msra.mxu0 0.0
  %2370 = vmatprep.subr.mxu0 0.0
  %2371 = vmatpush1.msra.mxu0 0.0
  %2372 = vmatprep.subr.mxu0 0.0
  %2373 = vmatpush1.msra.mxu0 0.0
  %2374 = vmatprep.mubr.f32.mxu0 0.0
  %2375 = vmatmul.mubr.f32.gmra.mrb[0].mxu0 %v2308
  %v2376 = vpop.f32.mrb[0].mxu0
  %v2377 = vadd.f32 %v2306, %v2376
  %v2378 = vpop.f32.mrb[0].mxu0
  %2379 = vdwg.mxu0
  %v2380 = vmax.f32 %v2377, 0.0
  %v2381 = vld [vmem:[%s4 + $0x48] sm:$0xff]
  %v2382 = vld [vmem:[%s4 + $0x50] sm:$0xff]
  %v2383 = vld [vmem:[%s4 + $0x58] sm:$0xff]
  %v2384 = vld [vmem:[%s4 + $0x60] sm:$0xff]
  %v2385 = vld [vmem:[%s4 + $0x68] sm:$0xff]
  %v2386 = vld [vmem:[%s4 + $0x70] sm:$0xff]
  %v2387 = vld [vmem:[%s4 + $0x78] sm:$0xff]
  %v2388 = vld [vmem:[%s4 + $0x80] sm:$0xff]
  %v2389 = vld [vmem:[%s4 + $0x88] sm:$0x1]
  %v2390 = vlaneseq
  %v2391 = vshrl.u32 %v2390, 7
  %v2392 = vsub.s32 0, %v2391
  %v2393 = vrot.slane %v2389, %v2392
  %v2395 = vsel %vm222, %v2380, 0
  %2397 = vmatprep.subr.mxu0 0.0
  %2398 = vmatpush1.msra.mxu0 %v2381
  %2399 = vmatprep.subr.mxu0 0.0
  %2400 = vmatpush1.msra.mxu0 %v2382
  %2401 = vmatprep.subr.mxu0 0.0
  %2402 = vmatpush1.msra.mxu0 %v2383
  %2403 = vmatprep.subr.mxu0 0.0
  %2404 = vmatpush1.msra.mxu0 %v2384
  %2405 = vmatprep.subr.mxu0 0.0
  %2406 = vmatpush1.msra.mxu0 %v2385
  %2407 = vmatprep.subr.mxu0 0.0
  %2408 = vmatpush1.msra.mxu0 %v2386
  %2409 = vmatprep.subr.mxu0 0.0
  %2410 = vmatpush1.msra.mxu0 %v2387
  %2411 = vmatprep.subr.mxu0 0.0
  %2412 = vmatpush1.msra.mxu0 %v2388
  %2413 = vmatprep.subr.mxu0 0.0
  %2414 = vmatpush1.msra.mxu0 0.0
  %2415 = vmatprep.subr.mxu0 0.0
  %2416 = vmatpush1.msra.mxu0 0.0
  %2417 = vmatprep.subr.mxu0 0.0
  %2418 = vmatpush1.msra.mxu0 0.0
  %2419 = vmatprep.subr.mxu0 0.0
  %2420 = vmatpush1.msra.mxu0 0.0
  %2421 = vmatprep.subr.mxu0 0.0
  %2422 = vmatpush1.msra.mxu0 0.0
  %2423 = vmatprep.subr.mxu0 0.0
  %2424 = vmatpush1.msra.mxu0 0.0
  %2425 = vmatprep.subr.mxu0 0.0
  %2426 = vmatpush1.msra.mxu0 0.0
  %2427 = vmatprep.subr.mxu0 0.0
  %2428 = vmatpush1.msra.mxu0 0.0
  %2429 = vmatprep.subr.mxu0 0.0
  %2430 = vmatpush1.msra.mxu0 0.0
  %2431 = vmatprep.subr.mxu0 0.0
  %2432 = vmatpush1.msra.mxu0 0.0
  %2433 = vmatprep.subr.mxu0 0.0
  %2434 = vmatpush1.msra.mxu0 0.0
  %2435 = vmatprep.subr.mxu0 0.0
  %2436 = vmatpush1.msra.mxu0 0.0
  %2437 = vmatprep.subr.mxu0 0.0
  %2438 = vmatpush1.msra.mxu0 0.0
  %2439 = vmatprep.subr.mxu0 0.0
  %2440 = vmatpush1.msra.mxu0 0.0
  %2441 = vmatprep.subr.mxu0 0.0
  %2442 = vmatpush1.msra.mxu0 0.0
  %2443 = vmatprep.subr.mxu0 0.0
  %2444 = vmatpush1.msra.mxu0 0.0
  %2445 = vmatprep.subr.mxu0 0.0
  %2446 = vmatpush1.msra.mxu0 0.0
  %2447 = vmatprep.subr.mxu0 0.0
  %2448 = vmatpush1.msra.mxu0 0.0
  %2449 = vmatprep.subr.mxu0 0.0
  %2450 = vmatpush1.msra.mxu0 0.0
  %2451 = vmatprep.subr.mxu0 0.0
  %2452 = vmatpush1.msra.mxu0 0.0
  %2453 = vmatprep.subr.mxu0 0.0
  %2454 = vmatpush1.msra.mxu0 0.0
  %2455 = vmatprep.subr.mxu0 0.0
  %2456 = vmatpush1.msra.mxu0 0.0
  %2457 = vmatprep.subr.mxu0 0.0
  %2458 = vmatpush1.msra.mxu0 0.0
  %2459 = vmatprep.subr.mxu0 0.0
  %2460 = vmatpush1.msra.mxu0 0.0
  %2461 = vmatprep.mubr.f32.mxu0 0.0
  %2462 = vmatmul.mubr.f32.gmra.mrb[0].mxu0 %v2395
  %v2463 = vpop.f32.mrb[0].mxu0
  %v2464 = vadd.f32 %v2393, %v2463
  %v2465 = vpop.f32.mrb[0].mxu0
  %2466 = vdwg.mxu0
  %v2467 = vmax.f32 %v2464, 0.0
  %vm2468 = vcmask 64512
  %v2469 = vsel %vm2468, %v2467, -inf
  %2470 = vmax.xlane.f32.xlu0 %v2469
  %v2471 = vpop.xlane.xlu0 %2470
  %v2472 = vsub.f32 %v2467, %v2471
  %v2473 = vmul.f32 %v2472, 1.442695
  %v2474 = vpow.pop %v2473
  %v2475 = vsel %vm2468, %v2474, 0.0
  %2476 = vadd.xlane.f32.xlu0 %v2475
  %v2477 = vpop.xlane.xlu0 %2476
  %v2478 = vlog2.pop %v2477
  %v2479 = vmul.f32 %v2478, 0.6931472
  %v2480 = vadd.f32 %v2471, %v2479
  %v2481 = vsub.f32 %v2467, %v2480
  %2482 = vst.msk [vmem:[%s5] sm:$0xff] %vm2468, %v2481
  // Predicated region
  $region22: #{seq_classifier_varlen.1} parent=0 // pred_check
    _
  $region23: #{seq_classifier_varlen.1} parent=0 // pred_check_branch
    %2484 = sbr.rel (0) target = $region25
  $region24: #{seq_classifier_varlen.1} parent=0 // pred_region
    _
  $region25: #{seq_classifier_varlen.1} parent=0 // pred_fallthru
    _
  // Predicated region
  $region26: #{seq_classifier_varlen.1} parent=0 // pred_check
    _
  $region27: #{seq_classifier_varlen.1} parent=0 // pred_check_branch
    %2486 = sbr.rel (0) target = $region29
  $region28: #{seq_classifier_varlen.1} parent=0 // pred_region
    _
  $region29: #{seq_classifier_varlen.1} parent=0 // pred_fallthru
    _

</llo_original>
